<compile_context>
chip_gen: v5e
topology: v5e:2x2
jax: 0.10.0
libtpu: 0.0.40
codegen_flags: <defaults>
</compile_context>

<pallas_src>
import functools

import numpy as np
import jax
import jax.numpy as jnp
from jax.experimental import pallas as pl
from jax.experimental.pallas import tpu as pltpu

FEAT = [8, 16, 16, 32, 32]          # feat list passed to decoder
ENC_STRIDES = [2, 4, 4, 8, 16]      # synthetic encoder downsample factors


# ----------------------------------------------------------------------------
# trace-time (numpy) constant builders
# ----------------------------------------------------------------------------
def _axis_interp_matrix(n_out, n_in):
    """1-D bilinear interpolation matrix, align_corners=True."""
    if n_in == 1:
        return np.ones((n_out, 1), np.float32)
    if n_out == 1:
        src = np.zeros((1,), np.float32)
    else:
        src = np.arange(n_out, dtype=np.float32) * ((n_in - 1) / (n_out - 1))
    lo = np.clip(np.floor(src).astype(np.int32), 0, n_in - 2)
    frac = src - lo.astype(np.float32)
    eye = np.eye(n_in, dtype=np.float32)
    return (1.0 - frac)[:, None] * eye[lo] + frac[:, None] * eye[lo + 1]


def _upsample_matrix_t(hw_in, hw_out):
    """(N_in, N_out) matrix M such that x_up = x @ M for x of shape (C, N_in)."""
    (hi, wi), (ho, wo) = hw_in, hw_out
    A = np.kron(_axis_interp_matrix(ho, hi), _axis_interp_matrix(wo, wi))
    return jnp.asarray(A.T)


def _shift_matrices(h, w):
    """(9, N, N) 0/1 matrices Q with (x @ Q[k])[c, n] = zero-padded 3x3 tap k."""
    n = h * w
    q = np.zeros((9, n, n), np.float32)
    k = 0
    for dy in (-1, 0, 1):
        for dx in (-1, 0, 1):
            for hh in range(h):
                sh = hh + dy
                if not (0 <= sh < h):
                    continue
                for ww in range(w):
                    sw = ww + dx
                    if 0 <= sw < w:
                        q[k, sh * w + sw, hh * w + ww] = 1.0
            k += 1
    return jnp.asarray(q)


# ----------------------------------------------------------------------------
# host-side glue (runs inside jit, tiny tensors)
# ----------------------------------------------------------------------------
def _conv3x3_taps(x_cn):
    """(B, C, H, W) -> (B, 9*C, H*W): zero-padded 3x3 taps, channel-minor."""
    b, c, h, w = x_cn.shape
    xp = jnp.pad(x_cn, ((0, 0), (0, 0), (1, 1), (1, 1)))
    taps = [xp[:, :, dy:dy + h, dx:dx + w].reshape(b, c, h * w)
            for dy in range(3) for dx in range(3)]
    return jnp.concatenate(taps, axis=1)


def _pack_ada(p):
    """Pack ada_block params into (Cout, 9*Cin) weight, (Cout, 4) vec, (Cout, Cout) SE."""
    cout = p['b'].shape[-1]
    w_t = jnp.transpose(p['w'].reshape(-1, cout))                       # (Cout, 9*Cin)
    vec = jnp.transpose(jnp.concatenate(
        [p['b'], p['gn_w'], p['gn_b'], p['se_b']], axis=0))             # (Cout, 4)
    se_t = jnp.transpose(p['se_w'])                                     # (Cout, Cout) out x in
    return w_t, vec, se_t


# ----------------------------------------------------------------------------
# the single fused decoder + head kernel
# ----------------------------------------------------------------------------
def _decoder_kernel(x2_ref, x3_ref, x4_ref,
                    w2_ref, v2_ref, s2_ref,
                    w3_ref, v3_ref, s3_ref,
                    w4_ref, v4_ref, s4_ref,
                    a2_ref, a3_ref, a4_ref,
                    q_ref,
                    wf_ref, vf_ref, sf_ref,
                    ap_ref,
                    feat_ref, pred_ref, *, h0, w0):
    def ada(x9t, w_ref, v_ref, s_ref):
        # conv3x3 as one K-fused MXU matmul + GroupNorm(1,C) + ReLU + SE block.
        acc = jnp.dot(w_ref[...], x9t, preferred_element_type=jnp.float32)
        acc = acc + v_ref[:, 0:1]                                 # conv bias
        mu = jnp.mean(acc)                                        # GN over (C,H,W)
        var = jnp.mean((acc - mu) ** 2)
        y = (acc - mu) * jax.lax.rsqrt(var + 1e-5)
        y = y * v_ref[:, 1:2] + v_ref[:, 2:3]                     # GN affine
        y = jnp.maximum(y, 0.0)                                   # ReLU
        g = jnp.mean(y, axis=1, keepdims=True)                    # global avg pool
        z = jnp.dot(s_ref[...], g, preferred_element_type=jnp.float32) + v_ref[:, 3:4]
        return y * jax.nn.sigmoid(z)                              # SE gating

    # three ada blocks + bilinear upsample (align_corners=True) to (h0, w0)
    u2 = jnp.dot(ada(x2_ref[0], w2_ref, v2_ref, s2_ref), a2_ref[...],
                 preferred_element_type=jnp.float32)
    u3 = jnp.dot(ada(x3_ref[0], w3_ref, v3_ref, s3_ref), a3_ref[...],
                 preferred_element_type=jnp.float32)
    u4 = jnp.dot(ada(x4_ref[0], w4_ref, v4_ref, s4_ref), a4_ref[...],
                 preferred_element_type=jnp.float32)
    fuse = jnp.concatenate([u2, u3, u4], axis=0)                  # (3*C0, N0)

    # fusion ada block: build the 9 zero-padded 3x3 taps in-VMEM via the
    # precomputed shift matrices, then a single K = 9*3*C0 conv matmul.
    taps = [jnp.dot(fuse, q_ref[k], preferred_element_type=jnp.float32)
            for k in range(9)]
    feat = ada(jnp.concatenate(taps, axis=0), wf_ref, vf_ref, sf_ref)   # (C0, N0)

    # normalize() + channel sum + foreground_sign() + final bilinear upsample
    feat = feat - jnp.mean(feat, axis=1, keepdims=True)
    feat_ref[0] = feat
    pred = jnp.sum(feat, axis=0, keepdims=True)                   # (1, N0)
    idx = jax.lax.broadcasted_iota(jnp.int32, (1, h0 * w0), 1)
    corner = ((idx == 0) | (idx == (h0 - 1) * w0) |
              (idx == h0 * w0 - 1) | (idx == w0 - 1))
    num_pos = jnp.sum(jnp.where(corner & (pred > 0.0), 1.0, 0.0))
    sign = (num_pos < 2.0).astype(jnp.float32) * 2.0 - 1.0
    pred_ref[0] = jnp.dot(pred * sign, ap_ref[...],
                          preferred_element_type=jnp.float32)


def decoder_forward(xs, params, out_hw):
    """xs: encoder feature maps, channel-first (B, C_i, H_i, W_i)."""
    b = xs[0].shape[0]
    c0 = FEAT[0]
    h0, w0 = xs[0].shape[2], xs[0].shape[3]
    n0 = h0 * w0
    h_in, w_in = out_hw
    n_in = h_in * w_in

    # host-side 3x3 tap stacking for the three encoder-scale convs (tiny)
    x2t = _conv3x3_taps(xs[2])                                    # (B, 9*C2, N2)
    x3t = _conv3x3_taps(xs[3])
    x4t = _conv3x3_taps(xs[4])

    w2, v2, s2 = _pack_ada(params['ad2'])
    w3, v3, s3 = _pack_ada(params['ad3'])
    w4, v4, s4 = _pack_ada(params['ad4'])
    wf, vf, sf = _pack_ada(params['fusion'])

    a2 = _upsample_matrix_t(xs[2].shape[2:], (h0, w0))            # (N2, N0)
    a3 = _upsample_matrix_t(xs[3].shape[2:], (h0, w0))
    a4 = _upsample_matrix_t(xs[4].shape[2:], (h0, w0))
    ap = _upsample_matrix_t((h0, w0), (h_in, w_in))               # (N0, N_in)
    q = _shift_matrices(h0, w0)                                   # (9, N0, N0)

    per_sample = lambda i: (i, 0, 0)
    const2 = lambda i: (0, 0)
    const3 = lambda i: (0, 0, 0)

    def spec_c(a):
        return pl.BlockSpec(a.shape, const2)

    def spec_s(a):
        return pl.BlockSpec((1,) + a.shape[1:], per_sample)

    feat, pred = pl.pallas_call(
        functools.partial(_decoder_kernel, h0=h0, w0=w0),
        out_shape=(jax.ShapeDtypeStruct((b, c0, n0), jnp.float32),
                   jax.ShapeDtypeStruct((b, 1, n_in), jnp.float32)),
        grid=(b,),
        in_specs=[
            spec_s(x2t), spec_s(x3t), spec_s(x4t),
            spec_c(w2), spec_c(v2), spec_c(s2),
            spec_c(w3), spec_c(v3), spec_c(s3),
            spec_c(w4), spec_c(v4), spec_c(s4),
            spec_c(a2), spec_c(a3), spec_c(a4),
            pl.BlockSpec(q.shape, const3),
            spec_c(wf), spec_c(vf), spec_c(sf),
            spec_c(ap),
        ],
        out_specs=(pl.BlockSpec((1, c0, n0), per_sample),
                   pl.BlockSpec((1, 1, n_in), per_sample)),
        compiler_params=pltpu.CompilerParams(
            dimension_semantics=("parallel",)),
    )(x2t, x3t, x4t, w2, v2, s2, w3, v3, s3, w4, v4, s4,
      a2, a3, a4, q, wf, vf, sf, ap)

    # outputs are already flattened NCHW (lane-dense); just reshape on the host
    return feat.reshape(b, c0, h0, w0), pred.reshape(b, 1, h_in, w_in)


# ----------------------------------------------------------------------------
# parameters / synthetic encoder / full network forward
# ----------------------------------------------------------------------------
def init_ada_params(key, cin, cout):
    ks = jax.random.split(key, 6)
    return {
        'w': jax.random.normal(ks[0], (9, cin, cout), jnp.float32)
             / jnp.sqrt(9.0 * cin),
        'b': 0.05 * jax.random.normal(ks[1], (1, cout), jnp.float32),
        'gn_w': 1.0 + 0.1 * jax.random.normal(ks[2], (1, cout), jnp.float32),
        'gn_b': 0.1 * jax.random.normal(ks[3], (1, cout), jnp.float32),
        'se_w': jax.random.normal(ks[4], (cout, cout), jnp.float32)
                / jnp.sqrt(1.0 * cout),
        'se_b': 0.05 * jax.random.normal(ks[5], (1, cout), jnp.float32),
    }


def init_network_params(key):
    ks = jax.random.split(key, 9)
    proj = [0.5 * jax.random.normal(ks[i], (3, FEAT[i]), jnp.float32)
            for i in range(5)]
    return {
        'proj': proj,
        'ad2': init_ada_params(ks[5], FEAT[2], FEAT[0]),
        'ad3': init_ada_params(ks[6], FEAT[3], FEAT[0]),
        'ad4': init_ada_params(ks[7], FEAT[4], FEAT[0]),
        'fusion': init_ada_params(ks[8], FEAT[0] * 3, FEAT[0]),
    }


def encoder_fn(x_nchw, proj):
    """Synthetic deterministic encoder: avg-pool + 1x1 channel projection."""
    b, c, h, w = x_nchw.shape
    xs = []
    for i, s in enumerate(ENC_STRIDES):
        pooled = x_nchw.reshape(b, c, h // s, s, w // s, s).mean(axis=(3, 5))
        xs.append(jnp.einsum('bchw,cf->bfhw', pooled, proj[i]))
    return xs


def network_forward(x_nchw, params):
    x = x_nchw.astype(jnp.float32)
    b = x.shape[0]
    h_in, w_in = x.shape[2], x.shape[3]
    xs = encoder_fn(x, params['proj'])
    # finetune == False: no adapter / residual branch (matches the PyTorch module)
    feat, pred = decoder_forward(xs, params, (h_in, w_in))
    return {'feat': [feat], 'sal': [pred], 'final': pred}


# ----------------------------------------------------------------------------
# plain-JAX reference (same math, no Pallas) for a sanity check
# ----------------------------------------------------------------------------
def _ada_ref(x_cn, p):
    b, cin, h, w = x_cn.shape
    cout = p['b'].shape[-1]
    x9 = _conv3x3_taps(x_cn)
    acc = jnp.einsum('bkn,kc->bcn', x9, p['w'].reshape(9 * cin, cout))
    acc = acc + jnp.transpose(p['b'])[None]
    mu = jnp.mean(acc, axis=(1, 2), keepdims=True)
    var = jnp.mean((acc - mu) ** 2, axis=(1, 2), keepdims=True)
    y = (acc - mu) * jax.lax.rsqrt(var + 1e-5)
    y = y * jnp.transpose(p['gn_w'])[None] + jnp.transpose(p['gn_b'])[None]
    y = jnp.maximum(y, 0.0)
    g = jnp.mean(y, axis=2, keepdims=True)
    z = jnp.einsum('bit,io->bot', g, p['se_w']) + jnp.transpose(p['se_b'])[None]
    return (y * jax.nn.sigmoid(z)).reshape(b, cout, h, w)


def _resize_ref(x_cn, hw_out):
    b, c, h, w = x_cn.shape
    m = _upsample_matrix_t((h, w), hw_out)
    y = jnp.einsum('bcn,no->bco', x_cn.reshape(b, c, h * w), m)
    return y.reshape(b, c, hw_out[0], hw_out[1])


def network_forward_ref(x_nchw, params):
    x = x_nchw.astype(jnp.float32)
    b, _, h_in, w_in = x.shape
    xs = encoder_fn(x, params['proj'])
    h0, w0 = xs[0].shape[2], xs[0].shape[3]
    x2u = _resize_ref(_ada_ref(xs[2], params['ad2']), (h0, w0))
    x3u = _resize_ref(_ada_ref(xs[3], params['ad3']), (h0, w0))
    x4u = _resize_ref(_ada_ref(xs[4], params['ad4']), (h0, w0))
    fuse = jnp.concatenate([x2u, x3u, x4u], axis=1)
    feat = _ada_ref(fuse, params['fusion'])
    feat = feat - jnp.mean(feat, axis=(2, 3), keepdims=True)
    pred = jnp.sum(feat, axis=1, keepdims=True)
    pos = (pred > 0).astype(jnp.float32)
    num_pos = (pos[:, :, 0, 0] + pos[:, :, h0 - 1, 0] +
               pos[:, :, h0 - 1, w0 - 1] + pos[:, :, 0, w0 - 1])
    sign = ((num_pos < 2).astype(jnp.float32) * 2.0 - 1.0).reshape(b, 1, 1, 1)
    pred = _resize_ref(pred * sign, (h_in, w_in))
    return {'feat': [feat], 'sal': [pred], 'final': pred}


if __name__ == "__main__":
    key = jax.random.PRNGKey(0)
    params = init_network_params(key)
    x = jax.random.normal(jax.random.fold_in(key, 123), (2, 3, 32, 32), jnp.float32)

    out = jax.jit(network_forward)(x, params)
    jax.block_until_ready(out['final'])
    jax.block_until_ready(out['feat'][0])

    ref = network_forward_ref(x, params)
    assert out['final'].shape == (2, 1, 32, 32)
    assert out['feat'][0].shape == (2, FEAT[0], 16, 16)
    assert jnp.all(jnp.isfinite(out['final']))
    assert jnp.allclose(out['feat'][0], ref['feat'][0], atol=1e-2, rtol=1e-2)
    assert jnp.allclose(out['final'], ref['final'], atol=1e-2, rtol=1e-2)

    print("KERNEL_OK")
</pallas_src>

<mosaic_0001>
module attributes {stable_mosaic.version = 11 : i64} {
  func.func @_decoder_kernel(%arg0: i32, %arg1: memref<1x144x64xf32, #tpu.memory_space<vmem>>, %arg2: memref<1x288x16xf32, #tpu.memory_space<vmem>>, %arg3: memref<1x288x4xf32, #tpu.memory_space<vmem>>, %arg4: memref<8x144xf32, #tpu.memory_space<vmem>>, %arg5: memref<8x4xf32, #tpu.memory_space<vmem>>, %arg6: memref<8x8xf32, #tpu.memory_space<vmem>>, %arg7: memref<8x288xf32, #tpu.memory_space<vmem>>, %arg8: memref<8x4xf32, #tpu.memory_space<vmem>>, %arg9: memref<8x8xf32, #tpu.memory_space<vmem>>, %arg10: memref<8x288xf32, #tpu.memory_space<vmem>>, %arg11: memref<8x4xf32, #tpu.memory_space<vmem>>, %arg12: memref<8x8xf32, #tpu.memory_space<vmem>>, %arg13: memref<64x256xf32, #tpu.memory_space<vmem>>, %arg14: memref<16x256xf32, #tpu.memory_space<vmem>>, %arg15: memref<4x256xf32, #tpu.memory_space<vmem>>, %arg16: memref<9x256x256xf32, #tpu.memory_space<vmem>>, %arg17: memref<8x216xf32, #tpu.memory_space<vmem>>, %arg18: memref<8x4xf32, #tpu.memory_space<vmem>>, %arg19: memref<8x8xf32, #tpu.memory_space<vmem>>, %arg20: memref<256x1024xf32, #tpu.memory_space<vmem>>, %arg21: memref<1x8x256xf32, #tpu.memory_space<vmem>>, %arg22: memref<1x1x1024xf32, #tpu.memory_space<vmem>>) attributes {dimension_semantics = [#tpu.dimension_semantics<parallel>], iteration_bounds = array<i64: 2>, scalar_prefetch = 0 : i64, scratch_operands = 0 : i64, tpu.core_type = #tpu.core_type<tc>, window_params = [{transform_indices = @transform_0, window_bounds = array<i64: 1, 144, 64>}, {transform_indices = @transform_1, window_bounds = array<i64: 1, 288, 16>}, {transform_indices = @transform_2, window_bounds = array<i64: 1, 288, 4>}, {pipeline_mode = #tpu.pipeline_mode<synchronous>, transform_indices = @transform_3, window_bounds = array<i64: 8, 144>}, {pipeline_mode = #tpu.pipeline_mode<synchronous>, transform_indices = @transform_4, window_bounds = array<i64: 8, 4>}, {pipeline_mode = #tpu.pipeline_mode<synchronous>, transform_indices = @transform_5, window_bounds = array<i64: 8, 8>}, {pipeline_mode = #tpu.pipeline_mode<synchronous>, transform_indices = @transform_6, window_bounds = array<i64: 8, 288>}, {pipeline_mode = #tpu.pipeline_mode<synchronous>, transform_indices = @transform_7, window_bounds = array<i64: 8, 4>}, {pipeline_mode = #tpu.pipeline_mode<synchronous>, transform_indices = @transform_8, window_bounds = array<i64: 8, 8>}, {pipeline_mode = #tpu.pipeline_mode<synchronous>, transform_indices = @transform_9, window_bounds = array<i64: 8, 288>}, {pipeline_mode = #tpu.pipeline_mode<synchronous>, transform_indices = @transform_10, window_bounds = array<i64: 8, 4>}, {pipeline_mode = #tpu.pipeline_mode<synchronous>, transform_indices = @transform_11, window_bounds = array<i64: 8, 8>}, {pipeline_mode = #tpu.pipeline_mode<synchronous>, transform_indices = @transform_12, window_bounds = array<i64: 64, 256>}, {pipeline_mode = #tpu.pipeline_mode<synchronous>, transform_indices = @transform_13, window_bounds = array<i64: 16, 256>}, {pipeline_mode = #tpu.pipeline_mode<synchronous>, transform_indices = @transform_14, window_bounds = array<i64: 4, 256>}, {pipeline_mode = #tpu.pipeline_mode<synchronous>, transform_indices = @transform_15, window_bounds = array<i64: 9, 256, 256>}, {pipeline_mode = #tpu.pipeline_mode<synchronous>, transform_indices = @transform_16, window_bounds = array<i64: 8, 216>}, {pipeline_mode = #tpu.pipeline_mode<synchronous>, transform_indices = @transform_17, window_bounds = array<i64: 8, 4>}, {pipeline_mode = #tpu.pipeline_mode<synchronous>, transform_indices = @transform_18, window_bounds = array<i64: 8, 8>}, {pipeline_mode = #tpu.pipeline_mode<synchronous>, transform_indices = @transform_19, window_bounds = array<i64: 256, 1024>}, {transform_indices = @transform_20, window_bounds = array<i64: 1, 8, 256>}, {transform_indices = @transform_21, window_bounds = array<i64: 1, 1, 1024>}]} {
    %c0 = arith.constant 0 : index
    %c0_0 = arith.constant 0 : index
    %c0_1 = arith.constant 0 : index
    %0 = vector.load %arg1[%c0, %c0_0, %c0_1] : memref<1x144x64xf32, #tpu.memory_space<vmem>>, vector<1x144x64xf32>
    %1 = vector.shape_cast %0 : vector<1x144x64xf32> to vector<144x64xf32>
    %c0_2 = arith.constant 0 : index
    %c0_3 = arith.constant 0 : index
    %2 = vector.load %arg4[%c0_2, %c0_3] : memref<8x144xf32, #tpu.memory_space<vmem>>, vector<8x144xf32>
    %cst = arith.constant dense<0.000000e+00> : vector<8x64xf32>
    %3 = tpu.matmul %2, %1, %cst {dimension_numbers = #tpu.dot_dimension_numbers<[1], [0], [0], [1], [0, 0, 1, 1], [], []>} : vector<8x144xf32>, vector<144x64xf32>, vector<8x64xf32> -> vector<8x64xf32>
    %c0_4 = arith.constant 0 : index
    %c0_5 = arith.constant 0 : index
    %4 = vector.load %arg5[%c0_4, %c0_5] : memref<8x4xf32, #tpu.memory_space<vmem>>, vector<8x1xf32>
    %5 = vector.broadcast %4 : vector<8x1xf32> to vector<8x64xf32>
    %6 = arith.addf %3, %5 : vector<8x64xf32>
    %7 = vector.shape_cast %6 : vector<8x64xf32> to vector<1x8x64xf32>
    %cst_6 = arith.constant dense<0.000000e+00> : vector<1xf32>
    %8 = vector.multi_reduction <add>, %7, %cst_6 [1, 2] : vector<1x8x64xf32> to vector<1xf32>
    %9 = vector.shape_cast %8 : vector<1xf32> to vector<1x1x1xf32>
    %10 = vector.extract %9[0, 0, 0] : f32 from vector<1x1x1xf32>
    %cst_7 = arith.constant 5.120000e+02 : f32
    %11 = arith.divf %10, %cst_7 : f32
    %12 = vector.broadcast %11 : f32 to vector<8x64xf32>
    %13 = arith.subf %6, %12 : vector<8x64xf32>
    %14 = arith.mulf %13, %13 : vector<8x64xf32>
    %15 = vector.shape_cast %14 : vector<8x64xf32> to vector<1x8x64xf32>
    %cst_8 = arith.constant dense<0.000000e+00> : vector<1xf32>
    %16 = vector.multi_reduction <add>, %15, %cst_8 [1, 2] : vector<1x8x64xf32> to vector<1xf32>
    %17 = vector.shape_cast %16 : vector<1xf32> to vector<1x1x1xf32>
    %18 = vector.extract %17[0, 0, 0] : f32 from vector<1x1x1xf32>
    %cst_9 = arith.constant 5.120000e+02 : f32
    %19 = arith.divf %18, %cst_9 : f32
    %20 = vector.broadcast %11 : f32 to vector<8x64xf32>
    %21 = arith.subf %6, %20 : vector<8x64xf32>
    %cst_10 = arith.constant 9.99999974E-6 : f32
    %22 = arith.addf %19, %cst_10 : f32
    %23 = math.rsqrt %22 : f32
    %24 = vector.broadcast %23 : f32 to vector<8x64xf32>
    %25 = arith.mulf %21, %24 : vector<8x64xf32>
    %c0_11 = arith.constant 0 : index
    %c1 = arith.constant 1 : index
    %26 = vector.load %arg5[%c0_11, %c1] : memref<8x4xf32, #tpu.memory_space<vmem>>, vector<8x1xf32>
    %27 = vector.broadcast %26 : vector<8x1xf32> to vector<8x64xf32>
    %28 = arith.mulf %25, %27 : vector<8x64xf32>
    %c0_12 = arith.constant 0 : index
    %c2 = arith.constant 2 : index
    %29 = vector.load %arg5[%c0_12, %c2] : memref<8x4xf32, #tpu.memory_space<vmem>>, vector<8x1xf32>
    %30 = vector.broadcast %29 : vector<8x1xf32> to vector<8x64xf32>
    %31 = arith.addf %28, %30 : vector<8x64xf32>
    %cst_13 = arith.constant 0.000000e+00 : f32
    %32 = vector.broadcast %cst_13 : f32 to vector<8x64xf32>
    %33 = arith.maximumf %31, %32 : vector<8x64xf32>
    %cst_14 = arith.constant dense<0.000000e+00> : vector<8xf32>
    %34 = vector.multi_reduction <add>, %33, %cst_14 [1] : vector<8x64xf32> to vector<8xf32>
    %35 = vector.shape_cast %34 : vector<8xf32> to vector<8x1xf32>
    %cst_15 = arith.constant 6.400000e+01 : f32
    %36 = vector.broadcast %cst_15 : f32 to vector<8x1xf32>
    %37 = arith.divf %35, %36 : vector<8x1xf32>
    %c0_16 = arith.constant 0 : index
    %c0_17 = arith.constant 0 : index
    %38 = vector.load %arg6[%c0_16, %c0_17] : memref<8x8xf32, #tpu.memory_space<vmem>>, vector<8x8xf32>
    %cst_18 = arith.constant dense<0.000000e+00> : vector<8x1xf32>
    %39 = tpu.matmul %38, %37, %cst_18 {dimension_numbers = #tpu.dot_dimension_numbers<[1], [0], [0], [1], [0, 0, 1, 1], [], []>} : vector<8x8xf32>, vector<8x1xf32>, vector<8x1xf32> -> vector<8x1xf32>
    %c0_19 = arith.constant 0 : index
    %c3 = arith.constant 3 : index
    %40 = vector.load %arg5[%c0_19, %c3] : memref<8x4xf32, #tpu.memory_space<vmem>>, vector<8x1xf32>
    %41 = arith.addf %39, %40 : vector<8x1xf32>
    %42 = arith.negf %41 : vector<8x1xf32>
    %43 = math.exp %42 : vector<8x1xf32>
    %cst_20 = arith.constant 1.000000e+00 : f32
    %44 = vector.broadcast %cst_20 : f32 to vector<8x1xf32>
    %45 = arith.addf %44, %43 : vector<8x1xf32>
    %46 = arith.divf %44, %45 : vector<8x1xf32>
    %47 = vector.broadcast %46 : vector<8x1xf32> to vector<8x64xf32>
    %48 = arith.mulf %33, %47 : vector<8x64xf32>
    %c0_21 = arith.constant 0 : index
    %c0_22 = arith.constant 0 : index
    %49 = vector.load %arg13[%c0_21, %c0_22] : memref<64x256xf32, #tpu.memory_space<vmem>>, vector<64x256xf32>
    %cst_23 = arith.constant dense<0.000000e+00> : vector<8x256xf32>
    %50 = tpu.matmul %48, %49, %cst_23 {dimension_numbers = #tpu.dot_dimension_numbers<[1], [0], [0], [1], [0, 0, 1, 1], [], []>} : vector<8x64xf32>, vector<64x256xf32>, vector<8x256xf32> -> vector<8x256xf32>
    %c0_24 = arith.constant 0 : index
    %c0_25 = arith.constant 0 : index
    %c0_26 = arith.constant 0 : index
    %51 = vector.load %arg2[%c0_24, %c0_25, %c0_26] : memref<1x288x16xf32, #tpu.memory_space<vmem>>, vector<1x288x16xf32>
    %52 = vector.shape_cast %51 : vector<1x288x16xf32> to vector<288x16xf32>
    %c0_27 = arith.constant 0 : index
    %c0_28 = arith.constant 0 : index
    %53 = vector.load %arg7[%c0_27, %c0_28] : memref<8x288xf32, #tpu.memory_space<vmem>>, vector<8x288xf32>
    %cst_29 = arith.constant dense<0.000000e+00> : vector<8x16xf32>
    %54 = tpu.matmul %53, %52, %cst_29 {dimension_numbers = #tpu.dot_dimension_numbers<[1], [0], [0], [1], [0, 0, 1, 1], [], []>} : vector<8x288xf32>, vector<288x16xf32>, vector<8x16xf32> -> vector<8x16xf32>
    %c0_30 = arith.constant 0 : index
    %c0_31 = arith.constant 0 : index
    %55 = vector.load %arg8[%c0_30, %c0_31] : memref<8x4xf32, #tpu.memory_space<vmem>>, vector<8x1xf32>
    %56 = vector.broadcast %55 : vector<8x1xf32> to vector<8x16xf32>
    %57 = arith.addf %54, %56 : vector<8x16xf32>
    %58 = vector.shape_cast %57 : vector<8x16xf32> to vector<1x8x16xf32>
    %cst_32 = arith.constant dense<0.000000e+00> : vector<1xf32>
    %59 = vector.multi_reduction <add>, %58, %cst_32 [1, 2] : vector<1x8x16xf32> to vector<1xf32>
    %60 = vector.shape_cast %59 : vector<1xf32> to vector<1x1x1xf32>
    %61 = vector.extract %60[0, 0, 0] : f32 from vector<1x1x1xf32>
    %cst_33 = arith.constant 1.280000e+02 : f32
    %62 = arith.divf %61, %cst_33 : f32
    %63 = vector.broadcast %62 : f32 to vector<8x16xf32>
    %64 = arith.subf %57, %63 : vector<8x16xf32>
    %65 = arith.mulf %64, %64 : vector<8x16xf32>
    %66 = vector.shape_cast %65 : vector<8x16xf32> to vector<1x8x16xf32>
    %cst_34 = arith.constant dense<0.000000e+00> : vector<1xf32>
    %67 = vector.multi_reduction <add>, %66, %cst_34 [1, 2] : vector<1x8x16xf32> to vector<1xf32>
    %68 = vector.shape_cast %67 : vector<1xf32> to vector<1x1x1xf32>
    %69 = vector.extract %68[0, 0, 0] : f32 from vector<1x1x1xf32>
    %cst_35 = arith.constant 1.280000e+02 : f32
    %70 = arith.divf %69, %cst_35 : f32
    %71 = vector.broadcast %62 : f32 to vector<8x16xf32>
    %72 = arith.subf %57, %71 : vector<8x16xf32>
    %cst_36 = arith.constant 9.99999974E-6 : f32
    %73 = arith.addf %70, %cst_36 : f32
    %74 = math.rsqrt %73 : f32
    %75 = vector.broadcast %74 : f32 to vector<8x16xf32>
    %76 = arith.mulf %72, %75 : vector<8x16xf32>
    %c0_37 = arith.constant 0 : index
    %c1_38 = arith.constant 1 : index
    %77 = vector.load %arg8[%c0_37, %c1_38] : memref<8x4xf32, #tpu.memory_space<vmem>>, vector<8x1xf32>
    %78 = vector.broadcast %77 : vector<8x1xf32> to vector<8x16xf32>
    %79 = arith.mulf %76, %78 : vector<8x16xf32>
    %c0_39 = arith.constant 0 : index
    %c2_40 = arith.constant 2 : index
    %80 = vector.load %arg8[%c0_39, %c2_40] : memref<8x4xf32, #tpu.memory_space<vmem>>, vector<8x1xf32>
    %81 = vector.broadcast %80 : vector<8x1xf32> to vector<8x16xf32>
    %82 = arith.addf %79, %81 : vector<8x16xf32>
    %cst_41 = arith.constant 0.000000e+00 : f32
    %83 = vector.broadcast %cst_41 : f32 to vector<8x16xf32>
    %84 = arith.maximumf %82, %83 : vector<8x16xf32>
    %cst_42 = arith.constant dense<0.000000e+00> : vector<8xf32>
    %85 = vector.multi_reduction <add>, %84, %cst_42 [1] : vector<8x16xf32> to vector<8xf32>
    %86 = vector.shape_cast %85 : vector<8xf32> to vector<8x1xf32>
    %cst_43 = arith.constant 1.600000e+01 : f32
    %87 = vector.broadcast %cst_43 : f32 to vector<8x1xf32>
    %88 = arith.divf %86, %87 : vector<8x1xf32>
    %c0_44 = arith.constant 0 : index
    %c0_45 = arith.constant 0 : index
    %89 = vector.load %arg9[%c0_44, %c0_45] : memref<8x8xf32, #tpu.memory_space<vmem>>, vector<8x8xf32>
    %cst_46 = arith.constant dense<0.000000e+00> : vector<8x1xf32>
    %90 = tpu.matmul %89, %88, %cst_46 {dimension_numbers = #tpu.dot_dimension_numbers<[1], [0], [0], [1], [0, 0, 1, 1], [], []>} : vector<8x8xf32>, vector<8x1xf32>, vector<8x1xf32> -> vector<8x1xf32>
    %c0_47 = arith.constant 0 : index
    %c3_48 = arith.constant 3 : index
    %91 = vector.load %arg8[%c0_47, %c3_48] : memref<8x4xf32, #tpu.memory_space<vmem>>, vector<8x1xf32>
    %92 = arith.addf %90, %91 : vector<8x1xf32>
    %93 = arith.negf %92 : vector<8x1xf32>
    %94 = math.exp %93 : vector<8x1xf32>
    %cst_49 = arith.constant 1.000000e+00 : f32
    %95 = vector.broadcast %cst_49 : f32 to vector<8x1xf32>
    %96 = arith.addf %95, %94 : vector<8x1xf32>
    %97 = arith.divf %95, %96 : vector<8x1xf32>
    %98 = vector.broadcast %97 : vector<8x1xf32> to vector<8x16xf32>
    %99 = arith.mulf %84, %98 : vector<8x16xf32>
    %c0_50 = arith.constant 0 : index
    %c0_51 = arith.constant 0 : index
    %100 = vector.load %arg14[%c0_50, %c0_51] : memref<16x256xf32, #tpu.memory_space<vmem>>, vector<16x256xf32>
    %cst_52 = arith.constant dense<0.000000e+00> : vector<8x256xf32>
    %101 = tpu.matmul %99, %100, %cst_52 {dimension_numbers = #tpu.dot_dimension_numbers<[1], [0], [0], [1], [0, 0, 1, 1], [], []>} : vector<8x16xf32>, vector<16x256xf32>, vector<8x256xf32> -> vector<8x256xf32>
    %c0_53 = arith.constant 0 : index
    %c0_54 = arith.constant 0 : index
    %c0_55 = arith.constant 0 : index
    %102 = vector.load %arg3[%c0_53, %c0_54, %c0_55] : memref<1x288x4xf32, #tpu.memory_space<vmem>>, vector<1x288x4xf32>
    %103 = vector.shape_cast %102 : vector<1x288x4xf32> to vector<288x4xf32>
    %c0_56 = arith.constant 0 : index
    %c0_57 = arith.constant 0 : index
    %104 = vector.load %arg10[%c0_56, %c0_57] : memref<8x288xf32, #tpu.memory_space<vmem>>, vector<8x288xf32>
    %cst_58 = arith.constant dense<0.000000e+00> : vector<8x4xf32>
    %105 = tpu.matmul %104, %103, %cst_58 {dimension_numbers = #tpu.dot_dimension_numbers<[1], [0], [0], [1], [0, 0, 1, 1], [], []>} : vector<8x288xf32>, vector<288x4xf32>, vector<8x4xf32> -> vector<8x4xf32>
    %c0_59 = arith.constant 0 : index
    %c0_60 = arith.constant 0 : index
    %106 = vector.load %arg11[%c0_59, %c0_60] : memref<8x4xf32, #tpu.memory_space<vmem>>, vector<8x1xf32>
    %107 = vector.broadcast %106 : vector<8x1xf32> to vector<8x4xf32>
    %108 = arith.addf %105, %107 : vector<8x4xf32>
    %109 = vector.shape_cast %108 : vector<8x4xf32> to vector<1x8x4xf32>
    %cst_61 = arith.constant dense<0.000000e+00> : vector<1xf32>
    %110 = vector.multi_reduction <add>, %109, %cst_61 [1, 2] : vector<1x8x4xf32> to vector<1xf32>
    %111 = vector.shape_cast %110 : vector<1xf32> to vector<1x1x1xf32>
    %112 = vector.extract %111[0, 0, 0] : f32 from vector<1x1x1xf32>
    %cst_62 = arith.constant 3.200000e+01 : f32
    %113 = arith.divf %112, %cst_62 : f32
    %114 = vector.broadcast %113 : f32 to vector<8x4xf32>
    %115 = arith.subf %108, %114 : vector<8x4xf32>
    %116 = arith.mulf %115, %115 : vector<8x4xf32>
    %117 = vector.shape_cast %116 : vector<8x4xf32> to vector<1x8x4xf32>
    %cst_63 = arith.constant dense<0.000000e+00> : vector<1xf32>
    %118 = vector.multi_reduction <add>, %117, %cst_63 [1, 2] : vector<1x8x4xf32> to vector<1xf32>
    %119 = vector.shape_cast %118 : vector<1xf32> to vector<1x1x1xf32>
    %120 = vector.extract %119[0, 0, 0] : f32 from vector<1x1x1xf32>
    %cst_64 = arith.constant 3.200000e+01 : f32
    %121 = arith.divf %120, %cst_64 : f32
    %122 = vector.broadcast %113 : f32 to vector<8x4xf32>
    %123 = arith.subf %108, %122 : vector<8x4xf32>
    %cst_65 = arith.constant 9.99999974E-6 : f32
    %124 = arith.addf %121, %cst_65 : f32
    %125 = math.rsqrt %124 : f32
    %126 = vector.broadcast %125 : f32 to vector<8x4xf32>
    %127 = arith.mulf %123, %126 : vector<8x4xf32>
    %c0_66 = arith.constant 0 : index
    %c1_67 = arith.constant 1 : index
    %128 = vector.load %arg11[%c0_66, %c1_67] : memref<8x4xf32, #tpu.memory_space<vmem>>, vector<8x1xf32>
    %129 = vector.broadcast %128 : vector<8x1xf32> to vector<8x4xf32>
    %130 = arith.mulf %127, %129 : vector<8x4xf32>
    %c0_68 = arith.constant 0 : index
    %c2_69 = arith.constant 2 : index
    %131 = vector.load %arg11[%c0_68, %c2_69] : memref<8x4xf32, #tpu.memory_space<vmem>>, vector<8x1xf32>
    %132 = vector.broadcast %131 : vector<8x1xf32> to vector<8x4xf32>
    %133 = arith.addf %130, %132 : vector<8x4xf32>
    %cst_70 = arith.constant 0.000000e+00 : f32
    %134 = vector.broadcast %cst_70 : f32 to vector<8x4xf32>
    %135 = arith.maximumf %133, %134 : vector<8x4xf32>
    %cst_71 = arith.constant dense<0.000000e+00> : vector<8xf32>
    %136 = vector.multi_reduction <add>, %135, %cst_71 [1] : vector<8x4xf32> to vector<8xf32>
    %137 = vector.shape_cast %136 : vector<8xf32> to vector<8x1xf32>
    %cst_72 = arith.constant 4.000000e+00 : f32
    %138 = vector.broadcast %cst_72 : f32 to vector<8x1xf32>
    %139 = arith.divf %137, %138 : vector<8x1xf32>
    %c0_73 = arith.constant 0 : index
    %c0_74 = arith.constant 0 : index
    %140 = vector.load %arg12[%c0_73, %c0_74] : memref<8x8xf32, #tpu.memory_space<vmem>>, vector<8x8xf32>
    %cst_75 = arith.constant dense<0.000000e+00> : vector<8x1xf32>
    %141 = tpu.matmul %140, %139, %cst_75 {dimension_numbers = #tpu.dot_dimension_numbers<[1], [0], [0], [1], [0, 0, 1, 1], [], []>} : vector<8x8xf32>, vector<8x1xf32>, vector<8x1xf32> -> vector<8x1xf32>
    %c0_76 = arith.constant 0 : index
    %c3_77 = arith.constant 3 : index
    %142 = vector.load %arg11[%c0_76, %c3_77] : memref<8x4xf32, #tpu.memory_space<vmem>>, vector<8x1xf32>
    %143 = arith.addf %141, %142 : vector<8x1xf32>
    %144 = arith.negf %143 : vector<8x1xf32>
    %145 = math.exp %144 : vector<8x1xf32>
    %cst_78 = arith.constant 1.000000e+00 : f32
    %146 = vector.broadcast %cst_78 : f32 to vector<8x1xf32>
    %147 = arith.addf %146, %145 : vector<8x1xf32>
    %148 = arith.divf %146, %147 : vector<8x1xf32>
    %149 = vector.broadcast %148 : vector<8x1xf32> to vector<8x4xf32>
    %150 = arith.mulf %135, %149 : vector<8x4xf32>
    %c0_79 = arith.constant 0 : index
    %c0_80 = arith.constant 0 : index
    %151 = vector.load %arg15[%c0_79, %c0_80] : memref<4x256xf32, #tpu.memory_space<vmem>>, vector<4x256xf32>
    %cst_81 = arith.constant dense<0.000000e+00> : vector<8x256xf32>
    %152 = tpu.matmul %150, %151, %cst_81 {dimension_numbers = #tpu.dot_dimension_numbers<[1], [0], [0], [1], [0, 0, 1, 1], [], []>} : vector<8x4xf32>, vector<4x256xf32>, vector<8x256xf32> -> vector<8x256xf32>
    %153 = tpu.concatenate %50, %101, %152 in 0 : vector<8x256xf32>, vector<8x256xf32>, vector<8x256xf32> -> vector<24x256xf32>
    %c0_82 = arith.constant 0 : index
    %c0_83 = arith.constant 0 : index
    %c0_84 = arith.constant 0 : index
    %154 = vector.load %arg16[%c0_82, %c0_83, %c0_84] : memref<9x256x256xf32, #tpu.memory_space<vmem>>, vector<1x256x256xf32>
    %155 = vector.shape_cast %154 : vector<1x256x256xf32> to vector<256x256xf32>
    %cst_85 = arith.constant dense<0.000000e+00> : vector<24x256xf32>
    %156 = tpu.matmul %153, %155, %cst_85 {dimension_numbers = #tpu.dot_dimension_numbers<[1], [0], [0], [1], [0, 0, 1, 1], [], []>} : vector<24x256xf32>, vector<256x256xf32>, vector<24x256xf32> -> vector<24x256xf32>
    %c1_86 = arith.constant 1 : index
    %c0_87 = arith.constant 0 : index
    %c0_88 = arith.constant 0 : index
    %157 = vector.load %arg16[%c1_86, %c0_87, %c0_88] : memref<9x256x256xf32, #tpu.memory_space<vmem>>, vector<1x256x256xf32>
    %158 = vector.shape_cast %157 : vector<1x256x256xf32> to vector<256x256xf32>
    %cst_89 = arith.constant dense<0.000000e+00> : vector<24x256xf32>
    %159 = tpu.matmul %153, %158, %cst_89 {dimension_numbers = #tpu.dot_dimension_numbers<[1], [0], [0], [1], [0, 0, 1, 1], [], []>} : vector<24x256xf32>, vector<256x256xf32>, vector<24x256xf32> -> vector<24x256xf32>
    %c2_90 = arith.constant 2 : index
    %c0_91 = arith.constant 0 : index
    %c0_92 = arith.constant 0 : index
    %160 = vector.load %arg16[%c2_90, %c0_91, %c0_92] : memref<9x256x256xf32, #tpu.memory_space<vmem>>, vector<1x256x256xf32>
    %161 = vector.shape_cast %160 : vector<1x256x256xf32> to vector<256x256xf32>
    %cst_93 = arith.constant dense<0.000000e+00> : vector<24x256xf32>
    %162 = tpu.matmul %153, %161, %cst_93 {dimension_numbers = #tpu.dot_dimension_numbers<[1], [0], [0], [1], [0, 0, 1, 1], [], []>} : vector<24x256xf32>, vector<256x256xf32>, vector<24x256xf32> -> vector<24x256xf32>
    %c3_94 = arith.constant 3 : index
    %c0_95 = arith.constant 0 : index
    %c0_96 = arith.constant 0 : index
    %163 = vector.load %arg16[%c3_94, %c0_95, %c0_96] : memref<9x256x256xf32, #tpu.memory_space<vmem>>, vector<1x256x256xf32>
    %164 = vector.shape_cast %163 : vector<1x256x256xf32> to vector<256x256xf32>
    %cst_97 = arith.constant dense<0.000000e+00> : vector<24x256xf32>
    %165 = tpu.matmul %153, %164, %cst_97 {dimension_numbers = #tpu.dot_dimension_numbers<[1], [0], [0], [1], [0, 0, 1, 1], [], []>} : vector<24x256xf32>, vector<256x256xf32>, vector<24x256xf32> -> vector<24x256xf32>
    %c4 = arith.constant 4 : index
    %c0_98 = arith.constant 0 : index
    %c0_99 = arith.constant 0 : index
    %166 = vector.load %arg16[%c4, %c0_98, %c0_99] : memref<9x256x256xf32, #tpu.memory_space<vmem>>, vector<1x256x256xf32>
    %167 = vector.shape_cast %166 : vector<1x256x256xf32> to vector<256x256xf32>
    %cst_100 = arith.constant dense<0.000000e+00> : vector<24x256xf32>
    %168 = tpu.matmul %153, %167, %cst_100 {dimension_numbers = #tpu.dot_dimension_numbers<[1], [0], [0], [1], [0, 0, 1, 1], [], []>} : vector<24x256xf32>, vector<256x256xf32>, vector<24x256xf32> -> vector<24x256xf32>
    %c5 = arith.constant 5 : index
    %c0_101 = arith.constant 0 : index
    %c0_102 = arith.constant 0 : index
    %169 = vector.load %arg16[%c5, %c0_101, %c0_102] : memref<9x256x256xf32, #tpu.memory_space<vmem>>, vector<1x256x256xf32>
    %170 = vector.shape_cast %169 : vector<1x256x256xf32> to vector<256x256xf32>
    %cst_103 = arith.constant dense<0.000000e+00> : vector<24x256xf32>
    %171 = tpu.matmul %153, %170, %cst_103 {dimension_numbers = #tpu.dot_dimension_numbers<[1], [0], [0], [1], [0, 0, 1, 1], [], []>} : vector<24x256xf32>, vector<256x256xf32>, vector<24x256xf32> -> vector<24x256xf32>
    %c6 = arith.constant 6 : index
    %c0_104 = arith.constant 0 : index
    %c0_105 = arith.constant 0 : index
    %172 = vector.load %arg16[%c6, %c0_104, %c0_105] : memref<9x256x256xf32, #tpu.memory_space<vmem>>, vector<1x256x256xf32>
    %173 = vector.shape_cast %172 : vector<1x256x256xf32> to vector<256x256xf32>
    %cst_106 = arith.constant dense<0.000000e+00> : vector<24x256xf32>
    %174 = tpu.matmul %153, %173, %cst_106 {dimension_numbers = #tpu.dot_dimension_numbers<[1], [0], [0], [1], [0, 0, 1, 1], [], []>} : vector<24x256xf32>, vector<256x256xf32>, vector<24x256xf32> -> vector<24x256xf32>
    %c7 = arith.constant 7 : index
    %c0_107 = arith.constant 0 : index
    %c0_108 = arith.constant 0 : index
    %175 = vector.load %arg16[%c7, %c0_107, %c0_108] : memref<9x256x256xf32, #tpu.memory_space<vmem>>, vector<1x256x256xf32>
    %176 = vector.shape_cast %175 : vector<1x256x256xf32> to vector<256x256xf32>
    %cst_109 = arith.constant dense<0.000000e+00> : vector<24x256xf32>
    %177 = tpu.matmul %153, %176, %cst_109 {dimension_numbers = #tpu.dot_dimension_numbers<[1], [0], [0], [1], [0, 0, 1, 1], [], []>} : vector<24x256xf32>, vector<256x256xf32>, vector<24x256xf32> -> vector<24x256xf32>
    %c8 = arith.constant 8 : index
    %c0_110 = arith.constant 0 : index
    %c0_111 = arith.constant 0 : index
    %178 = vector.load %arg16[%c8, %c0_110, %c0_111] : memref<9x256x256xf32, #tpu.memory_space<vmem>>, vector<1x256x256xf32>
    %179 = vector.shape_cast %178 : vector<1x256x256xf32> to vector<256x256xf32>
    %cst_112 = arith.constant dense<0.000000e+00> : vector<24x256xf32>
    %180 = tpu.matmul %153, %179, %cst_112 {dimension_numbers = #tpu.dot_dimension_numbers<[1], [0], [0], [1], [0, 0, 1, 1], [], []>} : vector<24x256xf32>, vector<256x256xf32>, vector<24x256xf32> -> vector<24x256xf32>
    %181 = tpu.concatenate %156, %159, %162, %165, %168, %171, %174, %177, %180 in 0 : vector<24x256xf32>, vector<24x256xf32>, vector<24x256xf32>, vector<24x256xf32>, vector<24x256xf32>, vector<24x256xf32>, vector<24x256xf32>, vector<24x256xf32>, vector<24x256xf32> -> vector<216x256xf32>
    %c0_113 = arith.constant 0 : index
    %c0_114 = arith.constant 0 : index
    %182 = vector.load %arg17[%c0_113, %c0_114] : memref<8x216xf32, #tpu.memory_space<vmem>>, vector<8x216xf32>
    %cst_115 = arith.constant dense<0.000000e+00> : vector<8x256xf32>
    %183 = tpu.matmul %182, %181, %cst_115 {dimension_numbers = #tpu.dot_dimension_numbers<[1], [0], [0], [1], [0, 0, 1, 1], [], []>} : vector<8x216xf32>, vector<216x256xf32>, vector<8x256xf32> -> vector<8x256xf32>
    %c0_116 = arith.constant 0 : index
    %c0_117 = arith.constant 0 : index
    %184 = vector.load %arg18[%c0_116, %c0_117] : memref<8x4xf32, #tpu.memory_space<vmem>>, vector<8x1xf32>
    %185 = vector.broadcast %184 : vector<8x1xf32> to vector<8x256xf32>
    %186 = arith.addf %183, %185 : vector<8x256xf32>
    %187 = vector.shape_cast %186 : vector<8x256xf32> to vector<1x8x256xf32>
    %cst_118 = arith.constant dense<0.000000e+00> : vector<1xf32>
    %188 = vector.multi_reduction <add>, %187, %cst_118 [1, 2] : vector<1x8x256xf32> to vector<1xf32>
    %189 = vector.shape_cast %188 : vector<1xf32> to vector<1x1x1xf32>
    %190 = vector.extract %189[0, 0, 0] : f32 from vector<1x1x1xf32>
    %cst_119 = arith.constant 2.048000e+03 : f32
    %191 = arith.divf %190, %cst_119 : f32
    %192 = vector.broadcast %191 : f32 to vector<8x256xf32>
    %193 = arith.subf %186, %192 : vector<8x256xf32>
    %194 = arith.mulf %193, %193 : vector<8x256xf32>
    %195 = vector.shape_cast %194 : vector<8x256xf32> to vector<1x8x256xf32>
    %cst_120 = arith.constant dense<0.000000e+00> : vector<1xf32>
    %196 = vector.multi_reduction <add>, %195, %cst_120 [1, 2] : vector<1x8x256xf32> to vector<1xf32>
    %197 = vector.shape_cast %196 : vector<1xf32> to vector<1x1x1xf32>
    %198 = vector.extract %197[0, 0, 0] : f32 from vector<1x1x1xf32>
    %cst_121 = arith.constant 2.048000e+03 : f32
    %199 = arith.divf %198, %cst_121 : f32
    %200 = vector.broadcast %191 : f32 to vector<8x256xf32>
    %201 = arith.subf %186, %200 : vector<8x256xf32>
    %cst_122 = arith.constant 9.99999974E-6 : f32
    %202 = arith.addf %199, %cst_122 : f32
    %203 = math.rsqrt %202 : f32
    %204 = vector.broadcast %203 : f32 to vector<8x256xf32>
    %205 = arith.mulf %201, %204 : vector<8x256xf32>
    %c0_123 = arith.constant 0 : index
    %c1_124 = arith.constant 1 : index
    %206 = vector.load %arg18[%c0_123, %c1_124] : memref<8x4xf32, #tpu.memory_space<vmem>>, vector<8x1xf32>
    %207 = vector.broadcast %206 : vector<8x1xf32> to vector<8x256xf32>
    %208 = arith.mulf %205, %207 : vector<8x256xf32>
    %c0_125 = arith.constant 0 : index
    %c2_126 = arith.constant 2 : index
    %209 = vector.load %arg18[%c0_125, %c2_126] : memref<8x4xf32, #tpu.memory_space<vmem>>, vector<8x1xf32>
    %210 = vector.broadcast %209 : vector<8x1xf32> to vector<8x256xf32>
    %211 = arith.addf %208, %210 : vector<8x256xf32>
    %cst_127 = arith.constant 0.000000e+00 : f32
    %212 = vector.broadcast %cst_127 : f32 to vector<8x256xf32>
    %213 = arith.maximumf %211, %212 : vector<8x256xf32>
    %cst_128 = arith.constant dense<0.000000e+00> : vector<8xf32>
    %214 = vector.multi_reduction <add>, %213, %cst_128 [1] : vector<8x256xf32> to vector<8xf32>
    %215 = vector.shape_cast %214 : vector<8xf32> to vector<8x1xf32>
    %cst_129 = arith.constant 2.560000e+02 : f32
    %216 = vector.broadcast %cst_129 : f32 to vector<8x1xf32>
    %217 = arith.divf %215, %216 : vector<8x1xf32>
    %c0_130 = arith.constant 0 : index
    %c0_131 = arith.constant 0 : index
    %218 = vector.load %arg19[%c0_130, %c0_131] : memref<8x8xf32, #tpu.memory_space<vmem>>, vector<8x8xf32>
    %cst_132 = arith.constant dense<0.000000e+00> : vector<8x1xf32>
    %219 = tpu.matmul %218, %217, %cst_132 {dimension_numbers = #tpu.dot_dimension_numbers<[1], [0], [0], [1], [0, 0, 1, 1], [], []>} : vector<8x8xf32>, vector<8x1xf32>, vector<8x1xf32> -> vector<8x1xf32>
    %c0_133 = arith.constant 0 : index
    %c3_134 = arith.constant 3 : index
    %220 = vector.load %arg18[%c0_133, %c3_134] : memref<8x4xf32, #tpu.memory_space<vmem>>, vector<8x1xf32>
    %221 = arith.addf %219, %220 : vector<8x1xf32>
    %222 = arith.negf %221 : vector<8x1xf32>
    %223 = math.exp %222 : vector<8x1xf32>
    %cst_135 = arith.constant 1.000000e+00 : f32
    %224 = vector.broadcast %cst_135 : f32 to vector<8x1xf32>
    %225 = arith.addf %224, %223 : vector<8x1xf32>
    %226 = arith.divf %224, %225 : vector<8x1xf32>
    %227 = vector.broadcast %226 : vector<8x1xf32> to vector<8x256xf32>
    %228 = arith.mulf %213, %227 : vector<8x256xf32>
    %cst_136 = arith.constant dense<0.000000e+00> : vector<8xf32>
    %229 = vector.multi_reduction <add>, %228, %cst_136 [1] : vector<8x256xf32> to vector<8xf32>
    %230 = vector.shape_cast %229 : vector<8xf32> to vector<8x1xf32>
    %cst_137 = arith.constant 2.560000e+02 : f32
    %231 = vector.broadcast %cst_137 : f32 to vector<8x1xf32>
    %232 = arith.divf %230, %231 : vector<8x1xf32>
    %233 = vector.broadcast %232 : vector<8x1xf32> to vector<8x256xf32>
    %234 = arith.subf %228, %233 : vector<8x256xf32>
    %c0_138 = arith.constant 0 : index
    %c0_139 = arith.constant 0 : index
    %c0_140 = arith.constant 0 : index
    %235 = vector.load %arg21[%c0_138, %c0_139, %c0_140] : memref<1x8x256xf32, #tpu.memory_space<vmem>>, vector<1x8x256xf32>
    %236 = vector.shape_cast %235 : vector<1x8x256xf32> to vector<8x256xf32>
    %237 = vector.shape_cast %234 : vector<8x256xf32> to vector<1x8x256xf32>
    tpu.vector_store %arg21[%c0_138, %c0_139, %c0_140], %237 {strides = array<i32>} : memref<1x8x256xf32, #tpu.memory_space<vmem>>, vector<1x8x256xf32>,
    %cst_141 = arith.constant dense<0.000000e+00> : vector<256xf32>
    %238 = vector.multi_reduction <add>, %234, %cst_141 [0] : vector<8x256xf32> to vector<256xf32>
    %239 = vector.shape_cast %238 : vector<256xf32> to vector<1x256xf32>
    %240 = tpu.iota {dimensions = array<i32: 1>} : vector<1x256xi32>
    %c0_i32 = arith.constant 0 : i32
    %241 = vector.broadcast %c0_i32 : i32 to vector<1x256xi32>
    %242 = arith.cmpi eq, %240, %241 : vector<1x256xi32>
    %c240_i32 = arith.constant 240 : i32
    %243 = vector.broadcast %c240_i32 : i32 to vector<1x256xi32>
    %244 = arith.cmpi eq, %240, %243 : vector<1x256xi32>
    %245 = arith.ori %242, %244 : vector<1x256xi1>
    %c255_i32 = arith.constant 255 : i32
    %246 = vector.broadcast %c255_i32 : i32 to vector<1x256xi32>
    %247 = arith.cmpi eq, %240, %246 : vector<1x256xi32>
    %248 = arith.ori %245, %247 : vector<1x256xi1>
    %c15_i32 = arith.constant 15 : i32
    %249 = vector.broadcast %c15_i32 : i32 to vector<1x256xi32>
    %250 = arith.cmpi eq, %240, %249 : vector<1x256xi32>
    %251 = arith.ori %248, %250 : vector<1x256xi1>
    %cst_142 = arith.constant 0.000000e+00 : f32
    %252 = vector.broadcast %cst_142 : f32 to vector<1x256xf32>
    %253 = arith.cmpf ogt, %239, %252 : vector<1x256xf32>
    %254 = arith.andi %251, %253 : vector<1x256xi1>
    %cst_143 = arith.constant 1.000000e+00 : f32
    %cst_144 = arith.constant 0.000000e+00 : f32
    %255 = vector.broadcast %cst_143 : f32 to vector<1x256xf32>
    %256 = vector.broadcast %cst_144 : f32 to vector<1x256xf32>
    %257 = arith.select %254, %255, %256 : vector<1x256xi1>, vector<1x256xf32>
    %258 = vector.shape_cast %257 : vector<1x256xf32> to vector<1x1x256xf32>
    %cst_145 = arith.constant dense<0.000000e+00> : vector<1xf32>
    %259 = vector.multi_reduction <add>, %258, %cst_145 [1, 2] : vector<1x1x256xf32> to vector<1xf32>
    %260 = vector.shape_cast %259 : vector<1xf32> to vector<1x1x1xf32>
    %261 = vector.extract %260[0, 0, 0] : f32 from vector<1x1x1xf32>
    %cst_146 = arith.constant 2.000000e+00 : f32
    %262 = arith.cmpf olt, %261, %cst_146 : f32
    %263 = arith.extui %262 : i1 to i32
    %264 = arith.sitofp %263 : i32 to f32
    %cst_147 = arith.constant 2.000000e+00 : f32
    %265 = arith.mulf %264, %cst_147 : f32
    %cst_148 = arith.constant 1.000000e+00 : f32
    %266 = arith.subf %265, %cst_148 : f32
    %267 = vector.broadcast %266 : f32 to vector<1x256xf32>
    %268 = arith.mulf %239, %267 : vector<1x256xf32>
    %c0_149 = arith.constant 0 : index
    %c0_150 = arith.constant 0 : index
    %269 = vector.load %arg20[%c0_149, %c0_150] : memref<256x1024xf32, #tpu.memory_space<vmem>>, vector<256x1024xf32>
    %cst_151 = arith.constant dense<0.000000e+00> : vector<1x1024xf32>
    %270 = tpu.matmul %268, %269, %cst_151 {dimension_numbers = #tpu.dot_dimension_numbers<[1], [0], [0], [1], [0, 0, 1, 1], [], []>} : vector<1x256xf32>, vector<256x1024xf32>, vector<1x1024xf32> -> vector<1x1024xf32>
    %c0_152 = arith.constant 0 : index
    %c0_153 = arith.constant 0 : index
    %c0_154 = arith.constant 0 : index
    %271 = vector.load %arg22[%c0_152, %c0_153, %c0_154] : memref<1x1x1024xf32, #tpu.memory_space<vmem>>, vector<1x1x1024xf32>
    %272 = vector.shape_cast %271 : vector<1x1x1024xf32> to vector<1x1024xf32>
    %273 = vector.shape_cast %270 : vector<1x1024xf32> to vector<1x1x1024xf32>
    tpu.vector_store %arg22[%c0_152, %c0_153, %c0_154], %273 {strides = array<i32>} : memref<1x1x1024xf32, #tpu.memory_space<vmem>>, vector<1x1x1024xf32>,
    return
  }
  func.func @transform_0(%arg0: i32) -> (i32, i32, i32) {
    %c0_i32 = arith.constant 0 : i32
    %c0_i32_0 = arith.constant 0 : i32
    %c0_i32_1 = arith.constant 0 : i32
    return %arg0, %c0_i32, %c0_i32_0 : i32, i32, i32
  }
  func.func @transform_1(%arg0: i32) -> (i32, i32, i32) {
    %c0_i32 = arith.constant 0 : i32
    %c0_i32_0 = arith.constant 0 : i32
    %c0_i32_1 = arith.constant 0 : i32
    return %arg0, %c0_i32, %c0_i32_0 : i32, i32, i32
  }
  func.func @transform_2(%arg0: i32) -> (i32, i32, i32) {
    %c0_i32 = arith.constant 0 : i32
    %c0_i32_0 = arith.constant 0 : i32
    %c0_i32_1 = arith.constant 0 : i32
    return %arg0, %c0_i32, %c0_i32_0 : i32, i32, i32
  }
  func.func @transform_3(%arg0: i32) -> (i32, i32) {
    %c0_i32 = arith.constant 0 : i32
    %c0_i32_0 = arith.constant 0 : i32
    %c0_i32_1 = arith.constant 0 : i32
    return %c0_i32, %c0_i32_0 : i32, i32
  }
  func.func @transform_4(%arg0: i32) -> (i32, i32) {
    %c0_i32 = arith.constant 0 : i32
    %c0_i32_0 = arith.constant 0 : i32
    %c0_i32_1 = arith.constant 0 : i32
    return %c0_i32, %c0_i32_0 : i32, i32
  }
  func.func @transform_5(%arg0: i32) -> (i32, i32) {
    %c0_i32 = arith.constant 0 : i32
    %c0_i32_0 = arith.constant 0 : i32
    %c0_i32_1 = arith.constant 0 : i32
    return %c0_i32, %c0_i32_0 : i32, i32
  }
  func.func @transform_6(%arg0: i32) -> (i32, i32) {
    %c0_i32 = arith.constant 0 : i32
    %c0_i32_0 = arith.constant 0 : i32
    %c0_i32_1 = arith.constant 0 : i32
    return %c0_i32, %c0_i32_0 : i32, i32
  }
  func.func @transform_7(%arg0: i32) -> (i32, i32) {
    %c0_i32 = arith.constant 0 : i32
    %c0_i32_0 = arith.constant 0 : i32
    %c0_i32_1 = arith.constant 0 : i32
    return %c0_i32, %c0_i32_0 : i32, i32
  }
  func.func @transform_8(%arg0: i32) -> (i32, i32) {
    %c0_i32 = arith.constant 0 : i32
    %c0_i32_0 = arith.constant 0 : i32
    %c0_i32_1 = arith.constant 0 : i32
    return %c0_i32, %c0_i32_0 : i32, i32
  }
  func.func @transform_9(%arg0: i32) -> (i32, i32) {
    %c0_i32 = arith.constant 0 : i32
    %c0_i32_0 = arith.constant 0 : i32
    %c0_i32_1 = arith.constant 0 : i32
    return %c0_i32, %c0_i32_0 : i32, i32
  }
  func.func @transform_10(%arg0: i32) -> (i32, i32) {
    %c0_i32 = arith.constant 0 : i32
    %c0_i32_0 = arith.constant 0 : i32
    %c0_i32_1 = arith.constant 0 : i32
    return %c0_i32, %c0_i32_0 : i32, i32
  }
  func.func @transform_11(%arg0: i32) -> (i32, i32) {
    %c0_i32 = arith.constant 0 : i32
    %c0_i32_0 = arith.constant 0 : i32
    %c0_i32_1 = arith.constant 0 : i32
    return %c0_i32, %c0_i32_0 : i32, i32
  }
  func.func @transform_12(%arg0: i32) -> (i32, i32) {
    %c0_i32 = arith.constant 0 : i32
    %c0_i32_0 = arith.constant 0 : i32
    %c0_i32_1 = arith.constant 0 : i32
    return %c0_i32, %c0_i32_0 : i32, i32
  }
  func.func @transform_13(%arg0: i32) -> (i32, i32) {
    %c0_i32 = arith.constant 0 : i32
    %c0_i32_0 = arith.constant 0 : i32
    %c0_i32_1 = arith.constant 0 : i32
    return %c0_i32, %c0_i32_0 : i32, i32
  }
  func.func @transform_14(%arg0: i32) -> (i32, i32) {
    %c0_i32 = arith.constant 0 : i32
    %c0_i32_0 = arith.constant 0 : i32
    %c0_i32_1 = arith.constant 0 : i32
    return %c0_i32, %c0_i32_0 : i32, i32
  }
  func.func @transform_15(%arg0: i32) -> (i32, i32, i32) {
    %c0_i32 = arith.constant 0 : i32
    %c0_i32_0 = arith.constant 0 : i32
    %c0_i32_1 = arith.constant 0 : i32
    %c0_i32_2 = arith.constant 0 : i32
    return %c0_i32, %c0_i32_0, %c0_i32_1 : i32, i32, i32
  }
  func.func @transform_16(%arg0: i32) -> (i32, i32) {
    %c0_i32 = arith.constant 0 : i32
    %c0_i32_0 = arith.constant 0 : i32
    %c0_i32_1 = arith.constant 0 : i32
    return %c0_i32, %c0_i32_0 : i32, i32
  }
  func.func @transform_17(%arg0: i32) -> (i32, i32) {
    %c0_i32 = arith.constant 0 : i32
    %c0_i32_0 = arith.constant 0 : i32
    %c0_i32_1 = arith.constant 0 : i32
    return %c0_i32, %c0_i32_0 : i32, i32
  }
  func.func @transform_18(%arg0: i32) -> (i32, i32) {
    %c0_i32 = arith.constant 0 : i32
    %c0_i32_0 = arith.constant 0 : i32
    %c0_i32_1 = arith.constant 0 : i32
    return %c0_i32, %c0_i32_0 : i32, i32
  }
  func.func @transform_19(%arg0: i32) -> (i32, i32) {
    %c0_i32 = arith.constant 0 : i32
    %c0_i32_0 = arith.constant 0 : i32
    %c0_i32_1 = arith.constant 0 : i32
    return %c0_i32, %c0_i32_0 : i32, i32
  }
  func.func @transform_20(%arg0: i32) -> (i32, i32, i32) {
    %c0_i32 = arith.constant 0 : i32
    %c0_i32_0 = arith.constant 0 : i32
    %c0_i32_1 = arith.constant 0 : i32
    return %arg0, %c0_i32, %c0_i32_0 : i32, i32, i32
  }
  func.func @transform_21(%arg0: i32) -> (i32, i32, i32) {
    %c0_i32 = arith.constant 0 : i32
    %c0_i32_0 = arith.constant 0 : i32
    %c0_i32_1 = arith.constant 0 : i32
    return %arg0, %c0_i32, %c0_i32_0 : i32, i32, i32
  }
}

</mosaic_0001>

<llo_original>
// kernel: network_forward.1
$region0: #{network_forward.1}
  #allocation0 [shape = 'u32[]', space=smem, size = 0x4, offset = 0x4, fixed_abs, tag = 'smem constant byte address 0x4 - core index']
  #allocation1 [shape = 'u32[72,128]{1,0:T(1,128)}', space=vmem, size = 0x9000, scoped, tag = 'internal scratch']
  %s0 = inlined_call_operand.vmem [shape: f32[2,144,64], index: 0, kind: input, shape index: {}]
  %s1 = inlined_call_operand.vmem [shape: f32[2,288,16], index: 1, kind: input, shape index: {}]
  %s2 = inlined_call_operand.vmem [shape: f32[2,288,4], index: 2, kind: input, shape index: {}]
  %s3 = inlined_call_operand.vmem [shape: f32[8,144], index: 3, kind: input, shape index: {}]
  %s4 = inlined_call_operand.vmem [shape: f32[8,4], index: 4, kind: input, shape index: {}]
  %s5 = inlined_call_operand.vmem [shape: f32[8,8], index: 5, kind: input, shape index: {}]
  %s6 = inlined_call_operand.vmem [shape: f32[8,288], index: 6, kind: input, shape index: {}]
  %s7 = inlined_call_operand.vmem [shape: f32[8,4], index: 7, kind: input, shape index: {}]
  %s8 = inlined_call_operand.vmem [shape: f32[8,8], index: 8, kind: input, shape index: {}]
  %s9 = inlined_call_operand.vmem [shape: f32[8,288], index: 9, kind: input, shape index: {}]
  %s10 = inlined_call_operand.vmem [shape: f32[8,4], index: 10, kind: input, shape index: {}]
  %s11 = inlined_call_operand.vmem [shape: f32[8,8], index: 11, kind: input, shape index: {}]
  %s12 = inlined_call_operand.vmem [shape: f32[64,256], index: 12, kind: input, shape index: {}]
  %s13 = inlined_call_operand.vmem [shape: f32[16,256], index: 13, kind: input, shape index: {}]
  %s14 = inlined_call_operand.vmem [shape: f32[4,256], index: 14, kind: input, shape index: {}]
  %s15 = inlined_call_operand.vmem [shape: f32[9,256,256], index: 15, kind: input, shape index: {}]
  %s16 = inlined_call_operand.vmem [shape: f32[8,216], index: 16, kind: input, shape index: {}]
  %s17 = inlined_call_operand.vmem [shape: f32[8,4], index: 17, kind: input, shape index: {}]
  %s18 = inlined_call_operand.vmem [shape: f32[8,8], index: 18, kind: input, shape index: {}]
  %s19 = inlined_call_operand.vmem [shape: f32[256,1024], index: 19, kind: input, shape index: {}]
  %s20 = inlined_call_operand.vmem [shape: f32[2,8,256], index: 20, kind: output, shape index: {0}]
  %s21 = inlined_call_operand.vmem [shape: f32[2,1,1024], index: 21, kind: output, shape index: {1}]
  %22 = xla_tuple %s20, %s21
  %s23 = sld [smem:[#allocation0]]
  $region121: #{network_forward.1} parent=0
    _
  %s25 = ssub.s32 1, %s23
  %s26 = scalar_select 0, %s25, %s23
  loop: start=0, step=1, limit=4
  $region2: #{network_forward.1} parent=0 // loop_pre_header
    _
  $region3: #{network_forward.1} parent=0 // loop_header
    %s28 = sphi 0, %s32
    %p29 = scmp.ge.s32.totalorder %s28, 4
    %s38 = sphi 0, %s40
    %s41 = sphi 0, %s38
    %s42 = sphi 0, %s41
    %s58 = sphi 0, %s42
    %s64 = sphi 0, %s66
    %s67 = sphi 0, %s64
    %s68 = sphi 0, %s67
    %s84 = sphi 0, %s68
    %s90 = sphi 0, %s92
    %s93 = sphi 0, %s90
    %s94 = sphi 0, %s93
    %s110 = sphi 0, %s94
    %s114 = sphi 0, %s114
    %s116 = sphi 0, %s114
    %s117 = sphi 0, %s116
    %s131 = sphi 0, %s117
    %s135 = sphi 0, %s135
    %s137 = sphi 0, %s135
    %s138 = sphi 0, %s137
    %s152 = sphi 0, %s138
    %s156 = sphi 0, %s156
    %s158 = sphi 0, %s156
    %s159 = sphi 0, %s158
    %s173 = sphi 0, %s159
    %s177 = sphi 0, %s177
    %s179 = sphi 0, %s177
    %s180 = sphi 0, %s179
    %s194 = sphi 0, %s180
    %s198 = sphi 0, %s198
    %s200 = sphi 0, %s198
    %s201 = sphi 0, %s200
    %s215 = sphi 0, %s201
    %s219 = sphi 0, %s219
    %s221 = sphi 0, %s219
    %s222 = sphi 0, %s221
    %s236 = sphi 0, %s222
    %s240 = sphi 0, %s240
    %s242 = sphi 0, %s240
    %s243 = sphi 0, %s242
    %s257 = sphi 0, %s243
    %s261 = sphi 0, %s261
    %s263 = sphi 0, %s261
    %s264 = sphi 0, %s263
    %s278 = sphi 0, %s264
    %s282 = sphi 0, %s282
    %s284 = sphi 0, %s282
    %s285 = sphi 0, %s284
    %s299 = sphi 0, %s285
    %s303 = sphi 0, %s303
    %s305 = sphi 0, %s303
    %s306 = sphi 0, %s305
    %s320 = sphi 0, %s306
    %s324 = sphi 0, %s324
    %s326 = sphi 0, %s324
    %s327 = sphi 0, %s326
    %s341 = sphi 0, %s327
    %s345 = sphi 0, %s345
    %s347 = sphi 0, %s345
    %s348 = sphi 0, %s347
    %s362 = sphi 0, %s348
    %s366 = sphi 0, %s366
    %s368 = sphi 0, %s366
    %s369 = sphi 0, %s368
    %s383 = sphi 0, %s369
    %s387 = sphi 0, %s387
    %s389 = sphi 0, %s387
    %s390 = sphi 0, %s389
    %s404 = sphi 0, %s390
    %s408 = sphi 0, %s408
    %s410 = sphi 0, %s408
    %s411 = sphi 0, %s410
    %s425 = sphi 0, %s411
    %s429 = sphi 0, %s429
    %s431 = sphi 0, %s429
    %s432 = sphi 0, %s431
    %s446 = sphi 0, %s432
    %s450 = sphi 0, %s450
    %s452 = sphi 0, %s450
    %s453 = sphi 0, %s452
    %s467 = sphi 0, %s453
    %s473 = sphi 0, %s475
    %s476 = sphi 0, %s473
    %s477 = sphi 0, %s476
    %s493 = sphi 0, %s477
    %s499 = sphi 0, %s501
    %s502 = sphi 0, %s499
    %s503 = sphi 0, %s502
    %s519 = sphi 0, %s503
  $region4: #{network_forward.1} parent=0 // loop_header_branch
    %31 = sbr.rel (%p29) target = $region8
  $region5: #{network_forward.1} parent=0 // loop_body
    %s33 = ssub.s32 %s28, 1
    %s34 = ssub.s32 %s28, 2
    %s35 = sadd.s32 %s28, 1
    %s36 = ssub.s32 %s28, %s35
    %p37 = scmp.eq.s32.totalorder %s36, 0
    %s39 = sadd.s32 %s38, 1
    %s40 = scalar_select %p37, %s38, %s39
    %p43 = pneg %p37
    %p44 = scmp.eq.s32.totalorder %s28, 1
    %p45 = por %p43, %p44
    %p46 = scmp.ne.s32.totalorder %s38, %s41
    %p47 = scmp.eq.s32.totalorder %s28, 0
    %p48 = por %p46, %p47
    %p49 = scmp.ne.s32.totalorder %s38, %s41
    %p50 = scmp.eq.s32.totalorder %s33, 1
    %p51 = por %p49, %p50
    %p52 = scmp.ne.s32.totalorder %s41, %s42
    %p53 = scmp.eq.s32.totalorder %s33, 0
    %p54 = por %p52, %p53
    %p55 = scmp.ne.s32.totalorder %s41, %s42
    %p56 = scmp.eq.s32.totalorder %s34, 1
    %p57 = por %p55, %p56
    %p59 = scmp.ne.s32.totalorder %s42, %s58
    %p60 = scmp.eq.s32.totalorder %s34, 0
    %p61 = por %p59, %p60
    %s62 = ssub.s32 %s28, %s35
    %p63 = scmp.eq.s32.totalorder %s62, 0
    %s65 = sadd.s32 %s64, 1
    %s66 = scalar_select %p63, %s64, %s65
    %p69 = pneg %p63
    %p70 = scmp.eq.s32.totalorder %s28, 1
    %p71 = por %p69, %p70
    %p72 = scmp.ne.s32.totalorder %s64, %s67
    %p73 = scmp.eq.s32.totalorder %s28, 0
    %p74 = por %p72, %p73
    %p75 = scmp.ne.s32.totalorder %s64, %s67
    %p76 = scmp.eq.s32.totalorder %s33, 1
    %p77 = por %p75, %p76
    %p78 = scmp.ne.s32.totalorder %s67, %s68
    %p79 = scmp.eq.s32.totalorder %s33, 0
    %p80 = por %p78, %p79
    %p81 = scmp.ne.s32.totalorder %s67, %s68
    %p82 = scmp.eq.s32.totalorder %s34, 1
    %p83 = por %p81, %p82
    %p85 = scmp.ne.s32.totalorder %s68, %s84
    %p86 = scmp.eq.s32.totalorder %s34, 0
    %p87 = por %p85, %p86
    %s88 = ssub.s32 %s28, %s35
    %p89 = scmp.eq.s32.totalorder %s88, 0
    %s91 = sadd.s32 %s90, 1
    %s92 = scalar_select %p89, %s90, %s91
    %p95 = pneg %p89
    %p96 = scmp.eq.s32.totalorder %s28, 1
    %p97 = por %p95, %p96
    %p98 = scmp.ne.s32.totalorder %s90, %s93
    %p99 = scmp.eq.s32.totalorder %s28, 0
    %p100 = por %p98, %p99
    %p101 = scmp.ne.s32.totalorder %s90, %s93
    %p102 = scmp.eq.s32.totalorder %s33, 1
    %p103 = por %p101, %p102
    %p104 = scmp.ne.s32.totalorder %s93, %s94
    %p105 = scmp.eq.s32.totalorder %s33, 0
    %p106 = por %p104, %p105
    %p107 = scmp.ne.s32.totalorder %s93, %s94
    %p108 = scmp.eq.s32.totalorder %s34, 1
    %p109 = por %p107, %p108
    %p111 = scmp.ne.s32.totalorder %s94, %s110
    %p112 = scmp.eq.s32.totalorder %s34, 0
    %p113 = por %p111, %p112
    %s115 = sadd.s32 %s114, 1
    %p118 = scmp.eq.s32.totalorder %s28, 1
    %p119 = scmp.ne.s32.totalorder %s114, %s116
    %p120 = scmp.eq.s32.totalorder %s28, 0
    %p121 = por %p119, %p120
    %p122 = scmp.ne.s32.totalorder %s114, %s116
    %p123 = scmp.eq.s32.totalorder %s33, 1
    %p124 = por %p122, %p123
    %p125 = scmp.ne.s32.totalorder %s116, %s117
    %p126 = scmp.eq.s32.totalorder %s33, 0
    %p127 = por %p125, %p126
    %p128 = scmp.ne.s32.totalorder %s116, %s117
    %p129 = scmp.eq.s32.totalorder %s34, 1
    %p130 = por %p128, %p129
    %p132 = scmp.ne.s32.totalorder %s117, %s131
    %p133 = scmp.eq.s32.totalorder %s34, 0
    %p134 = por %p132, %p133
    %s136 = sadd.s32 %s135, 1
    %p139 = scmp.eq.s32.totalorder %s28, 1
    %p140 = scmp.ne.s32.totalorder %s135, %s137
    %p141 = scmp.eq.s32.totalorder %s28, 0
    %p142 = por %p140, %p141
    %p143 = scmp.ne.s32.totalorder %s135, %s137
    %p144 = scmp.eq.s32.totalorder %s33, 1
    %p145 = por %p143, %p144
    %p146 = scmp.ne.s32.totalorder %s137, %s138
    %p147 = scmp.eq.s32.totalorder %s33, 0
    %p148 = por %p146, %p147
    %p149 = scmp.ne.s32.totalorder %s137, %s138
    %p150 = scmp.eq.s32.totalorder %s34, 1
    %p151 = por %p149, %p150
    %p153 = scmp.ne.s32.totalorder %s138, %s152
    %p154 = scmp.eq.s32.totalorder %s34, 0
    %p155 = por %p153, %p154
    %s157 = sadd.s32 %s156, 1
    %p160 = scmp.eq.s32.totalorder %s28, 1
    %p161 = scmp.ne.s32.totalorder %s156, %s158
    %p162 = scmp.eq.s32.totalorder %s28, 0
    %p163 = por %p161, %p162
    %p164 = scmp.ne.s32.totalorder %s156, %s158
    %p165 = scmp.eq.s32.totalorder %s33, 1
    %p166 = por %p164, %p165
    %p167 = scmp.ne.s32.totalorder %s158, %s159
    %p168 = scmp.eq.s32.totalorder %s33, 0
    %p169 = por %p167, %p168
    %p170 = scmp.ne.s32.totalorder %s158, %s159
    %p171 = scmp.eq.s32.totalorder %s34, 1
    %p172 = por %p170, %p171
    %p174 = scmp.ne.s32.totalorder %s159, %s173
    %p175 = scmp.eq.s32.totalorder %s34, 0
    %p176 = por %p174, %p175
    %s178 = sadd.s32 %s177, 1
    %p181 = scmp.eq.s32.totalorder %s28, 1
    %p182 = scmp.ne.s32.totalorder %s177, %s179
    %p183 = scmp.eq.s32.totalorder %s28, 0
    %p184 = por %p182, %p183
    %p185 = scmp.ne.s32.totalorder %s177, %s179
    %p186 = scmp.eq.s32.totalorder %s33, 1
    %p187 = por %p185, %p186
    %p188 = scmp.ne.s32.totalorder %s179, %s180
    %p189 = scmp.eq.s32.totalorder %s33, 0
    %p190 = por %p188, %p189
    %p191 = scmp.ne.s32.totalorder %s179, %s180
    %p192 = scmp.eq.s32.totalorder %s34, 1
    %p193 = por %p191, %p192
    %p195 = scmp.ne.s32.totalorder %s180, %s194
    %p196 = scmp.eq.s32.totalorder %s34, 0
    %p197 = por %p195, %p196
    %s199 = sadd.s32 %s198, 1
    %p202 = scmp.eq.s32.totalorder %s28, 1
    %p203 = scmp.ne.s32.totalorder %s198, %s200
    %p204 = scmp.eq.s32.totalorder %s28, 0
    %p205 = por %p203, %p204
    %p206 = scmp.ne.s32.totalorder %s198, %s200
    %p207 = scmp.eq.s32.totalorder %s33, 1
    %p208 = por %p206, %p207
    %p209 = scmp.ne.s32.totalorder %s200, %s201
    %p210 = scmp.eq.s32.totalorder %s33, 0
    %p211 = por %p209, %p210
    %p212 = scmp.ne.s32.totalorder %s200, %s201
    %p213 = scmp.eq.s32.totalorder %s34, 1
    %p214 = por %p212, %p213
    %p216 = scmp.ne.s32.totalorder %s201, %s215
    %p217 = scmp.eq.s32.totalorder %s34, 0
    %p218 = por %p216, %p217
    %s220 = sadd.s32 %s219, 1
    %p223 = scmp.eq.s32.totalorder %s28, 1
    %p224 = scmp.ne.s32.totalorder %s219, %s221
    %p225 = scmp.eq.s32.totalorder %s28, 0
    %p226 = por %p224, %p225
    %p227 = scmp.ne.s32.totalorder %s219, %s221
    %p228 = scmp.eq.s32.totalorder %s33, 1
    %p229 = por %p227, %p228
    %p230 = scmp.ne.s32.totalorder %s221, %s222
    %p231 = scmp.eq.s32.totalorder %s33, 0
    %p232 = por %p230, %p231
    %p233 = scmp.ne.s32.totalorder %s221, %s222
    %p234 = scmp.eq.s32.totalorder %s34, 1
    %p235 = por %p233, %p234
    %p237 = scmp.ne.s32.totalorder %s222, %s236
    %p238 = scmp.eq.s32.totalorder %s34, 0
    %p239 = por %p237, %p238
    %s241 = sadd.s32 %s240, 1
    %p244 = scmp.eq.s32.totalorder %s28, 1
    %p245 = scmp.ne.s32.totalorder %s240, %s242
    %p246 = scmp.eq.s32.totalorder %s28, 0
    %p247 = por %p245, %p246
    %p248 = scmp.ne.s32.totalorder %s240, %s242
    %p249 = scmp.eq.s32.totalorder %s33, 1
    %p250 = por %p248, %p249
    %p251 = scmp.ne.s32.totalorder %s242, %s243
    %p252 = scmp.eq.s32.totalorder %s33, 0
    %p253 = por %p251, %p252
    %p254 = scmp.ne.s32.totalorder %s242, %s243
    %p255 = scmp.eq.s32.totalorder %s34, 1
    %p256 = por %p254, %p255
    %p258 = scmp.ne.s32.totalorder %s243, %s257
    %p259 = scmp.eq.s32.totalorder %s34, 0
    %p260 = por %p258, %p259
    %s262 = sadd.s32 %s261, 1
    %p265 = scmp.eq.s32.totalorder %s28, 1
    %p266 = scmp.ne.s32.totalorder %s261, %s263
    %p267 = scmp.eq.s32.totalorder %s28, 0
    %p268 = por %p266, %p267
    %p269 = scmp.ne.s32.totalorder %s261, %s263
    %p270 = scmp.eq.s32.totalorder %s33, 1
    %p271 = por %p269, %p270
    %p272 = scmp.ne.s32.totalorder %s263, %s264
    %p273 = scmp.eq.s32.totalorder %s33, 0
    %p274 = por %p272, %p273
    %p275 = scmp.ne.s32.totalorder %s263, %s264
    %p276 = scmp.eq.s32.totalorder %s34, 1
    %p277 = por %p275, %p276
    %p279 = scmp.ne.s32.totalorder %s264, %s278
    %p280 = scmp.eq.s32.totalorder %s34, 0
    %p281 = por %p279, %p280
    %s283 = sadd.s32 %s282, 1
    %p286 = scmp.eq.s32.totalorder %s28, 1
    %p287 = scmp.ne.s32.totalorder %s282, %s284
    %p288 = scmp.eq.s32.totalorder %s28, 0
    %p289 = por %p287, %p288
    %p290 = scmp.ne.s32.totalorder %s282, %s284
    %p291 = scmp.eq.s32.totalorder %s33, 1
    %p292 = por %p290, %p291
    %p293 = scmp.ne.s32.totalorder %s284, %s285
    %p294 = scmp.eq.s32.totalorder %s33, 0
    %p295 = por %p293, %p294
    %p296 = scmp.ne.s32.totalorder %s284, %s285
    %p297 = scmp.eq.s32.totalorder %s34, 1
    %p298 = por %p296, %p297
    %p300 = scmp.ne.s32.totalorder %s285, %s299
    %p301 = scmp.eq.s32.totalorder %s34, 0
    %p302 = por %p300, %p301
    %s304 = sadd.s32 %s303, 1
    %p307 = scmp.eq.s32.totalorder %s28, 1
    %p308 = scmp.ne.s32.totalorder %s303, %s305
    %p309 = scmp.eq.s32.totalorder %s28, 0
    %p310 = por %p308, %p309
    %p311 = scmp.ne.s32.totalorder %s303, %s305
    %p312 = scmp.eq.s32.totalorder %s33, 1
    %p313 = por %p311, %p312
    %p314 = scmp.ne.s32.totalorder %s305, %s306
    %p315 = scmp.eq.s32.totalorder %s33, 0
    %p316 = por %p314, %p315
    %p317 = scmp.ne.s32.totalorder %s305, %s306
    %p318 = scmp.eq.s32.totalorder %s34, 1
    %p319 = por %p317, %p318
    %p321 = scmp.ne.s32.totalorder %s306, %s320
    %p322 = scmp.eq.s32.totalorder %s34, 0
    %p323 = por %p321, %p322
    %s325 = sadd.s32 %s324, 1
    %p328 = scmp.eq.s32.totalorder %s28, 1
    %p329 = scmp.ne.s32.totalorder %s324, %s326
    %p330 = scmp.eq.s32.totalorder %s28, 0
    %p331 = por %p329, %p330
    %p332 = scmp.ne.s32.totalorder %s324, %s326
    %p333 = scmp.eq.s32.totalorder %s33, 1
    %p334 = por %p332, %p333
    %p335 = scmp.ne.s32.totalorder %s326, %s327
    %p336 = scmp.eq.s32.totalorder %s33, 0
    %p337 = por %p335, %p336
    %p338 = scmp.ne.s32.totalorder %s326, %s327
    %p339 = scmp.eq.s32.totalorder %s34, 1
    %p340 = por %p338, %p339
    %p342 = scmp.ne.s32.totalorder %s327, %s341
    %p343 = scmp.eq.s32.totalorder %s34, 0
    %p344 = por %p342, %p343
    %s346 = sadd.s32 %s345, 1
    %p349 = scmp.eq.s32.totalorder %s28, 1
    %p350 = scmp.ne.s32.totalorder %s345, %s347
    %p351 = scmp.eq.s32.totalorder %s28, 0
    %p352 = por %p350, %p351
    %p353 = scmp.ne.s32.totalorder %s345, %s347
    %p354 = scmp.eq.s32.totalorder %s33, 1
    %p355 = por %p353, %p354
    %p356 = scmp.ne.s32.totalorder %s347, %s348
    %p357 = scmp.eq.s32.totalorder %s33, 0
    %p358 = por %p356, %p357
    %p359 = scmp.ne.s32.totalorder %s347, %s348
    %p360 = scmp.eq.s32.totalorder %s34, 1
    %p361 = por %p359, %p360
    %p363 = scmp.ne.s32.totalorder %s348, %s362
    %p364 = scmp.eq.s32.totalorder %s34, 0
    %p365 = por %p363, %p364
    %s367 = sadd.s32 %s366, 1
    %p370 = scmp.eq.s32.totalorder %s28, 1
    %p371 = scmp.ne.s32.totalorder %s366, %s368
    %p372 = scmp.eq.s32.totalorder %s28, 0
    %p373 = por %p371, %p372
    %p374 = scmp.ne.s32.totalorder %s366, %s368
    %p375 = scmp.eq.s32.totalorder %s33, 1
    %p376 = por %p374, %p375
    %p377 = scmp.ne.s32.totalorder %s368, %s369
    %p378 = scmp.eq.s32.totalorder %s33, 0
    %p379 = por %p377, %p378
    %p380 = scmp.ne.s32.totalorder %s368, %s369
    %p381 = scmp.eq.s32.totalorder %s34, 1
    %p382 = por %p380, %p381
    %p384 = scmp.ne.s32.totalorder %s369, %s383
    %p385 = scmp.eq.s32.totalorder %s34, 0
    %p386 = por %p384, %p385
    %s388 = sadd.s32 %s387, 1
    %p391 = scmp.eq.s32.totalorder %s28, 1
    %p392 = scmp.ne.s32.totalorder %s387, %s389
    %p393 = scmp.eq.s32.totalorder %s28, 0
    %p394 = por %p392, %p393
    %p395 = scmp.ne.s32.totalorder %s387, %s389
    %p396 = scmp.eq.s32.totalorder %s33, 1
    %p397 = por %p395, %p396
    %p398 = scmp.ne.s32.totalorder %s389, %s390
    %p399 = scmp.eq.s32.totalorder %s33, 0
    %p400 = por %p398, %p399
    %p401 = scmp.ne.s32.totalorder %s389, %s390
    %p402 = scmp.eq.s32.totalorder %s34, 1
    %p403 = por %p401, %p402
    %p405 = scmp.ne.s32.totalorder %s390, %s404
    %p406 = scmp.eq.s32.totalorder %s34, 0
    %p407 = por %p405, %p406
    %s409 = sadd.s32 %s408, 1
    %p412 = scmp.eq.s32.totalorder %s28, 1
    %p413 = scmp.ne.s32.totalorder %s408, %s410
    %p414 = scmp.eq.s32.totalorder %s28, 0
    %p415 = por %p413, %p414
    %p416 = scmp.ne.s32.totalorder %s408, %s410
    %p417 = scmp.eq.s32.totalorder %s33, 1
    %p418 = por %p416, %p417
    %p419 = scmp.ne.s32.totalorder %s410, %s411
    %p420 = scmp.eq.s32.totalorder %s33, 0
    %p421 = por %p419, %p420
    %p422 = scmp.ne.s32.totalorder %s410, %s411
    %p423 = scmp.eq.s32.totalorder %s34, 1
    %p424 = por %p422, %p423
    %p426 = scmp.ne.s32.totalorder %s411, %s425
    %p427 = scmp.eq.s32.totalorder %s34, 0
    %p428 = por %p426, %p427
    %s430 = sadd.s32 %s429, 1
    %p433 = scmp.eq.s32.totalorder %s28, 1
    %p434 = scmp.ne.s32.totalorder %s429, %s431
    %p435 = scmp.eq.s32.totalorder %s28, 0
    %p436 = por %p434, %p435
    %p437 = scmp.ne.s32.totalorder %s429, %s431
    %p438 = scmp.eq.s32.totalorder %s33, 1
    %p439 = por %p437, %p438
    %p440 = scmp.ne.s32.totalorder %s431, %s432
    %p441 = scmp.eq.s32.totalorder %s33, 0
    %p442 = por %p440, %p441
    %p443 = scmp.ne.s32.totalorder %s431, %s432
    %p444 = scmp.eq.s32.totalorder %s34, 1
    %p445 = por %p443, %p444
    %p447 = scmp.ne.s32.totalorder %s432, %s446
    %p448 = scmp.eq.s32.totalorder %s34, 0
    %p449 = por %p447, %p448
    %s451 = sadd.s32 %s450, 1
    %p454 = scmp.eq.s32.totalorder %s28, 1
    %p455 = scmp.ne.s32.totalorder %s450, %s452
    %p456 = scmp.eq.s32.totalorder %s28, 0
    %p457 = por %p455, %p456
    %p458 = scmp.ne.s32.totalorder %s450, %s452
    %p459 = scmp.eq.s32.totalorder %s33, 1
    %p460 = por %p458, %p459
    %p461 = scmp.ne.s32.totalorder %s452, %s453
    %p462 = scmp.eq.s32.totalorder %s33, 0
    %p463 = por %p461, %p462
    %p464 = scmp.ne.s32.totalorder %s452, %s453
    %p465 = scmp.eq.s32.totalorder %s34, 1
    %p466 = por %p464, %p465
    %p468 = scmp.ne.s32.totalorder %s453, %s467
    %p469 = scmp.eq.s32.totalorder %s34, 0
    %p470 = por %p468, %p469
    %s471 = ssub.s32 %s28, %s35
    %p472 = scmp.eq.s32.totalorder %s471, 0
    %s474 = sadd.s32 %s473, 1
    %s475 = scalar_select %p472, %s473, %s474
    %p478 = pneg %p472
    %p479 = scmp.eq.s32.totalorder %s28, 1
    %p480 = por %p478, %p479
    %p481 = scmp.ne.s32.totalorder %s473, %s476
    %p482 = scmp.eq.s32.totalorder %s28, 0
    %p483 = por %p481, %p482
    %p484 = scmp.ne.s32.totalorder %s473, %s476
    %p485 = scmp.eq.s32.totalorder %s33, 1
    %p486 = por %p484, %p485
    %p487 = scmp.ne.s32.totalorder %s476, %s477
    %p488 = scmp.eq.s32.totalorder %s33, 0
    %p489 = por %p487, %p488
    %p490 = scmp.ne.s32.totalorder %s476, %s477
    %p491 = scmp.eq.s32.totalorder %s34, 1
    %p492 = por %p490, %p491
    %p494 = scmp.ne.s32.totalorder %s477, %s493
    %p495 = scmp.eq.s32.totalorder %s34, 0
    %p496 = por %p494, %p495
    %s497 = ssub.s32 %s28, %s35
    %p498 = scmp.eq.s32.totalorder %s497, 0
    %s500 = sadd.s32 %s499, 1
    %s501 = scalar_select %p498, %s499, %s500
    %p504 = pneg %p498
    %p505 = scmp.eq.s32.totalorder %s28, 1
    %p506 = por %p504, %p505
    %p507 = scmp.ne.s32.totalorder %s499, %s502
    %p508 = scmp.eq.s32.totalorder %s28, 0
    %p509 = por %p507, %p508
    %p510 = scmp.ne.s32.totalorder %s499, %s502
    %p511 = scmp.eq.s32.totalorder %s33, 1
    %p512 = por %p510, %p511
    %p513 = scmp.ne.s32.totalorder %s502, %s503
    %p514 = scmp.eq.s32.totalorder %s33, 0
    %p515 = por %p513, %p514
    %p516 = scmp.ne.s32.totalorder %s502, %s503
    %p517 = scmp.eq.s32.totalorder %s34, 1
    %p518 = por %p516, %p517
    %p520 = scmp.ne.s32.totalorder %s503, %s519
    %p521 = scmp.eq.s32.totalorder %s34, 0
    %p522 = por %p520, %p521
    %p523 = scmp.le.s32.totalorder 1, %s28
    %p524 = scmp.lt.s32.totalorder %s28, 3
    %p525 = pnand %p523, %p524
    %p526 = pneg %p525
    // Predicated region
    $region9: #{network_forward.1} parent=5 // pred_check
      _
    $region10: #{network_forward.1} parent=5 // pred_check_branch
      %528 = sbr.rel (%p525) target = $region12
    $region11: #{network_forward.1} parent=5 // pred_region
      %s529 = ssub.s32 %s28, 1
      // Predicated region
      $region13: #{network_forward.1} parent=11 // pred_check
        %p530 = pneg %p127
      $region14: #{network_forward.1} parent=11 // pred_check_branch
        %532 = sbr.rel (%p530) target = $region16
      $region15: #{network_forward.1} parent=11 // pred_region
        _
      $region16: #{network_forward.1} parent=11 // pred_fallthru
        _
      // Predicated region
      $region17: #{network_forward.1} parent=11 // pred_check
        %p533 = pneg %p148
      $region18: #{network_forward.1} parent=11 // pred_check_branch
        %535 = sbr.rel (%p533) target = $region20
      $region19: #{network_forward.1} parent=11 // pred_region
        _
      $region20: #{network_forward.1} parent=11 // pred_fallthru
        _
      // Predicated region
      $region21: #{network_forward.1} parent=11 // pred_check
        %p536 = pneg %p169
      $region22: #{network_forward.1} parent=11 // pred_check_branch
        %538 = sbr.rel (%p536) target = $region24
      $region23: #{network_forward.1} parent=11 // pred_region
        _
      $region24: #{network_forward.1} parent=11 // pred_fallthru
        _
      // Predicated region
      $region25: #{network_forward.1} parent=11 // pred_check
        %p539 = pneg %p190
      $region26: #{network_forward.1} parent=11 // pred_check_branch
        %541 = sbr.rel (%p539) target = $region28
      $region27: #{network_forward.1} parent=11 // pred_region
        _
      $region28: #{network_forward.1} parent=11 // pred_fallthru
        _
      // Predicated region
      $region29: #{network_forward.1} parent=11 // pred_check
        %p542 = pneg %p211
      $region30: #{network_forward.1} parent=11 // pred_check_branch
        %544 = sbr.rel (%p542) target = $region32
      $region31: #{network_forward.1} parent=11 // pred_region
        _
      $region32: #{network_forward.1} parent=11 // pred_fallthru
        _
      // Predicated region
      $region33: #{network_forward.1} parent=11 // pred_check
        %p545 = pneg %p232
      $region34: #{network_forward.1} parent=11 // pred_check_branch
        %547 = sbr.rel (%p545) target = $region36
      $region35: #{network_forward.1} parent=11 // pred_region
        _
      $region36: #{network_forward.1} parent=11 // pred_fallthru
        _
      // Predicated region
      $region37: #{network_forward.1} parent=11 // pred_check
        %p548 = pneg %p253
      $region38: #{network_forward.1} parent=11 // pred_check_branch
        %550 = sbr.rel (%p548) target = $region40
      $region39: #{network_forward.1} parent=11 // pred_region
        _
      $region40: #{network_forward.1} parent=11 // pred_fallthru
        _
      // Predicated region
      $region41: #{network_forward.1} parent=11 // pred_check
        %p551 = pneg %p274
      $region42: #{network_forward.1} parent=11 // pred_check_branch
        %553 = sbr.rel (%p551) target = $region44
      $region43: #{network_forward.1} parent=11 // pred_region
        _
      $region44: #{network_forward.1} parent=11 // pred_fallthru
        _
      // Predicated region
      $region45: #{network_forward.1} parent=11 // pred_check
        %p554 = pneg %p295
      $region46: #{network_forward.1} parent=11 // pred_check_branch
        %556 = sbr.rel (%p554) target = $region48
      $region47: #{network_forward.1} parent=11 // pred_region
        _
      $region48: #{network_forward.1} parent=11 // pred_fallthru
        _
      // Predicated region
      $region49: #{network_forward.1} parent=11 // pred_check
        %p557 = pneg %p316
      $region50: #{network_forward.1} parent=11 // pred_check_branch
        %559 = sbr.rel (%p557) target = $region52
      $region51: #{network_forward.1} parent=11 // pred_region
        _
      $region52: #{network_forward.1} parent=11 // pred_fallthru
        _
      // Predicated region
      $region53: #{network_forward.1} parent=11 // pred_check
        %p560 = pneg %p337
      $region54: #{network_forward.1} parent=11 // pred_check_branch
        %562 = sbr.rel (%p560) target = $region56
      $region55: #{network_forward.1} parent=11 // pred_region
        _
      $region56: #{network_forward.1} parent=11 // pred_fallthru
        _
      // Predicated region
      $region57: #{network_forward.1} parent=11 // pred_check
        %p563 = pneg %p358
      $region58: #{network_forward.1} parent=11 // pred_check_branch
        %565 = sbr.rel (%p563) target = $region60
      $region59: #{network_forward.1} parent=11 // pred_region
        _
      $region60: #{network_forward.1} parent=11 // pred_fallthru
        _
      // Predicated region
      $region61: #{network_forward.1} parent=11 // pred_check
        %p566 = pneg %p379
      $region62: #{network_forward.1} parent=11 // pred_check_branch
        %568 = sbr.rel (%p566) target = $region64
      $region63: #{network_forward.1} parent=11 // pred_region
        _
      $region64: #{network_forward.1} parent=11 // pred_fallthru
        _
      // Predicated region
      $region65: #{network_forward.1} parent=11 // pred_check
        %p569 = pneg %p400
      $region66: #{network_forward.1} parent=11 // pred_check_branch
        %571 = sbr.rel (%p569) target = $region68
      $region67: #{network_forward.1} parent=11 // pred_region
        _
      $region68: #{network_forward.1} parent=11 // pred_fallthru
        _
      // Predicated region
      $region69: #{network_forward.1} parent=11 // pred_check
        %p572 = pneg %p421
      $region70: #{network_forward.1} parent=11 // pred_check_branch
        %574 = sbr.rel (%p572) target = $region72
      $region71: #{network_forward.1} parent=11 // pred_region
        _
      $region72: #{network_forward.1} parent=11 // pred_fallthru
        _
      // Predicated region
      $region73: #{network_forward.1} parent=11 // pred_check
        %p575 = pneg %p442
      $region74: #{network_forward.1} parent=11 // pred_check_branch
        %577 = sbr.rel (%p575) target = $region76
      $region75: #{network_forward.1} parent=11 // pred_region
        _
      $region76: #{network_forward.1} parent=11 // pred_fallthru
        _
      // Predicated region
      $region77: #{network_forward.1} parent=11 // pred_check
        %p578 = pneg %p463
      $region78: #{network_forward.1} parent=11 // pred_check_branch
        %580 = sbr.rel (%p578) target = $region80
      $region79: #{network_forward.1} parent=11 // pred_region
        _
      $region80: #{network_forward.1} parent=11 // pred_fallthru
        _
    $region12: #{network_forward.1} parent=5 // pred_fallthru
      _
    %p581 = scmp.lt.s32.totalorder %s28, 2
    // Predicated region
    $region81: #{network_forward.1} parent=5 // pred_check
      %p582 = pneg %p581
    $region82: #{network_forward.1} parent=5 // pred_check_branch
      %584 = sbr.rel (%p582) target = $region84
    $region83: #{network_forward.1} parent=5 // pred_region
      // Predicated region
      $region85: #{network_forward.1} parent=83 // pred_check
        %p585 = pneg %p48
      $region86: #{network_forward.1} parent=83 // pred_check_branch
        %587 = sbr.rel (%p585) target = $region88
      $region87: #{network_forward.1} parent=83 // pred_region
        %p588 = scmp.lt.s32.totalorder %s28, 1
        %s589 = scalar_select %p588, %s28, 1
        %s590 = smul.addr %s589, 18
        %s591 = smul.addr %s590, 8
        %s592 = scalar_lea.vmem %s0, %s591
      $region88: #{network_forward.1} parent=83 // pred_fallthru
        _
      // Predicated region
      $region89: #{network_forward.1} parent=83 // pred_check
        %p593 = pneg %p74
      $region90: #{network_forward.1} parent=83 // pred_check_branch
        %595 = sbr.rel (%p593) target = $region92
      $region91: #{network_forward.1} parent=83 // pred_region
        %p596 = scmp.lt.s32.totalorder %s28, 1
        %s597 = scalar_select %p596, %s28, 1
        %s598 = smul.addr %s597, 36
        %s599 = smul.addr %s598, 8
        %s600 = scalar_lea.vmem %s1, %s599
      $region92: #{network_forward.1} parent=83 // pred_fallthru
        _
      // Predicated region
      $region93: #{network_forward.1} parent=83 // pred_check
        %p601 = pneg %p100
      $region94: #{network_forward.1} parent=83 // pred_check_branch
        %603 = sbr.rel (%p601) target = $region96
      $region95: #{network_forward.1} parent=83 // pred_region
        %p604 = scmp.lt.s32.totalorder %s28, 1
        %s605 = scalar_select %p604, %s28, 1
        %s606 = smul.addr %s605, 36
        %s607 = smul.addr %s606, 8
        %s608 = scalar_lea.vmem %s2, %s607
      $region96: #{network_forward.1} parent=83 // pred_fallthru
        _
    $region84: #{network_forward.1} parent=5 // pred_fallthru
      _
    %p609 = scmp.le.s32.totalorder 1, %s28
    %p610 = scmp.lt.s32.totalorder %s28, 3
    %p611 = pnand %p609, %p610
    %p612 = pneg %p611
    // Predicated region
    $region97: #{network_forward.1} parent=5 // pred_check
      _
    $region98: #{network_forward.1} parent=5 // pred_check_branch
      %614 = sbr.rel (%p611) target = $region100
    $region99: #{network_forward.1} parent=5 // pred_region
      %s615 = ssub.s32 %s28, 1
      %p616 = scmp.lt.s32.totalorder %s33, 1
      %s617 = scalar_select %p616, %s33, 1
      %s618 = smul.addr %s617, 18
      %s619 = smul.addr %s618, 8
      %s620 = scalar_lea.vmem %s0, %s619
      %p621 = pneg %p54
      %p622 = pneg %p51
      %p623 = scmp.lt.s32.totalorder %s33, 1
      %s624 = scalar_select %p623, %s33, 1
      %s625 = smul.addr %s624, 36
      %s626 = smul.addr %s625, 8
      %s627 = scalar_lea.vmem %s1, %s626
      %p628 = pneg %p80
      %p629 = pneg %p77
      %p630 = scmp.lt.s32.totalorder %s33, 1
      %s631 = scalar_select %p630, %s33, 1
      %s632 = smul.addr %s631, 36
      %s633 = smul.addr %s632, 8
      %s634 = scalar_lea.vmem %s2, %s633
      %p635 = pneg %p106
      %p636 = pneg %p103
      %p637 = pneg %p127
      %p638 = pneg %p124
      %p639 = pneg %p148
      %p640 = pneg %p145
      %p641 = pneg %p169
      %p642 = pneg %p166
      %p643 = pneg %p190
      %p644 = pneg %p187
      %p645 = pneg %p211
      %p646 = pneg %p208
      %p647 = pneg %p232
      %p648 = pneg %p229
      %p649 = pneg %p253
      %p650 = pneg %p250
      %p651 = pneg %p274
      %p652 = pneg %p271
      %p653 = pneg %p295
      %p654 = pneg %p292
      %p655 = pneg %p316
      %p656 = pneg %p313
      %p657 = pneg %p337
      %p658 = pneg %p334
      %p659 = pneg %p358
      %p660 = pneg %p355
      %p661 = pneg %p379
      %p662 = pneg %p376
      %p663 = pneg %p400
      %p664 = pneg %p397
      %p665 = pneg %p421
      %p666 = pneg %p418
      %p667 = pneg %p442
      %p668 = pneg %p439
      %p669 = pneg %p463
      %p670 = pneg %p460
      %p671 = pneg %p489
      %p672 = pneg %p486
      %p673 = scmp.lt.s32.totalorder %s33, 1
      %s674 = scalar_select %p673, %s33, 1
      %s675 = smul.addr %s674, 2
      %s676 = smul.addr %s675, 8
      %s677 = scalar_lea.vmem %s20, %s676
      %p678 = pneg %p515
      %p679 = pneg %p512
      %p680 = scmp.lt.s32.totalorder %s33, 1
      %s681 = scalar_select %p680, %s33, 1
      %s682 = smul.addr %s681, 8
      %s683 = scalar_lea.vmem %s21, %s682
      %p684 = scmp.lt.s32.totalorder %s33, 1
      %s685 = scalar_select %p684, %s33, 1
      %s686 = smul.addr %s685, 18
      %s687 = smul.addr %s686, 8
      %s688 = scalar_lea.vmem %s0, %s687
      %p689 = scmp.lt.s32.totalorder %s33, 1
      %s690 = scalar_select %p689, %s33, 1
      %s691 = smul.addr %s690, 36
      %s692 = smul.addr %s691, 8
      %s693 = scalar_lea.vmem %s1, %s692
      %p694 = scmp.lt.s32.totalorder %s33, 1
      %s695 = scalar_select %p694, %s33, 1
      %s696 = smul.addr %s695, 36
      %s697 = smul.addr %s696, 8
      %s698 = scalar_lea.vmem %s2, %s697
      %p699 = scmp.lt.s32.totalorder %s33, 1
      %s700 = scalar_select %p699, %s33, 1
      %s701 = smul.addr %s700, 2
      %s702 = smul.addr %s701, 8
      %s703 = scalar_lea.vmem %s20, %s702
      %p704 = scmp.lt.s32.totalorder %s33, 1
      %s705 = scalar_select %p704, %s33, 1
      %s706 = smul.addr %s705, 8
      %s707 = scalar_lea.vmem %s21, %s706
      %v708 = vld [vmem:[%s688] sm:$0xff]
      %v709 = vld [vmem:[%s688 + $0x8] sm:$0xff]
      %v710 = vld [vmem:[%s688 + $0x10] sm:$0xff]
      %v711 = vld [vmem:[%s688 + $0x18] sm:$0xff]
      %v712 = vld [vmem:[%s688 + $0x20] sm:$0xff]
      %v713 = vld [vmem:[%s688 + $0x28] sm:$0xff]
      %v714 = vld [vmem:[%s688 + $0x30] sm:$0xff]
      %v715 = vld [vmem:[%s688 + $0x38] sm:$0xff]
      %v716 = vld [vmem:[%s688 + $0x40] sm:$0xff]
      %v717 = vld [vmem:[%s688 + $0x48] sm:$0xff]
      %v718 = vld [vmem:[%s688 + $0x50] sm:$0xff]
      %v719 = vld [vmem:[%s688 + $0x58] sm:$0xff]
      %v720 = vld [vmem:[%s688 + $0x60] sm:$0xff]
      %v721 = vld [vmem:[%s688 + $0x68] sm:$0xff]
      %v722 = vld [vmem:[%s688 + $0x70] sm:$0xff]
      %v723 = vld [vmem:[%s688 + $0x78] sm:$0xff]
      %v724 = vld [vmem:[%s688 + $0x80] sm:$0xff]
      %v725 = vld [vmem:[%s688 + $0x88] sm:$0xff]
      %v726 = vld [vmem:[%s3] sm:$0xff]
      %v727 = vld [vmem:[%s3 + $0x8] sm:$0xff]
      %v728 = vld [vmem:[%s4] sm:$0xff]
      %730 = vset.pattern.permute.xlu0 0
      %731 = vperm.xlu0 %730, %v728
      %v732 = vpop.permute.xlu0 %731
      %vm734 = vcmask 130048
      %v736 = vsel %vm734, %v727, 0
      %738 = vmatpush.msra.mxu0 %v723
      %739 = vmatpush.msra.mxu0 %v722
      %740 = vmatpush.msra.mxu0 %v721
      %741 = vmatpush.msra.mxu0 %v720
      %742 = vmatpush.msra.mxu0 %v719
      %743 = vmatpush.msra.mxu0 %v718
      %744 = vmatpush.msra.mxu0 %v717
      %745 = vmatpush.msra.mxu0 %v716
      %746 = vmatpush.msra.mxu0 %v715
      %747 = vmatpush.msra.mxu0 %v714
      %748 = vmatpush.msra.mxu0 %v713
      %749 = vmatpush.msra.mxu0 %v712
      %750 = vmatpush.msra.mxu0 %v711
      %751 = vmatpush.msra.mxu0 %v710
      %752 = vmatpush.msra.mxu0 %v709
      %753 = vmatpush.msra.mxu0 %v708
      %754 = vmatmul.f32.gmra.mxu0 %v726
      %v755 = vpop.f32.mrf.mxu0
      %v756 = vadd.f32 %v732, %v755
      %757 = vdwg.mxu0
      %758 = vmatpush.msra.mxu0 0.0
      %759 = vmatpush.msra.mxu0 0.0
      %760 = vmatpush.msra.mxu0 0.0
      %761 = vmatpush.msra.mxu0 0.0
      %762 = vmatpush.msra.mxu0 0.0
      %763 = vmatpush.msra.mxu0 0.0
      %764 = vmatpush.msra.mxu0 0.0
      %765 = vmatpush.msra.mxu0 0.0
      %766 = vmatpush.msra.mxu0 0.0
      %767 = vmatpush.msra.mxu0 0.0
      %768 = vmatpush.msra.mxu0 0.0
      %769 = vmatpush.msra.mxu0 0.0
      %770 = vmatpush.msra.mxu0 0.0
      %771 = vmatpush.msra.mxu0 0.0
      %772 = vmatpush.msra.mxu0 %v725
      %773 = vmatpush.msra.mxu0 %v724
      %774 = vmatmul.f32.gmra.mxu0 %v736
      %v775 = vpop.f32.mrf.mxu0
      %v776 = vadd.f32 %v756, %v775
      %777 = vdwg.mxu0
      %vm778 = vcmask 523264
      %v779 = vsel %vm778, %v776, 0.0
      %780 = vadd.xlane.f32.xlu0 %v779
      %v781 = vpop.xlane.xlu0 %780
      %v782 = vrot.slane %v781, 4
      %v783 = vadd.f32 %v781, %v782
      %v784 = vrot.slane %v783, 2
      %v785 = vadd.f32 %v783, %v784
      %v786 = vrot.slane %v785, 1
      %v787 = vadd.f32 %v785, %v786
      %s788 = vtos %v787
      %v789 = vrcp.pop 512.0
      %v790 = vmul.f32 512.0, %v789
      %v791 = vsub.f32 1.0, %v790
      %v792 = vmul.f32 %v789, %v791
      %v793 = vadd.f32 %v789, %v792
      %vm794 = vweird.f32 %v789
      %v795 = vsel %vm794, %v789, %v793
      %s796 = vtos %v795
      %s797 = smul.f32 %s788, %s796
      %v798 = vstv %s797
      %v799 = vsub.f32 %v776, %v798
      %v800 = vmul.f32 %v799, %v799
      %v801 = vsel %vm778, %v800, 0.0
      %802 = vadd.xlane.f32.xlu0 %v801
      %v803 = vpop.xlane.xlu0 %802
      %v804 = vrot.slane %v803, 4
      %v805 = vadd.f32 %v803, %v804
      %v806 = vrot.slane %v805, 2
      %v807 = vadd.f32 %v805, %v806
      %v808 = vrot.slane %v807, 1
      %v809 = vadd.f32 %v807, %v808
      %s810 = vtos %v809
      %v811 = vrcp.pop 512.0
      %v812 = vmul.f32 512.0, %v811
      %v813 = vsub.f32 1.0, %v812
      %v814 = vmul.f32 %v811, %v813
      %v815 = vadd.f32 %v811, %v814
      %vm816 = vweird.f32 %v811
      %v817 = vsel %vm816, %v811, %v815
      %s818 = vtos %v817
      %s819 = smul.f32 %s810, %s818
      %s820 = sadd.f32 %s819, 1e-05
      %v821 = vstv %s820
      %v822 = vrsqrt.pop %v821
      %v823 = vmul.f32 %v822, %v821
      %v824 = vmul.f32 %v823, %v822
      %v825 = vmul.f32 0.5, %v824
      %v826 = vsub.f32 1.5, %v825
      %v827 = vmul.f32 %v822, %v826
      %vm828 = vweird.f32 %v821
      %vm829 = vweird.f32 %v822
      %vm830 = vmor %vm828, %vm829
      %v831 = vsel %vm830, %v822, %v827
      %s832 = vtos %v831
      %v833 = vstv %s832
      %v834 = vmul.f32 %v799, %v833
      %835 = vset.pattern.permute.xlu0 1
      %836 = vperm.xlu0 %835, %v728
      %v837 = vpop.permute.xlu0 %836
      %v839 = vmul.f32 %v834, %v837
      %840 = vset.pattern.permute.xlu0 2
      %841 = vperm.xlu0 %840, %v728
      %v842 = vpop.permute.xlu0 %841
      %v844 = vadd.f32 %v839, %v842
      %v845 = vmax.f32 %v844, 0.0
      %v846 = vsel %vm778, %v845, 0.0
      %847 = vadd.xlane.f32.xlu0 %v846
      %v848 = vpop.xlane.xlu0 %847
      %v849 = vrcp.pop 64.0
      %v850 = vmul.f32 64.0, %v849
      %v851 = vsub.f32 1.0, %v850
      %v852 = vmul.f32 %v849, %v851
      %v853 = vadd.f32 %v849, %v852
      %vm854 = vweird.f32 %v849
      %v855 = vsel %vm854, %v849, %v853
      %v856 = vmul.f32 %v848, %v855
      %v857 = vld [vmem:[%s5] sm:$0xff]
      %858 = vrot.lane.b32.xlu0 %v728, 125
      %v859 = vpop.permute.xlu0 %858
      %vm861 = vcmask 64512
      %v863 = vsel %vm861, %v857, 0
      %865 = vmatpush.msra.mxu0 0.0
      %866 = vmatpush.msra.mxu0 0.0
      %867 = vmatpush.msra.mxu0 0.0
      %868 = vmatpush.msra.mxu0 0.0
      %869 = vmatpush.msra.mxu0 0.0
      %870 = vmatpush.msra.mxu0 0.0
      %871 = vmatpush.msra.mxu0 0.0
      %872 = vmatpush.msra.mxu0 0.0
      %873 = vmatpush.msra.mxu0 0.0
      %874 = vmatpush.msra.mxu0 0.0
      %875 = vmatpush.msra.mxu0 0.0
      %876 = vmatpush.msra.mxu0 0.0
      %877 = vmatpush.msra.mxu0 0.0
      %878 = vmatpush.msra.mxu0 0.0
      %879 = vmatpush.msra.mxu0 0.0
      %880 = vmatpush.msra.mxu0 %v856
      %881 = vmatmul.f32.gmra.mxu0 %v863
      %v882 = vpop.f32.mrf.mxu0
      %v883 = vadd.f32 %v859, %v882
      %884 = vdwg.mxu0
      %v885 = vxor.u32 %v883, 2147483648
      %v886 = vmul.f32 %v885, 1.442695
      %v887 = vpow.pop %v886
      %v888 = vadd.f32 %v887, 1.0
      %v889 = vrcp.pop %v888
      %v890 = vmul.f32 %v888, %v889
      %v891 = vsub.f32 1.0, %v890
      %v892 = vmul.f32 %v889, %v891
      %v893 = vadd.f32 %v889, %v892
      %vm894 = vweird.f32 %v888
      %vm895 = vweird.f32 %v889
      %vm896 = vmor %vm894, %vm895
      %v897 = vsel %vm896, %v889, %v893
      %v898 = vand.u32 2147483647, %v888
      %vm899 = vcmp.eq.f32.partialorder %v898, 8.507059e+37
      %v900 = vand.u32 %v888, 2147483648
      %v901 = vor.u32 1.1754944e-38, %v900
      %v902 = vsel %vm899, %v901, %v897
      %v903 = vmul.f32 1.0, %v902
      %905 = vset.pattern.permute.xlu0 0
      %906 = vperm.xlu0 %905, %v903
      %v907 = vpop.permute.xlu0 %906
      %v909 = vmul.f32 %v845, %v907
      %v910 = vld [vmem:[%s12] sm:$0xff]
      %v911 = vld [vmem:[%s12 + $0x8] sm:$0xff]
      %v912 = vld [vmem:[%s12 + $0x10] sm:$0xff]
      %v913 = vld [vmem:[%s12 + $0x18] sm:$0xff]
      %v914 = vld [vmem:[%s12 + $0x20] sm:$0xff]
      %v915 = vld [vmem:[%s12 + $0x28] sm:$0xff]
      %v916 = vld [vmem:[%s12 + $0x30] sm:$0xff]
      %v917 = vld [vmem:[%s12 + $0x38] sm:$0xff]
      %v918 = vld [vmem:[%s12 + $0x40] sm:$0xff]
      %v919 = vld [vmem:[%s12 + $0x48] sm:$0xff]
      %v920 = vld [vmem:[%s12 + $0x50] sm:$0xff]
      %v921 = vld [vmem:[%s12 + $0x58] sm:$0xff]
      %v922 = vld [vmem:[%s12 + $0x60] sm:$0xff]
      %v923 = vld [vmem:[%s12 + $0x68] sm:$0xff]
      %v924 = vld [vmem:[%s12 + $0x70] sm:$0xff]
      %v925 = vld [vmem:[%s12 + $0x78] sm:$0xff]
      %v927 = vsel %vm778, %v909, 0
      %929 = vmatpush.msra.mxu0 0.0
      %930 = vmatpush.msra.mxu0 0.0
      %931 = vmatpush.msra.mxu0 0.0
      %932 = vmatpush.msra.mxu0 0.0
      %933 = vmatpush.msra.mxu0 0.0
      %934 = vmatpush.msra.mxu0 0.0
      %935 = vmatpush.msra.mxu0 0.0
      %936 = vmatpush.msra.mxu0 0.0
      %937 = vmatpush.msra.mxu0 %v924
      %938 = vmatpush.msra.mxu0 %v922
      %939 = vmatpush.msra.mxu0 %v920
      %940 = vmatpush.msra.mxu0 %v918
      %941 = vmatpush.msra.mxu0 %v916
      %942 = vmatpush.msra.mxu0 %v914
      %943 = vmatpush.msra.mxu0 %v912
      %944 = vmatpush.msra.mxu0 %v910
      %945 = vmatmul.f32.gmra.mxu0 %v927
      %v946 = vpop.f32.mrf.mxu0
      %v947 = vadd.f32 0.0, %v946
      %948 = vdwg.mxu0
      %949 = vmatpush.msra.mxu0 0.0
      %950 = vmatpush.msra.mxu0 0.0
      %951 = vmatpush.msra.mxu0 0.0
      %952 = vmatpush.msra.mxu0 0.0
      %953 = vmatpush.msra.mxu0 0.0
      %954 = vmatpush.msra.mxu0 0.0
      %955 = vmatpush.msra.mxu0 0.0
      %956 = vmatpush.msra.mxu0 0.0
      %957 = vmatpush.msra.mxu0 %v925
      %958 = vmatpush.msra.mxu0 %v923
      %959 = vmatpush.msra.mxu0 %v921
      %960 = vmatpush.msra.mxu0 %v919
      %961 = vmatpush.msra.mxu0 %v917
      %962 = vmatpush.msra.mxu0 %v915
      %963 = vmatpush.msra.mxu0 %v913
      %964 = vmatpush.msra.mxu0 %v911
      %965 = vmatmul.f32.gmra.mxu0 %v927
      %v966 = vpop.f32.mrf.mxu0
      %v967 = vadd.f32 0.0, %v966
      %968 = vdwg.mxu0
      %v969 = vld [vmem:[%s693] sm:$0xff]
      %v970 = vld [vmem:[%s693 + $0x8] sm:$0xff]
      %v971 = vld [vmem:[%s693 + $0x10] sm:$0xff]
      %v972 = vld [vmem:[%s693 + $0x18] sm:$0xff]
      %v973 = vld [vmem:[%s693 + $0x20] sm:$0xff]
      %v974 = vld [vmem:[%s693 + $0x28] sm:$0xff]
      %v975 = vld [vmem:[%s693 + $0x30] sm:$0xff]
      %v976 = vld [vmem:[%s693 + $0x38] sm:$0xff]
      %v977 = vld [vmem:[%s693 + $0x40] sm:$0xff]
      %v978 = vld [vmem:[%s693 + $0x48] sm:$0xff]
      %v979 = vld [vmem:[%s693 + $0x50] sm:$0xff]
      %v980 = vld [vmem:[%s693 + $0x58] sm:$0xff]
      %v981 = vld [vmem:[%s693 + $0x60] sm:$0xff]
      %v982 = vld [vmem:[%s693 + $0x68] sm:$0xff]
      %v983 = vld [vmem:[%s693 + $0x70] sm:$0xff]
      %v984 = vld [vmem:[%s693 + $0x78] sm:$0xff]
      %v985 = vld [vmem:[%s693 + $0x80] sm:$0xff]
      %v986 = vld [vmem:[%s693 + $0x88] sm:$0xff]
      %v987 = vld [vmem:[%s693 + $0x90] sm:$0xff]
      %v988 = vld [vmem:[%s693 + $0x98] sm:$0xff]
      %v989 = vld [vmem:[%s693 + $0xa0] sm:$0xff]
      %v990 = vld [vmem:[%s693 + $0xa8] sm:$0xff]
      %v991 = vld [vmem:[%s693 + $0xb0] sm:$0xff]
      %v992 = vld [vmem:[%s693 + $0xb8] sm:$0xff]
      %v993 = vld [vmem:[%s693 + $0xc0] sm:$0xff]
      %v994 = vld [vmem:[%s693 + $0xc8] sm:$0xff]
      %v995 = vld [vmem:[%s693 + $0xd0] sm:$0xff]
      %v996 = vld [vmem:[%s693 + $0xd8] sm:$0xff]
      %v997 = vld [vmem:[%s693 + $0xe0] sm:$0xff]
      %v998 = vld [vmem:[%s693 + $0xe8] sm:$0xff]
      %v999 = vld [vmem:[%s693 + $0xf0] sm:$0xff]
      %v1000 = vld [vmem:[%s693 + $0xf8] sm:$0xff]
      %v1001 = vld [vmem:[%s693 + $0x100] sm:$0xff]
      %v1002 = vld [vmem:[%s693 + $0x108] sm:$0xff]
      %v1003 = vld [vmem:[%s693 + $0x110] sm:$0xff]
      %v1004 = vld [vmem:[%s693 + $0x118] sm:$0xff]
      %v1005 = vld [vmem:[%s6] sm:$0xff]
      %v1006 = vld [vmem:[%s6 + $0x8] sm:$0xff]
      %v1007 = vld [vmem:[%s6 + $0x10] sm:$0xff]
      %v1008 = vld [vmem:[%s7] sm:$0xff]
      %1010 = vset.pattern.permute.xlu0 0
      %1011 = vperm.xlu0 %1010, %v1008
      %v1012 = vpop.permute.xlu0 %1011
      %vm1014 = vcmask 261120
      %v1016 = vsel %vm1014, %v1007, 0
      %1018 = vmatpush.msra.mxu0 %v984
      %1019 = vmatpush.msra.mxu0 %v983
      %1020 = vmatpush.msra.mxu0 %v982
      %1021 = vmatpush.msra.mxu0 %v981
      %1022 = vmatpush.msra.mxu0 %v980
      %1023 = vmatpush.msra.mxu0 %v979
      %1024 = vmatpush.msra.mxu0 %v978
      %1025 = vmatpush.msra.mxu0 %v977
      %1026 = vmatpush.msra.mxu0 %v976
      %1027 = vmatpush.msra.mxu0 %v975
      %1028 = vmatpush.msra.mxu0 %v974
      %1029 = vmatpush.msra.mxu0 %v973
      %1030 = vmatpush.msra.mxu0 %v972
      %1031 = vmatpush.msra.mxu0 %v971
      %1032 = vmatpush.msra.mxu0 %v970
      %1033 = vmatpush.msra.mxu0 %v969
      %1034 = vmatmul.f32.gmra.mxu0 %v1005
      %v1035 = vpop.f32.mrf.mxu0
      %v1036 = vadd.f32 %v1012, %v1035
      %1037 = vdwg.mxu0
      %1038 = vmatpush.msra.mxu0 %v1000
      %1039 = vmatpush.msra.mxu0 %v999
      %1040 = vmatpush.msra.mxu0 %v998
      %1041 = vmatpush.msra.mxu0 %v997
      %1042 = vmatpush.msra.mxu0 %v996
      %1043 = vmatpush.msra.mxu0 %v995
      %1044 = vmatpush.msra.mxu0 %v994
      %1045 = vmatpush.msra.mxu0 %v993
      %1046 = vmatpush.msra.mxu0 %v992
      %1047 = vmatpush.msra.mxu0 %v991
      %1048 = vmatpush.msra.mxu0 %v990
      %1049 = vmatpush.msra.mxu0 %v989
      %1050 = vmatpush.msra.mxu0 %v988
      %1051 = vmatpush.msra.mxu0 %v987
      %1052 = vmatpush.msra.mxu0 %v986
      %1053 = vmatpush.msra.mxu0 %v985
      %1054 = vmatmul.f32.gmra.mxu0 %v1006
      %v1055 = vpop.f32.mrf.mxu0
      %v1056 = vadd.f32 %v1036, %v1055
      %1057 = vdwg.mxu0
      %1058 = vmatpush.msra.mxu0 0.0
      %1059 = vmatpush.msra.mxu0 0.0
      %1060 = vmatpush.msra.mxu0 0.0
      %1061 = vmatpush.msra.mxu0 0.0
      %1062 = vmatpush.msra.mxu0 0.0
      %1063 = vmatpush.msra.mxu0 0.0
      %1064 = vmatpush.msra.mxu0 0.0
      %1065 = vmatpush.msra.mxu0 0.0
      %1066 = vmatpush.msra.mxu0 0.0
      %1067 = vmatpush.msra.mxu0 0.0
      %1068 = vmatpush.msra.mxu0 0.0
      %1069 = vmatpush.msra.mxu0 0.0
      %1070 = vmatpush.msra.mxu0 %v1004
      %1071 = vmatpush.msra.mxu0 %v1003
      %1072 = vmatpush.msra.mxu0 %v1002
      %1073 = vmatpush.msra.mxu0 %v1001
      %1074 = vmatmul.f32.gmra.mxu0 %v1016
      %v1075 = vpop.f32.mrf.mxu0
      %v1076 = vadd.f32 %v1056, %v1075
      %1077 = vdwg.mxu0
      %v1078 = vsel %vm734, %v1076, 0.0
      %1079 = vadd.xlane.f32.xlu0 %v1078
      %v1080 = vpop.xlane.xlu0 %1079
      %v1081 = vrot.slane %v1080, 4
      %v1082 = vadd.f32 %v1080, %v1081
      %v1083 = vrot.slane %v1082, 2
      %v1084 = vadd.f32 %v1082, %v1083
      %v1085 = vrot.slane %v1084, 1
      %v1086 = vadd.f32 %v1084, %v1085
      %s1087 = vtos %v1086
      %v1088 = vrcp.pop 128.0
      %v1089 = vmul.f32 128.0, %v1088
      %v1090 = vsub.f32 1.0, %v1089
      %v1091 = vmul.f32 %v1088, %v1090
      %v1092 = vadd.f32 %v1088, %v1091
      %vm1093 = vweird.f32 %v1088
      %v1094 = vsel %vm1093, %v1088, %v1092
      %s1095 = vtos %v1094
      %s1096 = smul.f32 %s1087, %s1095
      %v1097 = vstv %s1096
      %v1098 = vsub.f32 %v1076, %v1097
      %v1099 = vmul.f32 %v1098, %v1098
      %v1100 = vsel %vm734, %v1099, 0.0
      %1101 = vadd.xlane.f32.xlu0 %v1100
      %v1102 = vpop.xlane.xlu0 %1101
      %v1103 = vrot.slane %v1102, 4
      %v1104 = vadd.f32 %v1102, %v1103
      %v1105 = vrot.slane %v1104, 2
      %v1106 = vadd.f32 %v1104, %v1105
      %v1107 = vrot.slane %v1106, 1
      %v1108 = vadd.f32 %v1106, %v1107
      %s1109 = vtos %v1108
      %v1110 = vrcp.pop 128.0
      %v1111 = vmul.f32 128.0, %v1110
      %v1112 = vsub.f32 1.0, %v1111
      %v1113 = vmul.f32 %v1110, %v1112
      %v1114 = vadd.f32 %v1110, %v1113
      %vm1115 = vweird.f32 %v1110
      %v1116 = vsel %vm1115, %v1110, %v1114
      %s1117 = vtos %v1116
      %s1118 = smul.f32 %s1109, %s1117
      %s1119 = sadd.f32 %s1118, 1e-05
      %v1120 = vstv %s1119
      %v1121 = vrsqrt.pop %v1120
      %v1122 = vmul.f32 %v1121, %v1120
      %v1123 = vmul.f32 %v1122, %v1121
      %v1124 = vmul.f32 0.5, %v1123
      %v1125 = vsub.f32 1.5, %v1124
      %v1126 = vmul.f32 %v1121, %v1125
      %vm1127 = vweird.f32 %v1120
      %vm1128 = vweird.f32 %v1121
      %vm1129 = vmor %vm1127, %vm1128
      %v1130 = vsel %vm1129, %v1121, %v1126
      %s1131 = vtos %v1130
      %v1132 = vstv %s1131
      %v1133 = vmul.f32 %v1098, %v1132
      %1134 = vset.pattern.permute.xlu0 1
      %1135 = vperm.xlu0 %1134, %v1008
      %v1136 = vpop.permute.xlu0 %1135
      %v1138 = vmul.f32 %v1133, %v1136
      %1139 = vset.pattern.permute.xlu0 2
      %1140 = vperm.xlu0 %1139, %v1008
      %v1141 = vpop.permute.xlu0 %1140
      %v1143 = vadd.f32 %v1138, %v1141
      %v1144 = vmax.f32 %v1143, 0.0
      %v1145 = vsel %vm734, %v1144, 0.0
      %1146 = vadd.xlane.f32.xlu0 %v1145
      %v1147 = vpop.xlane.xlu0 %1146
      %v1148 = vrcp.pop 16.0
      %v1149 = vmul.f32 16.0, %v1148
      %v1150 = vsub.f32 1.0, %v1149
      %v1151 = vmul.f32 %v1148, %v1150
      %v1152 = vadd.f32 %v1148, %v1151
      %vm1153 = vweird.f32 %v1148
      %v1154 = vsel %vm1153, %v1148, %v1152
      %v1155 = vmul.f32 %v1147, %v1154
      %v1156 = vld [vmem:[%s8] sm:$0xff]
      %1157 = vrot.lane.b32.xlu0 %v1008, 125
      %v1158 = vpop.permute.xlu0 %1157
      %v1161 = vsel %vm861, %v1156, 0
      %1163 = vmatpush.msra.mxu0 0.0
      %1164 = vmatpush.msra.mxu0 0.0
      %1165 = vmatpush.msra.mxu0 0.0
      %1166 = vmatpush.msra.mxu0 0.0
      %1167 = vmatpush.msra.mxu0 0.0
      %1168 = vmatpush.msra.mxu0 0.0
      %1169 = vmatpush.msra.mxu0 0.0
      %1170 = vmatpush.msra.mxu0 0.0
      %1171 = vmatpush.msra.mxu0 0.0
      %1172 = vmatpush.msra.mxu0 0.0
      %1173 = vmatpush.msra.mxu0 0.0
      %1174 = vmatpush.msra.mxu0 0.0
      %1175 = vmatpush.msra.mxu0 0.0
      %1176 = vmatpush.msra.mxu0 0.0
      %1177 = vmatpush.msra.mxu0 0.0
      %1178 = vmatpush.msra.mxu0 %v1155
      %1179 = vmatmul.f32.gmra.mxu0 %v1161
      %v1180 = vpop.f32.mrf.mxu0
      %v1181 = vadd.f32 %v1158, %v1180
      %1182 = vdwg.mxu0
      %v1183 = vxor.u32 %v1181, 2147483648
      %v1184 = vmul.f32 %v1183, 1.442695
      %v1185 = vpow.pop %v1184
      %v1186 = vadd.f32 %v1185, 1.0
      %v1187 = vrcp.pop %v1186
      %v1188 = vmul.f32 %v1186, %v1187
      %v1189 = vsub.f32 1.0, %v1188
      %v1190 = vmul.f32 %v1187, %v1189
      %v1191 = vadd.f32 %v1187, %v1190
      %vm1192 = vweird.f32 %v1186
      %vm1193 = vweird.f32 %v1187
      %vm1194 = vmor %vm1192, %vm1193
      %v1195 = vsel %vm1194, %v1187, %v1191
      %v1196 = vand.u32 2147483647, %v1186
      %vm1197 = vcmp.eq.f32.partialorder %v1196, 8.507059e+37
      %v1198 = vand.u32 %v1186, 2147483648
      %v1199 = vor.u32 1.1754944e-38, %v1198
      %v1200 = vsel %vm1197, %v1199, %v1195
      %v1201 = vmul.f32 1.0, %v1200
      %1203 = vset.pattern.permute.xlu0 0
      %1204 = vperm.xlu0 %1203, %v1201
      %v1205 = vpop.permute.xlu0 %1204
      %v1207 = vmul.f32 %v1144, %v1205
      %v1208 = vld [vmem:[%s13] sm:$0xff]
      %v1209 = vld [vmem:[%s13 + $0x8] sm:$0xff]
      %v1210 = vld [vmem:[%s13 + $0x10] sm:$0xff]
      %v1211 = vld [vmem:[%s13 + $0x18] sm:$0xff]
      %v1213 = vsel %vm734, %v1207, 0
      %1215 = vmatpush.msra.mxu0 0.0
      %1216 = vmatpush.msra.mxu0 0.0
      %1217 = vmatpush.msra.mxu0 0.0
      %1218 = vmatpush.msra.mxu0 0.0
      %1219 = vmatpush.msra.mxu0 0.0
      %1220 = vmatpush.msra.mxu0 0.0
      %1221 = vmatpush.msra.mxu0 0.0
      %1222 = vmatpush.msra.mxu0 0.0
      %1223 = vmatpush.msra.mxu0 0.0
      %1224 = vmatpush.msra.mxu0 0.0
      %1225 = vmatpush.msra.mxu0 0.0
      %1226 = vmatpush.msra.mxu0 0.0
      %1227 = vmatpush.msra.mxu0 0.0
      %1228 = vmatpush.msra.mxu0 0.0
      %1229 = vmatpush.msra.mxu0 %v1210
      %1230 = vmatpush.msra.mxu0 %v1208
      %1231 = vmatmul.f32.gmra.mxu0 %v1213
      %v1232 = vpop.f32.mrf.mxu0
      %v1233 = vadd.f32 0.0, %v1232
      %1234 = vdwg.mxu0
      %1235 = vmatpush.msra.mxu0 0.0
      %1236 = vmatpush.msra.mxu0 0.0
      %1237 = vmatpush.msra.mxu0 0.0
      %1238 = vmatpush.msra.mxu0 0.0
      %1239 = vmatpush.msra.mxu0 0.0
      %1240 = vmatpush.msra.mxu0 0.0
      %1241 = vmatpush.msra.mxu0 0.0
      %1242 = vmatpush.msra.mxu0 0.0
      %1243 = vmatpush.msra.mxu0 0.0
      %1244 = vmatpush.msra.mxu0 0.0
      %1245 = vmatpush.msra.mxu0 0.0
      %1246 = vmatpush.msra.mxu0 0.0
      %1247 = vmatpush.msra.mxu0 0.0
      %1248 = vmatpush.msra.mxu0 0.0
      %1249 = vmatpush.msra.mxu0 %v1211
      %1250 = vmatpush.msra.mxu0 %v1209
      %1251 = vmatmul.f32.gmra.mxu0 %v1213
      %v1252 = vpop.f32.mrf.mxu0
      %v1253 = vadd.f32 0.0, %v1252
      %1254 = vdwg.mxu0
      %v1255 = vld [vmem:[%s698] sm:$0xff]
      %v1256 = vld [vmem:[%s698 + $0x8] sm:$0xff]
      %v1257 = vld [vmem:[%s698 + $0x10] sm:$0xff]
      %v1258 = vld [vmem:[%s698 + $0x18] sm:$0xff]
      %v1259 = vld [vmem:[%s698 + $0x20] sm:$0xff]
      %v1260 = vld [vmem:[%s698 + $0x28] sm:$0xff]
      %v1261 = vld [vmem:[%s698 + $0x30] sm:$0xff]
      %v1262 = vld [vmem:[%s698 + $0x38] sm:$0xff]
      %v1263 = vld [vmem:[%s698 + $0x40] sm:$0xff]
      %v1264 = vld [vmem:[%s698 + $0x48] sm:$0xff]
      %v1265 = vld [vmem:[%s698 + $0x50] sm:$0xff]
      %v1266 = vld [vmem:[%s698 + $0x58] sm:$0xff]
      %v1267 = vld [vmem:[%s698 + $0x60] sm:$0xff]
      %v1268 = vld [vmem:[%s698 + $0x68] sm:$0xff]
      %v1269 = vld [vmem:[%s698 + $0x70] sm:$0xff]
      %v1270 = vld [vmem:[%s698 + $0x78] sm:$0xff]
      %v1271 = vld [vmem:[%s698 + $0x80] sm:$0xff]
      %v1272 = vld [vmem:[%s698 + $0x88] sm:$0xff]
      %v1273 = vld [vmem:[%s698 + $0x90] sm:$0xff]
      %v1274 = vld [vmem:[%s698 + $0x98] sm:$0xff]
      %v1275 = vld [vmem:[%s698 + $0xa0] sm:$0xff]
      %v1276 = vld [vmem:[%s698 + $0xa8] sm:$0xff]
      %v1277 = vld [vmem:[%s698 + $0xb0] sm:$0xff]
      %v1278 = vld [vmem:[%s698 + $0xb8] sm:$0xff]
      %v1279 = vld [vmem:[%s698 + $0xc0] sm:$0xff]
      %v1280 = vld [vmem:[%s698 + $0xc8] sm:$0xff]
      %v1281 = vld [vmem:[%s698 + $0xd0] sm:$0xff]
      %v1282 = vld [vmem:[%s698 + $0xd8] sm:$0xff]
      %v1283 = vld [vmem:[%s698 + $0xe0] sm:$0xff]
      %v1284 = vld [vmem:[%s698 + $0xe8] sm:$0xff]
      %v1285 = vld [vmem:[%s698 + $0xf0] sm:$0xff]
      %v1286 = vld [vmem:[%s698 + $0xf8] sm:$0xff]
      %v1287 = vld [vmem:[%s698 + $0x100] sm:$0xff]
      %v1288 = vld [vmem:[%s698 + $0x108] sm:$0xff]
      %v1289 = vld [vmem:[%s698 + $0x110] sm:$0xff]
      %v1290 = vld [vmem:[%s698 + $0x118] sm:$0xff]
      %v1291 = vld [vmem:[%s9] sm:$0xff]
      %v1292 = vld [vmem:[%s9 + $0x8] sm:$0xff]
      %v1293 = vld [vmem:[%s9 + $0x10] sm:$0xff]
      %v1294 = vld [vmem:[%s10] sm:$0xff]
      %1296 = vset.pattern.permute.xlu0 0
      %1297 = vperm.xlu0 %1296, %v1294
      %v1298 = vpop.permute.xlu0 %1297
      %v1301 = vsel %vm1014, %v1293, 0
      %1303 = vmatpush.msra.mxu0 %v1270
      %1304 = vmatpush.msra.mxu0 %v1269
      %1305 = vmatpush.msra.mxu0 %v1268
      %1306 = vmatpush.msra.mxu0 %v1267
      %1307 = vmatpush.msra.mxu0 %v1266
      %1308 = vmatpush.msra.mxu0 %v1265
      %1309 = vmatpush.msra.mxu0 %v1264
      %1310 = vmatpush.msra.mxu0 %v1263
      %1311 = vmatpush.msra.mxu0 %v1262
      %1312 = vmatpush.msra.mxu0 %v1261
      %1313 = vmatpush.msra.mxu0 %v1260
      %1314 = vmatpush.msra.mxu0 %v1259
      %1315 = vmatpush.msra.mxu0 %v1258
      %1316 = vmatpush.msra.mxu0 %v1257
      %1317 = vmatpush.msra.mxu0 %v1256
      %1318 = vmatpush.msra.mxu0 %v1255
      %1319 = vmatmul.f32.gmra.mxu0 %v1291
      %v1320 = vpop.f32.mrf.mxu0
      %v1321 = vadd.f32 %v1298, %v1320
      %1322 = vdwg.mxu0
      %1323 = vmatpush.msra.mxu0 %v1286
      %1324 = vmatpush.msra.mxu0 %v1285
      %1325 = vmatpush.msra.mxu0 %v1284
      %1326 = vmatpush.msra.mxu0 %v1283
      %1327 = vmatpush.msra.mxu0 %v1282
      %1328 = vmatpush.msra.mxu0 %v1281
      %1329 = vmatpush.msra.mxu0 %v1280
      %1330 = vmatpush.msra.mxu0 %v1279
      %1331 = vmatpush.msra.mxu0 %v1278
      %1332 = vmatpush.msra.mxu0 %v1277
      %1333 = vmatpush.msra.mxu0 %v1276
      %1334 = vmatpush.msra.mxu0 %v1275
      %1335 = vmatpush.msra.mxu0 %v1274
      %1336 = vmatpush.msra.mxu0 %v1273
      %1337 = vmatpush.msra.mxu0 %v1272
      %1338 = vmatpush.msra.mxu0 %v1271
      %1339 = vmatmul.f32.gmra.mxu0 %v1292
      %v1340 = vpop.f32.mrf.mxu0
      %v1341 = vadd.f32 %v1321, %v1340
      %1342 = vdwg.mxu0
      %1343 = vmatpush.msra.mxu0 0.0
      %1344 = vmatpush.msra.mxu0 0.0
      %1345 = vmatpush.msra.mxu0 0.0
      %1346 = vmatpush.msra.mxu0 0.0
      %1347 = vmatpush.msra.mxu0 0.0
      %1348 = vmatpush.msra.mxu0 0.0
      %1349 = vmatpush.msra.mxu0 0.0
      %1350 = vmatpush.msra.mxu0 0.0
      %1351 = vmatpush.msra.mxu0 0.0
      %1352 = vmatpush.msra.mxu0 0.0
      %1353 = vmatpush.msra.mxu0 0.0
      %1354 = vmatpush.msra.mxu0 0.0
      %1355 = vmatpush.msra.mxu0 %v1290
      %1356 = vmatpush.msra.mxu0 %v1289
      %1357 = vmatpush.msra.mxu0 %v1288
      %1358 = vmatpush.msra.mxu0 %v1287
      %1359 = vmatmul.f32.gmra.mxu0 %v1301
      %v1360 = vpop.f32.mrf.mxu0
      %v1361 = vadd.f32 %v1341, %v1360
      %1362 = vdwg.mxu0
      %vm1363 = vcmask 31744
      %v1364 = vsel %vm1363, %v1361, 0.0
      %1365 = vadd.xlane.f32.xlu0 %v1364
      %v1366 = vpop.xlane.xlu0 %1365
      %v1367 = vrot.slane %v1366, 4
      %v1368 = vadd.f32 %v1366, %v1367
      %v1369 = vrot.slane %v1368, 2
      %v1370 = vadd.f32 %v1368, %v1369
      %v1371 = vrot.slane %v1370, 1
      %v1372 = vadd.f32 %v1370, %v1371
      %s1373 = vtos %v1372
      %v1374 = vrcp.pop 32.0
      %v1375 = vmul.f32 32.0, %v1374
      %v1376 = vsub.f32 1.0, %v1375
      %v1377 = vmul.f32 %v1374, %v1376
      %v1378 = vadd.f32 %v1374, %v1377
      %vm1379 = vweird.f32 %v1374
      %v1380 = vsel %vm1379, %v1374, %v1378
      %s1381 = vtos %v1380
      %s1382 = smul.f32 %s1373, %s1381
      %v1383 = vstv %s1382
      %v1384 = vsub.f32 %v1361, %v1383
      %v1385 = vmul.f32 %v1384, %v1384
      %v1386 = vsel %vm1363, %v1385, 0.0
      %1387 = vadd.xlane.f32.xlu0 %v1386
      %v1388 = vpop.xlane.xlu0 %1387
      %v1389 = vrot.slane %v1388, 4
      %v1390 = vadd.f32 %v1388, %v1389
      %v1391 = vrot.slane %v1390, 2
      %v1392 = vadd.f32 %v1390, %v1391
      %v1393 = vrot.slane %v1392, 1
      %v1394 = vadd.f32 %v1392, %v1393
      %s1395 = vtos %v1394
      %v1396 = vrcp.pop 32.0
      %v1397 = vmul.f32 32.0, %v1396
      %v1398 = vsub.f32 1.0, %v1397
      %v1399 = vmul.f32 %v1396, %v1398
      %v1400 = vadd.f32 %v1396, %v1399
      %vm1401 = vweird.f32 %v1396
      %v1402 = vsel %vm1401, %v1396, %v1400
      %s1403 = vtos %v1402
      %s1404 = smul.f32 %s1395, %s1403
      %s1405 = sadd.f32 %s1404, 1e-05
      %v1406 = vstv %s1405
      %v1407 = vrsqrt.pop %v1406
      %v1408 = vmul.f32 %v1407, %v1406
      %v1409 = vmul.f32 %v1408, %v1407
      %v1410 = vmul.f32 0.5, %v1409
      %v1411 = vsub.f32 1.5, %v1410
      %v1412 = vmul.f32 %v1407, %v1411
      %vm1413 = vweird.f32 %v1406
      %vm1414 = vweird.f32 %v1407
      %vm1415 = vmor %vm1413, %vm1414
      %v1416 = vsel %vm1415, %v1407, %v1412
      %s1417 = vtos %v1416
      %v1418 = vstv %s1417
      %v1419 = vmul.f32 %v1384, %v1418
      %1420 = vset.pattern.permute.xlu0 1
      %1421 = vperm.xlu0 %1420, %v1294
      %v1422 = vpop.permute.xlu0 %1421
      %v1424 = vmul.f32 %v1419, %v1422
      %1425 = vset.pattern.permute.xlu0 2
      %1426 = vperm.xlu0 %1425, %v1294
      %v1427 = vpop.permute.xlu0 %1426
      %v1429 = vadd.f32 %v1424, %v1427
      %v1430 = vmax.f32 %v1429, 0.0
      %v1431 = vsel %vm1363, %v1430, 0.0
      %1432 = vadd.xlane.f32.xlu0 %v1431
      %v1433 = vpop.xlane.xlu0 %1432
      %v1434 = vrcp.pop 4.0
      %v1435 = vmul.f32 4.0, %v1434
      %v1436 = vsub.f32 1.0, %v1435
      %v1437 = vmul.f32 %v1434, %v1436
      %v1438 = vadd.f32 %v1434, %v1437
      %vm1439 = vweird.f32 %v1434
      %v1440 = vsel %vm1439, %v1434, %v1438
      %v1441 = vmul.f32 %v1433, %v1440
      %v1442 = vld [vmem:[%s11] sm:$0xff]
      %1443 = vrot.lane.b32.xlu0 %v1294, 125
      %v1444 = vpop.permute.xlu0 %1443
      %v1447 = vsel %vm861, %v1442, 0
      %1449 = vmatpush.msra.mxu0 0.0
      %1450 = vmatpush.msra.mxu0 0.0
      %1451 = vmatpush.msra.mxu0 0.0
      %1452 = vmatpush.msra.mxu0 0.0
      %1453 = vmatpush.msra.mxu0 0.0
      %1454 = vmatpush.msra.mxu0 0.0
      %1455 = vmatpush.msra.mxu0 0.0
      %1456 = vmatpush.msra.mxu0 0.0
      %1457 = vmatpush.msra.mxu0 0.0
      %1458 = vmatpush.msra.mxu0 0.0
      %1459 = vmatpush.msra.mxu0 0.0
      %1460 = vmatpush.msra.mxu0 0.0
      %1461 = vmatpush.msra.mxu0 0.0
      %1462 = vmatpush.msra.mxu0 0.0
      %1463 = vmatpush.msra.mxu0 0.0
      %1464 = vmatpush.msra.mxu0 %v1441
      %1465 = vmatmul.f32.gmra.mxu0 %v1447
      %v1466 = vpop.f32.mrf.mxu0
      %v1467 = vadd.f32 %v1444, %v1466
      %1468 = vdwg.mxu0
      %v1469 = vxor.u32 %v1467, 2147483648
      %v1470 = vmul.f32 %v1469, 1.442695
      %v1471 = vpow.pop %v1470
      %v1472 = vadd.f32 %v1471, 1.0
      %v1473 = vrcp.pop %v1472
      %v1474 = vmul.f32 %v1472, %v1473
      %v1475 = vsub.f32 1.0, %v1474
      %v1476 = vmul.f32 %v1473, %v1475
      %v1477 = vadd.f32 %v1473, %v1476
      %vm1478 = vweird.f32 %v1472
      %vm1479 = vweird.f32 %v1473
      %vm1480 = vmor %vm1478, %vm1479
      %v1481 = vsel %vm1480, %v1473, %v1477
      %v1482 = vand.u32 2147483647, %v1472
      %vm1483 = vcmp.eq.f32.partialorder %v1482, 8.507059e+37
      %v1484 = vand.u32 %v1472, 2147483648
      %v1485 = vor.u32 1.1754944e-38, %v1484
      %v1486 = vsel %vm1483, %v1485, %v1481
      %v1487 = vmul.f32 1.0, %v1486
      %1489 = vset.pattern.permute.xlu0 0
      %1490 = vperm.xlu0 %1489, %v1487
      %v1491 = vpop.permute.xlu0 %1490
      %v1493 = vmul.f32 %v1430, %v1491
      %v1494 = vld [vmem:[%s14] sm:$0xff]
      %1496 = vst [vmem:[#allocation1] ss:$2 sm:$0xff] %v1494
      %v1497 = vld.sshfl [vmem:[#allocation1] sm:$0xff pattern:$0x75316420]
      %v1498 = vld.sshfl [vmem:[#allocation1 + $0x8] sm:$0xff pattern:$0x75316420]
      %v1500 = vsel %vm1363, %v1493, 0
      %vm1502 = vcmask 1043456
      %v1503 = vsel %vm1502, %v1497, 0
      %v1505 = vsel %vm1502, %v1498, 0
      %1507 = vmatpush.msra.mxu0 0.0
      %1508 = vmatpush.msra.mxu0 0.0
      %1509 = vmatpush.msra.mxu0 0.0
      %1510 = vmatpush.msra.mxu0 0.0
      %1511 = vmatpush.msra.mxu0 0.0
      %1512 = vmatpush.msra.mxu0 0.0
      %1513 = vmatpush.msra.mxu0 0.0
      %1514 = vmatpush.msra.mxu0 0.0
      %1515 = vmatpush.msra.mxu0 0.0
      %1516 = vmatpush.msra.mxu0 0.0
      %1517 = vmatpush.msra.mxu0 0.0
      %1518 = vmatpush.msra.mxu0 0.0
      %1519 = vmatpush.msra.mxu0 0.0
      %1520 = vmatpush.msra.mxu0 0.0
      %1521 = vmatpush.msra.mxu0 0.0
      %1522 = vmatpush.msra.mxu0 %v1503
      %1523 = vmatmul.f32.gmra.mxu0 %v1500
      %v1524 = vpop.f32.mrf.mxu0
      %v1525 = vadd.f32 0.0, %v1524
      %1526 = vdwg.mxu0
      %1527 = vmatpush.msra.mxu0 0.0
      %1528 = vmatpush.msra.mxu0 0.0
      %1529 = vmatpush.msra.mxu0 0.0
      %1530 = vmatpush.msra.mxu0 0.0
      %1531 = vmatpush.msra.mxu0 0.0
      %1532 = vmatpush.msra.mxu0 0.0
      %1533 = vmatpush.msra.mxu0 0.0
      %1534 = vmatpush.msra.mxu0 0.0
      %1535 = vmatpush.msra.mxu0 0.0
      %1536 = vmatpush.msra.mxu0 0.0
      %1537 = vmatpush.msra.mxu0 0.0
      %1538 = vmatpush.msra.mxu0 0.0
      %1539 = vmatpush.msra.mxu0 0.0
      %1540 = vmatpush.msra.mxu0 0.0
      %1541 = vmatpush.msra.mxu0 0.0
      %1542 = vmatpush.msra.mxu0 %v1505
      %1543 = vmatmul.f32.gmra.mxu0 %v1500
      %v1544 = vpop.f32.mrf.mxu0
      %v1545 = vadd.f32 0.0, %v1544
      %1546 = vdwg.mxu0
      %v1547 = vld [vmem:[%s15] sm:$0xff]
      %v1548 = vld [vmem:[%s15 + $0x8] sm:$0xff]
      %v1549 = vld [vmem:[%s15 + $0x10] sm:$0xff]
      %v1550 = vld [vmem:[%s15 + $0x18] sm:$0xff]
      %v1551 = vld [vmem:[%s15 + $0x20] sm:$0xff]
      %v1552 = vld [vmem:[%s15 + $0x28] sm:$0xff]
      %v1553 = vld [vmem:[%s15 + $0x30] sm:$0xff]
      %v1554 = vld [vmem:[%s15 + $0x38] sm:$0xff]
      %v1555 = vld [vmem:[%s15 + $0x40] sm:$0xff]
      %v1556 = vld [vmem:[%s15 + $0x48] sm:$0xff]
      %v1557 = vld [vmem:[%s15 + $0x50] sm:$0xff]
      %v1558 = vld [vmem:[%s15 + $0x58] sm:$0xff]
      %v1559 = vld [vmem:[%s15 + $0x60] sm:$0xff]
      %v1560 = vld [vmem:[%s15 + $0x68] sm:$0xff]
      %v1561 = vld [vmem:[%s15 + $0x70] sm:$0xff]
      %v1562 = vld [vmem:[%s15 + $0x78] sm:$0xff]
      %v1563 = vld [vmem:[%s15 + $0x80] sm:$0xff]
      %v1564 = vld [vmem:[%s15 + $0x88] sm:$0xff]
      %v1565 = vld [vmem:[%s15 + $0x90] sm:$0xff]
      %v1566 = vld [vmem:[%s15 + $0x98] sm:$0xff]
      %v1567 = vld [vmem:[%s15 + $0xa0] sm:$0xff]
      %v1568 = vld [vmem:[%s15 + $0xa8] sm:$0xff]
      %v1569 = vld [vmem:[%s15 + $0xb0] sm:$0xff]
      %v1570 = vld [vmem:[%s15 + $0xb8] sm:$0xff]
      %v1571 = vld [vmem:[%s15 + $0xc0] sm:$0xff]
      %v1572 = vld [vmem:[%s15 + $0xc8] sm:$0xff]
      %v1573 = vld [vmem:[%s15 + $0xd0] sm:$0xff]
      %v1574 = vld [vmem:[%s15 + $0xd8] sm:$0xff]
      %v1575 = vld [vmem:[%s15 + $0xe0] sm:$0xff]
      %v1576 = vld [vmem:[%s15 + $0xe8] sm:$0xff]
      %v1577 = vld [vmem:[%s15 + $0xf0] sm:$0xff]
      %v1578 = vld [vmem:[%s15 + $0xf8] sm:$0xff]
      %v1579 = vld [vmem:[%s15 + $0x100] sm:$0xff]
      %v1580 = vld [vmem:[%s15 + $0x108] sm:$0xff]
      %v1581 = vld [vmem:[%s15 + $0x110] sm:$0xff]
      %v1582 = vld [vmem:[%s15 + $0x118] sm:$0xff]
      %v1583 = vld [vmem:[%s15 + $0x120] sm:$0xff]
      %v1584 = vld [vmem:[%s15 + $0x128] sm:$0xff]
      %v1585 = vld [vmem:[%s15 + $0x130] sm:$0xff]
      %v1586 = vld [vmem:[%s15 + $0x138] sm:$0xff]
      %v1587 = vld [vmem:[%s15 + $0x140] sm:$0xff]
      %v1588 = vld [vmem:[%s15 + $0x148] sm:$0xff]
      %v1589 = vld [vmem:[%s15 + $0x150] sm:$0xff]
      %v1590 = vld [vmem:[%s15 + $0x158] sm:$0xff]
      %v1591 = vld [vmem:[%s15 + $0x160] sm:$0xff]
      %v1592 = vld [vmem:[%s15 + $0x168] sm:$0xff]
      %v1593 = vld [vmem:[%s15 + $0x170] sm:$0xff]
      %v1594 = vld [vmem:[%s15 + $0x178] sm:$0xff]
      %v1595 = vld [vmem:[%s15 + $0x180] sm:$0xff]
      %v1596 = vld [vmem:[%s15 + $0x188] sm:$0xff]
      %v1597 = vld [vmem:[%s15 + $0x190] sm:$0xff]
      %v1598 = vld [vmem:[%s15 + $0x198] sm:$0xff]
      %v1599 = vld [vmem:[%s15 + $0x1a0] sm:$0xff]
      %v1600 = vld [vmem:[%s15 + $0x1a8] sm:$0xff]
      %v1601 = vld [vmem:[%s15 + $0x1b0] sm:$0xff]
      %v1602 = vld [vmem:[%s15 + $0x1b8] sm:$0xff]
      %v1603 = vld [vmem:[%s15 + $0x1c0] sm:$0xff]
      %v1604 = vld [vmem:[%s15 + $0x1c8] sm:$0xff]
      %v1605 = vld [vmem:[%s15 + $0x1d0] sm:$0xff]
      %v1606 = vld [vmem:[%s15 + $0x1d8] sm:$0xff]
      %v1607 = vld [vmem:[%s15 + $0x1e0] sm:$0xff]
      %v1608 = vld [vmem:[%s15 + $0x1e8] sm:$0xff]
      %v1609 = vld [vmem:[%s15 + $0x1f0] sm:$0xff]
      %v1610 = vld [vmem:[%s15 + $0x1f8] sm:$0xff]
      %1611 = vmatpush.msra.mxu0 %v1577
      %1612 = vmatpush.msra.mxu0 %v1575
      %1613 = vmatpush.msra.mxu0 %v1573
      %1614 = vmatpush.msra.mxu0 %v1571
      %1615 = vmatpush.msra.mxu0 %v1569
      %1616 = vmatpush.msra.mxu0 %v1567
      %1617 = vmatpush.msra.mxu0 %v1565
      %1618 = vmatpush.msra.mxu0 %v1563
      %1619 = vmatpush.msra.mxu0 %v1561
      %1620 = vmatpush.msra.mxu0 %v1559
      %1621 = vmatpush.msra.mxu0 %v1557
      %1622 = vmatpush.msra.mxu0 %v1555
      %1623 = vmatpush.msra.mxu0 %v1553
      %1624 = vmatpush.msra.mxu0 %v1551
      %1625 = vmatpush.msra.mxu0 %v1549
      %1626 = vmatpush.msra.mxu0 %v1547
      %1627 = vmatmul.f32.gmra.mxu0 %v947
      %v1628 = vpop.f32.mrf.mxu0
      %v1629 = vadd.f32 0.0, %v1628
      %1630 = vmatmul.f32.gmra.mxu0 %v1233
      %v1631 = vpop.f32.mrf.mxu0
      %v1632 = vadd.f32 0.0, %v1631
      %1633 = vmatmul.f32.gmra.mxu0 %v1525
      %v1634 = vpop.f32.mrf.mxu0
      %v1635 = vadd.f32 0.0, %v1634
      %1636 = vdwg.mxu0
      %1637 = vmatpush.msra.mxu0 %v1609
      %1638 = vmatpush.msra.mxu0 %v1607
      %1639 = vmatpush.msra.mxu0 %v1605
      %1640 = vmatpush.msra.mxu0 %v1603
      %1641 = vmatpush.msra.mxu0 %v1601
      %1642 = vmatpush.msra.mxu0 %v1599
      %1643 = vmatpush.msra.mxu0 %v1597
      %1644 = vmatpush.msra.mxu0 %v1595
      %1645 = vmatpush.msra.mxu0 %v1593
      %1646 = vmatpush.msra.mxu0 %v1591
      %1647 = vmatpush.msra.mxu0 %v1589
      %1648 = vmatpush.msra.mxu0 %v1587
      %1649 = vmatpush.msra.mxu0 %v1585
      %1650 = vmatpush.msra.mxu0 %v1583
      %1651 = vmatpush.msra.mxu0 %v1581
      %1652 = vmatpush.msra.mxu0 %v1579
      %1653 = vmatmul.f32.gmra.mxu0 %v967
      %v1654 = vpop.f32.mrf.mxu0
      %v1655 = vadd.f32 %v1629, %v1654
      %1656 = vmatmul.f32.gmra.mxu0 %v1253
      %v1657 = vpop.f32.mrf.mxu0
      %v1658 = vadd.f32 %v1632, %v1657
      %1659 = vmatmul.f32.gmra.mxu0 %v1545
      %v1660 = vpop.f32.mrf.mxu0
      %v1661 = vadd.f32 %v1635, %v1660
      %1662 = vdwg.mxu0
      %1663 = vmatpush.msra.mxu0 %v1578
      %1664 = vmatpush.msra.mxu0 %v1576
      %1665 = vmatpush.msra.mxu0 %v1574
      %1666 = vmatpush.msra.mxu0 %v1572
      %1667 = vmatpush.msra.mxu0 %v1570
      %1668 = vmatpush.msra.mxu0 %v1568
      %1669 = vmatpush.msra.mxu0 %v1566
      %1670 = vmatpush.msra.mxu0 %v1564
      %1671 = vmatpush.msra.mxu0 %v1562
      %1672 = vmatpush.msra.mxu0 %v1560
      %1673 = vmatpush.msra.mxu0 %v1558
      %1674 = vmatpush.msra.mxu0 %v1556
      %1675 = vmatpush.msra.mxu0 %v1554
      %1676 = vmatpush.msra.mxu0 %v1552
      %1677 = vmatpush.msra.mxu0 %v1550
      %1678 = vmatpush.msra.mxu0 %v1548
      %1679 = vmatmul.f32.gmra.mxu0 %v947
      %v1680 = vpop.f32.mrf.mxu0
      %v1681 = vadd.f32 0.0, %v1680
      %1682 = vmatmul.f32.gmra.mxu0 %v1233
      %v1683 = vpop.f32.mrf.mxu0
      %v1684 = vadd.f32 0.0, %v1683
      %1685 = vmatmul.f32.gmra.mxu0 %v1525
      %v1686 = vpop.f32.mrf.mxu0
      %v1687 = vadd.f32 0.0, %v1686
      %1688 = vdwg.mxu0
      %1689 = vmatpush.msra.mxu0 %v1610
      %1690 = vmatpush.msra.mxu0 %v1608
      %1691 = vmatpush.msra.mxu0 %v1606
      %1692 = vmatpush.msra.mxu0 %v1604
      %1693 = vmatpush.msra.mxu0 %v1602
      %1694 = vmatpush.msra.mxu0 %v1600
      %1695 = vmatpush.msra.mxu0 %v1598
      %1696 = vmatpush.msra.mxu0 %v1596
      %1697 = vmatpush.msra.mxu0 %v1594
      %1698 = vmatpush.msra.mxu0 %v1592
      %1699 = vmatpush.msra.mxu0 %v1590
      %1700 = vmatpush.msra.mxu0 %v1588
      %1701 = vmatpush.msra.mxu0 %v1586
      %1702 = vmatpush.msra.mxu0 %v1584
      %1703 = vmatpush.msra.mxu0 %v1582
      %1704 = vmatpush.msra.mxu0 %v1580
      %1705 = vmatmul.f32.gmra.mxu0 %v967
      %v1706 = vpop.f32.mrf.mxu0
      %v1707 = vadd.f32 %v1681, %v1706
      %1708 = vmatmul.f32.gmra.mxu0 %v1253
      %v1709 = vpop.f32.mrf.mxu0
      %v1710 = vadd.f32 %v1684, %v1709
      %1711 = vmatmul.f32.gmra.mxu0 %v1545
      %v1712 = vpop.f32.mrf.mxu0
      %v1713 = vadd.f32 %v1687, %v1712
      %1714 = vdwg.mxu0
      %s1715 = scalar_lea.vmem %s15, 512
      %v1716 = vld [vmem:[%s1715] sm:$0xff]
      %v1717 = vld [vmem:[%s1715 + $0x8] sm:$0xff]
      %v1718 = vld [vmem:[%s1715 + $0x10] sm:$0xff]
      %v1719 = vld [vmem:[%s1715 + $0x18] sm:$0xff]
      %v1720 = vld [vmem:[%s1715 + $0x20] sm:$0xff]
      %v1721 = vld [vmem:[%s1715 + $0x28] sm:$0xff]
      %v1722 = vld [vmem:[%s1715 + $0x30] sm:$0xff]
      %v1723 = vld [vmem:[%s1715 + $0x38] sm:$0xff]
      %v1724 = vld [vmem:[%s1715 + $0x40] sm:$0xff]
      %v1725 = vld [vmem:[%s1715 + $0x48] sm:$0xff]
      %v1726 = vld [vmem:[%s1715 + $0x50] sm:$0xff]
      %v1727 = vld [vmem:[%s1715 + $0x58] sm:$0xff]
      %v1728 = vld [vmem:[%s1715 + $0x60] sm:$0xff]
      %v1729 = vld [vmem:[%s1715 + $0x68] sm:$0xff]
      %v1730 = vld [vmem:[%s1715 + $0x70] sm:$0xff]
      %v1731 = vld [vmem:[%s1715 + $0x78] sm:$0xff]
      %v1732 = vld [vmem:[%s1715 + $0x80] sm:$0xff]
      %v1733 = vld [vmem:[%s1715 + $0x88] sm:$0xff]
      %v1734 = vld [vmem:[%s1715 + $0x90] sm:$0xff]
      %v1735 = vld [vmem:[%s1715 + $0x98] sm:$0xff]
      %v1736 = vld [vmem:[%s1715 + $0xa0] sm:$0xff]
      %v1737 = vld [vmem:[%s1715 + $0xa8] sm:$0xff]
      %v1738 = vld [vmem:[%s1715 + $0xb0] sm:$0xff]
      %v1739 = vld [vmem:[%s1715 + $0xb8] sm:$0xff]
      %v1740 = vld [vmem:[%s1715 + $0xc0] sm:$0xff]
      %v1741 = vld [vmem:[%s1715 + $0xc8] sm:$0xff]
      %v1742 = vld [vmem:[%s1715 + $0xd0] sm:$0xff]
      %v1743 = vld [vmem:[%s1715 + $0xd8] sm:$0xff]
      %v1744 = vld [vmem:[%s1715 + $0xe0] sm:$0xff]
      %v1745 = vld [vmem:[%s1715 + $0xe8] sm:$0xff]
      %v1746 = vld [vmem:[%s1715 + $0xf0] sm:$0xff]
      %v1747 = vld [vmem:[%s1715 + $0xf8] sm:$0xff]
      %v1748 = vld [vmem:[%s1715 + $0x100] sm:$0xff]
      %v1749 = vld [vmem:[%s1715 + $0x108] sm:$0xff]
      %v1750 = vld [vmem:[%s1715 + $0x110] sm:$0xff]
      %v1751 = vld [vmem:[%s1715 + $0x118] sm:$0xff]
      %v1752 = vld [vmem:[%s1715 + $0x120] sm:$0xff]
      %v1753 = vld [vmem:[%s1715 + $0x128] sm:$0xff]
      %v1754 = vld [vmem:[%s1715 + $0x130] sm:$0xff]
      %v1755 = vld [vmem:[%s1715 + $0x138] sm:$0xff]
      %v1756 = vld [vmem:[%s1715 + $0x140] sm:$0xff]
      %v1757 = vld [vmem:[%s1715 + $0x148] sm:$0xff]
      %v1758 = vld [vmem:[%s1715 + $0x150] sm:$0xff]
      %v1759 = vld [vmem:[%s1715 + $0x158] sm:$0xff]
      %v1760 = vld [vmem:[%s1715 + $0x160] sm:$0xff]
      %v1761 = vld [vmem:[%s1715 + $0x168] sm:$0xff]
      %v1762 = vld [vmem:[%s1715 + $0x170] sm:$0xff]
      %v1763 = vld [vmem:[%s1715 + $0x178] sm:$0xff]
      %v1764 = vld [vmem:[%s1715 + $0x180] sm:$0xff]
      %v1765 = vld [vmem:[%s1715 + $0x188] sm:$0xff]
      %v1766 = vld [vmem:[%s1715 + $0x190] sm:$0xff]
      %v1767 = vld [vmem:[%s1715 + $0x198] sm:$0xff]
      %v1768 = vld [vmem:[%s1715 + $0x1a0] sm:$0xff]
      %v1769 = vld [vmem:[%s1715 + $0x1a8] sm:$0xff]
      %v1770 = vld [vmem:[%s1715 + $0x1b0] sm:$0xff]
      %v1771 = vld [vmem:[%s1715 + $0x1b8] sm:$0xff]
      %v1772 = vld [vmem:[%s1715 + $0x1c0] sm:$0xff]
      %v1773 = vld [vmem:[%s1715 + $0x1c8] sm:$0xff]
      %v1774 = vld [vmem:[%s1715 + $0x1d0] sm:$0xff]
      %v1775 = vld [vmem:[%s1715 + $0x1d8] sm:$0xff]
      %v1776 = vld [vmem:[%s1715 + $0x1e0] sm:$0xff]
      %v1777 = vld [vmem:[%s1715 + $0x1e8] sm:$0xff]
      %v1778 = vld [vmem:[%s1715 + $0x1f0] sm:$0xff]
      %v1779 = vld [vmem:[%s1715 + $0x1f8] sm:$0xff]
      %1780 = vmatpush.msra.mxu0 %v1746
      %1781 = vmatpush.msra.mxu0 %v1744
      %1782 = vmatpush.msra.mxu0 %v1742
      %1783 = vmatpush.msra.mxu0 %v1740
      %1784 = vmatpush.msra.mxu0 %v1738
      %1785 = vmatpush.msra.mxu0 %v1736
      %1786 = vmatpush.msra.mxu0 %v1734
      %1787 = vmatpush.msra.mxu0 %v1732
      %1788 = vmatpush.msra.mxu0 %v1730
      %1789 = vmatpush.msra.mxu0 %v1728
      %1790 = vmatpush.msra.mxu0 %v1726
      %1791 = vmatpush.msra.mxu0 %v1724
      %1792 = vmatpush.msra.mxu0 %v1722
      %1793 = vmatpush.msra.mxu0 %v1720
      %1794 = vmatpush.msra.mxu0 %v1718
      %1795 = vmatpush.msra.mxu0 %v1716
      %1796 = vmatmul.f32.gmra.mxu0 %v947
      %v1797 = vpop.f32.mrf.mxu0
      %v1798 = vadd.f32 0.0, %v1797
      %1799 = vmatmul.f32.gmra.mxu0 %v1233
      %v1800 = vpop.f32.mrf.mxu0
      %v1801 = vadd.f32 0.0, %v1800
      %1802 = vmatmul.f32.gmra.mxu0 %v1525
      %v1803 = vpop.f32.mrf.mxu0
      %v1804 = vadd.f32 0.0, %v1803
      %1805 = vdwg.mxu0
      %1806 = vmatpush.msra.mxu0 %v1778
      %1807 = vmatpush.msra.mxu0 %v1776
      %1808 = vmatpush.msra.mxu0 %v1774
      %1809 = vmatpush.msra.mxu0 %v1772
      %1810 = vmatpush.msra.mxu0 %v1770
      %1811 = vmatpush.msra.mxu0 %v1768
      %1812 = vmatpush.msra.mxu0 %v1766
      %1813 = vmatpush.msra.mxu0 %v1764
      %1814 = vmatpush.msra.mxu0 %v1762
      %1815 = vmatpush.msra.mxu0 %v1760
      %1816 = vmatpush.msra.mxu0 %v1758
      %1817 = vmatpush.msra.mxu0 %v1756
      %1818 = vmatpush.msra.mxu0 %v1754
      %1819 = vmatpush.msra.mxu0 %v1752
      %1820 = vmatpush.msra.mxu0 %v1750
      %1821 = vmatpush.msra.mxu0 %v1748
      %1822 = vmatmul.f32.gmra.mxu0 %v967
      %v1823 = vpop.f32.mrf.mxu0
      %v1824 = vadd.f32 %v1798, %v1823
      %1825 = vmatmul.f32.gmra.mxu0 %v1253
      %v1826 = vpop.f32.mrf.mxu0
      %v1827 = vadd.f32 %v1801, %v1826
      %1828 = vmatmul.f32.gmra.mxu0 %v1545
      %v1829 = vpop.f32.mrf.mxu0
      %v1830 = vadd.f32 %v1804, %v1829
      %1831 = vdwg.mxu0
      %1832 = vmatpush.msra.mxu0 %v1747
      %1833 = vmatpush.msra.mxu0 %v1745
      %1834 = vmatpush.msra.mxu0 %v1743
      %1835 = vmatpush.msra.mxu0 %v1741
      %1836 = vmatpush.msra.mxu0 %v1739
      %1837 = vmatpush.msra.mxu0 %v1737
      %1838 = vmatpush.msra.mxu0 %v1735
      %1839 = vmatpush.msra.mxu0 %v1733
      %1840 = vmatpush.msra.mxu0 %v1731
      %1841 = vmatpush.msra.mxu0 %v1729
      %1842 = vmatpush.msra.mxu0 %v1727
      %1843 = vmatpush.msra.mxu0 %v1725
      %1844 = vmatpush.msra.mxu0 %v1723
      %1845 = vmatpush.msra.mxu0 %v1721
      %1846 = vmatpush.msra.mxu0 %v1719
      %1847 = vmatpush.msra.mxu0 %v1717
      %1848 = vmatmul.f32.gmra.mxu0 %v947
      %v1849 = vpop.f32.mrf.mxu0
      %v1850 = vadd.f32 0.0, %v1849
      %1851 = vmatmul.f32.gmra.mxu0 %v1233
      %v1852 = vpop.f32.mrf.mxu0
      %v1853 = vadd.f32 0.0, %v1852
      %1854 = vmatmul.f32.gmra.mxu0 %v1525
      %v1855 = vpop.f32.mrf.mxu0
      %v1856 = vadd.f32 0.0, %v1855
      %1857 = vdwg.mxu0
      %1858 = vmatpush.msra.mxu0 %v1779
      %1859 = vmatpush.msra.mxu0 %v1777
      %1860 = vmatpush.msra.mxu0 %v1775
      %1861 = vmatpush.msra.mxu0 %v1773
      %1862 = vmatpush.msra.mxu0 %v1771
      %1863 = vmatpush.msra.mxu0 %v1769
      %1864 = vmatpush.msra.mxu0 %v1767
      %1865 = vmatpush.msra.mxu0 %v1765
      %1866 = vmatpush.msra.mxu0 %v1763
      %1867 = vmatpush.msra.mxu0 %v1761
      %1868 = vmatpush.msra.mxu0 %v1759
      %1869 = vmatpush.msra.mxu0 %v1757
      %1870 = vmatpush.msra.mxu0 %v1755
      %1871 = vmatpush.msra.mxu0 %v1753
      %1872 = vmatpush.msra.mxu0 %v1751
      %1873 = vmatpush.msra.mxu0 %v1749
      %1874 = vmatmul.f32.gmra.mxu0 %v967
      %v1875 = vpop.f32.mrf.mxu0
      %v1876 = vadd.f32 %v1850, %v1875
      %1877 = vmatmul.f32.gmra.mxu0 %v1253
      %v1878 = vpop.f32.mrf.mxu0
      %v1879 = vadd.f32 %v1853, %v1878
      %1880 = vmatmul.f32.gmra.mxu0 %v1545
      %v1881 = vpop.f32.mrf.mxu0
      %v1882 = vadd.f32 %v1856, %v1881
      %1883 = vdwg.mxu0
      %s1884 = scalar_lea.vmem %s15, 1024
      %v1885 = vld [vmem:[%s1884] sm:$0xff]
      %v1886 = vld [vmem:[%s1884 + $0x8] sm:$0xff]
      %v1887 = vld [vmem:[%s1884 + $0x10] sm:$0xff]
      %v1888 = vld [vmem:[%s1884 + $0x18] sm:$0xff]
      %v1889 = vld [vmem:[%s1884 + $0x20] sm:$0xff]
      %v1890 = vld [vmem:[%s1884 + $0x28] sm:$0xff]
      %v1891 = vld [vmem:[%s1884 + $0x30] sm:$0xff]
      %v1892 = vld [vmem:[%s1884 + $0x38] sm:$0xff]
      %v1893 = vld [vmem:[%s1884 + $0x40] sm:$0xff]
      %v1894 = vld [vmem:[%s1884 + $0x48] sm:$0xff]
      %v1895 = vld [vmem:[%s1884 + $0x50] sm:$0xff]
      %v1896 = vld [vmem:[%s1884 + $0x58] sm:$0xff]
      %v1897 = vld [vmem:[%s1884 + $0x60] sm:$0xff]
      %v1898 = vld [vmem:[%s1884 + $0x68] sm:$0xff]
      %v1899 = vld [vmem:[%s1884 + $0x70] sm:$0xff]
      %v1900 = vld [vmem:[%s1884 + $0x78] sm:$0xff]
      %v1901 = vld [vmem:[%s1884 + $0x80] sm:$0xff]
      %v1902 = vld [vmem:[%s1884 + $0x88] sm:$0xff]
      %v1903 = vld [vmem:[%s1884 + $0x90] sm:$0xff]
      %v1904 = vld [vmem:[%s1884 + $0x98] sm:$0xff]
      %v1905 = vld [vmem:[%s1884 + $0xa0] sm:$0xff]
      %v1906 = vld [vmem:[%s1884 + $0xa8] sm:$0xff]
      %v1907 = vld [vmem:[%s1884 + $0xb0] sm:$0xff]
      %v1908 = vld [vmem:[%s1884 + $0xb8] sm:$0xff]
      %v1909 = vld [vmem:[%s1884 + $0xc0] sm:$0xff]
      %v1910 = vld [vmem:[%s1884 + $0xc8] sm:$0xff]
      %v1911 = vld [vmem:[%s1884 + $0xd0] sm:$0xff]
      %v1912 = vld [vmem:[%s1884 + $0xd8] sm:$0xff]
      %v1913 = vld [vmem:[%s1884 + $0xe0] sm:$0xff]
      %v1914 = vld [vmem:[%s1884 + $0xe8] sm:$0xff]
      %v1915 = vld [vmem:[%s1884 + $0xf0] sm:$0xff]
      %v1916 = vld [vmem:[%s1884 + $0xf8] sm:$0xff]
      %v1917 = vld [vmem:[%s1884 + $0x100] sm:$0xff]
      %v1918 = vld [vmem:[%s1884 + $0x108] sm:$0xff]
      %v1919 = vld [vmem:[%s1884 + $0x110] sm:$0xff]
      %v1920 = vld [vmem:[%s1884 + $0x118] sm:$0xff]
      %v1921 = vld [vmem:[%s1884 + $0x120] sm:$0xff]
      %v1922 = vld [vmem:[%s1884 + $0x128] sm:$0xff]
      %v1923 = vld [vmem:[%s1884 + $0x130] sm:$0xff]
      %v1924 = vld [vmem:[%s1884 + $0x138] sm:$0xff]
      %v1925 = vld [vmem:[%s1884 + $0x140] sm:$0xff]
      %v1926 = vld [vmem:[%s1884 + $0x148] sm:$0xff]
      %v1927 = vld [vmem:[%s1884 + $0x150] sm:$0xff]
      %v1928 = vld [vmem:[%s1884 + $0x158] sm:$0xff]
      %v1929 = vld [vmem:[%s1884 + $0x160] sm:$0xff]
      %v1930 = vld [vmem:[%s1884 + $0x168] sm:$0xff]
      %v1931 = vld [vmem:[%s1884 + $0x170] sm:$0xff]
      %v1932 = vld [vmem:[%s1884 + $0x178] sm:$0xff]
      %v1933 = vld [vmem:[%s1884 + $0x180] sm:$0xff]
      %v1934 = vld [vmem:[%s1884 + $0x188] sm:$0xff]
      %v1935 = vld [vmem:[%s1884 + $0x190] sm:$0xff]
      %v1936 = vld [vmem:[%s1884 + $0x198] sm:$0xff]
      %v1937 = vld [vmem:[%s1884 + $0x1a0] sm:$0xff]
      %v1938 = vld [vmem:[%s1884 + $0x1a8] sm:$0xff]
      %v1939 = vld [vmem:[%s1884 + $0x1b0] sm:$0xff]
      %v1940 = vld [vmem:[%s1884 + $0x1b8] sm:$0xff]
      %v1941 = vld [vmem:[%s1884 + $0x1c0] sm:$0xff]
      %v1942 = vld [vmem:[%s1884 + $0x1c8] sm:$0xff]
      %v1943 = vld [vmem:[%s1884 + $0x1d0] sm:$0xff]
      %v1944 = vld [vmem:[%s1884 + $0x1d8] sm:$0xff]
      %v1945 = vld [vmem:[%s1884 + $0x1e0] sm:$0xff]
      %v1946 = vld [vmem:[%s1884 + $0x1e8] sm:$0xff]
      %v1947 = vld [vmem:[%s1884 + $0x1f0] sm:$0xff]
      %v1948 = vld [vmem:[%s1884 + $0x1f8] sm:$0xff]
      %1949 = vmatpush.msra.mxu0 %v1915
      %1950 = vmatpush.msra.mxu0 %v1913
      %1951 = vmatpush.msra.mxu0 %v1911
      %1952 = vmatpush.msra.mxu0 %v1909
      %1953 = vmatpush.msra.mxu0 %v1907
      %1954 = vmatpush.msra.mxu0 %v1905
      %1955 = vmatpush.msra.mxu0 %v1903
      %1956 = vmatpush.msra.mxu0 %v1901
      %1957 = vmatpush.msra.mxu0 %v1899
      %1958 = vmatpush.msra.mxu0 %v1897
      %1959 = vmatpush.msra.mxu0 %v1895
      %1960 = vmatpush.msra.mxu0 %v1893
      %1961 = vmatpush.msra.mxu0 %v1891
      %1962 = vmatpush.msra.mxu0 %v1889
      %1963 = vmatpush.msra.mxu0 %v1887
      %1964 = vmatpush.msra.mxu0 %v1885
      %1965 = vmatmul.f32.gmra.mxu0 %v947
      %v1966 = vpop.f32.mrf.mxu0
      %v1967 = vadd.f32 0.0, %v1966
      %1968 = vmatmul.f32.gmra.mxu0 %v1233
      %v1969 = vpop.f32.mrf.mxu0
      %v1970 = vadd.f32 0.0, %v1969
      %1971 = vmatmul.f32.gmra.mxu0 %v1525
      %v1972 = vpop.f32.mrf.mxu0
      %v1973 = vadd.f32 0.0, %v1972
      %1974 = vdwg.mxu0
      %1975 = vmatpush.msra.mxu0 %v1947
      %1976 = vmatpush.msra.mxu0 %v1945
      %1977 = vmatpush.msra.mxu0 %v1943
      %1978 = vmatpush.msra.mxu0 %v1941
      %1979 = vmatpush.msra.mxu0 %v1939
      %1980 = vmatpush.msra.mxu0 %v1937
      %1981 = vmatpush.msra.mxu0 %v1935
      %1982 = vmatpush.msra.mxu0 %v1933
      %1983 = vmatpush.msra.mxu0 %v1931
      %1984 = vmatpush.msra.mxu0 %v1929
      %1985 = vmatpush.msra.mxu0 %v1927
      %1986 = vmatpush.msra.mxu0 %v1925
      %1987 = vmatpush.msra.mxu0 %v1923
      %1988 = vmatpush.msra.mxu0 %v1921
      %1989 = vmatpush.msra.mxu0 %v1919
      %1990 = vmatpush.msra.mxu0 %v1917
      %1991 = vmatmul.f32.gmra.mxu0 %v967
      %v1992 = vpop.f32.mrf.mxu0
      %v1993 = vadd.f32 %v1967, %v1992
      %1994 = vmatmul.f32.gmra.mxu0 %v1253
      %v1995 = vpop.f32.mrf.mxu0
      %v1996 = vadd.f32 %v1970, %v1995
      %1997 = vmatmul.f32.gmra.mxu0 %v1545
      %v1998 = vpop.f32.mrf.mxu0
      %v1999 = vadd.f32 %v1973, %v1998
      %2000 = vdwg.mxu0
      %2001 = vmatpush.msra.mxu0 %v1916
      %2002 = vmatpush.msra.mxu0 %v1914
      %2003 = vmatpush.msra.mxu0 %v1912
      %2004 = vmatpush.msra.mxu0 %v1910
      %2005 = vmatpush.msra.mxu0 %v1908
      %2006 = vmatpush.msra.mxu0 %v1906
      %2007 = vmatpush.msra.mxu0 %v1904
      %2008 = vmatpush.msra.mxu0 %v1902
      %2009 = vmatpush.msra.mxu0 %v1900
      %2010 = vmatpush.msra.mxu0 %v1898
      %2011 = vmatpush.msra.mxu0 %v1896
      %2012 = vmatpush.msra.mxu0 %v1894
      %2013 = vmatpush.msra.mxu0 %v1892
      %2014 = vmatpush.msra.mxu0 %v1890
      %2015 = vmatpush.msra.mxu0 %v1888
      %2016 = vmatpush.msra.mxu0 %v1886
      %2017 = vmatmul.f32.gmra.mxu0 %v947
      %v2018 = vpop.f32.mrf.mxu0
      %v2019 = vadd.f32 0.0, %v2018
      %2020 = vmatmul.f32.gmra.mxu0 %v1233
      %v2021 = vpop.f32.mrf.mxu0
      %v2022 = vadd.f32 0.0, %v2021
      %2023 = vmatmul.f32.gmra.mxu0 %v1525
      %v2024 = vpop.f32.mrf.mxu0
      %v2025 = vadd.f32 0.0, %v2024
      %2026 = vdwg.mxu0
      %2027 = vmatpush.msra.mxu0 %v1948
      %2028 = vmatpush.msra.mxu0 %v1946
      %2029 = vmatpush.msra.mxu0 %v1944
      %2030 = vmatpush.msra.mxu0 %v1942
      %2031 = vmatpush.msra.mxu0 %v1940
      %2032 = vmatpush.msra.mxu0 %v1938
      %2033 = vmatpush.msra.mxu0 %v1936
      %2034 = vmatpush.msra.mxu0 %v1934
      %2035 = vmatpush.msra.mxu0 %v1932
      %2036 = vmatpush.msra.mxu0 %v1930
      %2037 = vmatpush.msra.mxu0 %v1928
      %2038 = vmatpush.msra.mxu0 %v1926
      %2039 = vmatpush.msra.mxu0 %v1924
      %2040 = vmatpush.msra.mxu0 %v1922
      %2041 = vmatpush.msra.mxu0 %v1920
      %2042 = vmatpush.msra.mxu0 %v1918
      %2043 = vmatmul.f32.gmra.mxu0 %v967
      %v2044 = vpop.f32.mrf.mxu0
      %v2045 = vadd.f32 %v2019, %v2044
      %2046 = vmatmul.f32.gmra.mxu0 %v1253
      %v2047 = vpop.f32.mrf.mxu0
      %v2048 = vadd.f32 %v2022, %v2047
      %2049 = vmatmul.f32.gmra.mxu0 %v1545
      %v2050 = vpop.f32.mrf.mxu0
      %v2051 = vadd.f32 %v2025, %v2050
      %2052 = vdwg.mxu0
      %s2053 = scalar_lea.vmem %s15, 1536
      %v2054 = vld [vmem:[%s2053] sm:$0xff]
      %v2055 = vld [vmem:[%s2053 + $0x8] sm:$0xff]
      %v2056 = vld [vmem:[%s2053 + $0x10] sm:$0xff]
      %v2057 = vld [vmem:[%s2053 + $0x18] sm:$0xff]
      %v2058 = vld [vmem:[%s2053 + $0x20] sm:$0xff]
      %v2059 = vld [vmem:[%s2053 + $0x28] sm:$0xff]
      %v2060 = vld [vmem:[%s2053 + $0x30] sm:$0xff]
      %v2061 = vld [vmem:[%s2053 + $0x38] sm:$0xff]
      %v2062 = vld [vmem:[%s2053 + $0x40] sm:$0xff]
      %v2063 = vld [vmem:[%s2053 + $0x48] sm:$0xff]
      %v2064 = vld [vmem:[%s2053 + $0x50] sm:$0xff]
      %v2065 = vld [vmem:[%s2053 + $0x58] sm:$0xff]
      %v2066 = vld [vmem:[%s2053 + $0x60] sm:$0xff]
      %v2067 = vld [vmem:[%s2053 + $0x68] sm:$0xff]
      %v2068 = vld [vmem:[%s2053 + $0x70] sm:$0xff]
      %v2069 = vld [vmem:[%s2053 + $0x78] sm:$0xff]
      %v2070 = vld [vmem:[%s2053 + $0x80] sm:$0xff]
      %v2071 = vld [vmem:[%s2053 + $0x88] sm:$0xff]
      %v2072 = vld [vmem:[%s2053 + $0x90] sm:$0xff]
      %v2073 = vld [vmem:[%s2053 + $0x98] sm:$0xff]
      %v2074 = vld [vmem:[%s2053 + $0xa0] sm:$0xff]
      %v2075 = vld [vmem:[%s2053 + $0xa8] sm:$0xff]
      %v2076 = vld [vmem:[%s2053 + $0xb0] sm:$0xff]
      %v2077 = vld [vmem:[%s2053 + $0xb8] sm:$0xff]
      %v2078 = vld [vmem:[%s2053 + $0xc0] sm:$0xff]
      %v2079 = vld [vmem:[%s2053 + $0xc8] sm:$0xff]
      %v2080 = vld [vmem:[%s2053 + $0xd0] sm:$0xff]
      %v2081 = vld [vmem:[%s2053 + $0xd8] sm:$0xff]
      %v2082 = vld [vmem:[%s2053 + $0xe0] sm:$0xff]
      %v2083 = vld [vmem:[%s2053 + $0xe8] sm:$0xff]
      %v2084 = vld [vmem:[%s2053 + $0xf0] sm:$0xff]
      %v2085 = vld [vmem:[%s2053 + $0xf8] sm:$0xff]
      %v2086 = vld [vmem:[%s2053 + $0x100] sm:$0xff]
      %v2087 = vld [vmem:[%s2053 + $0x108] sm:$0xff]
      %v2088 = vld [vmem:[%s2053 + $0x110] sm:$0xff]
      %v2089 = vld [vmem:[%s2053 + $0x118] sm:$0xff]
      %v2090 = vld [vmem:[%s2053 + $0x120] sm:$0xff]
      %v2091 = vld [vmem:[%s2053 + $0x128] sm:$0xff]
      %v2092 = vld [vmem:[%s2053 + $0x130] sm:$0xff]
      %v2093 = vld [vmem:[%s2053 + $0x138] sm:$0xff]
      %v2094 = vld [vmem:[%s2053 + $0x140] sm:$0xff]
      %v2095 = vld [vmem:[%s2053 + $0x148] sm:$0xff]
      %v2096 = vld [vmem:[%s2053 + $0x150] sm:$0xff]
      %v2097 = vld [vmem:[%s2053 + $0x158] sm:$0xff]
      %v2098 = vld [vmem:[%s2053 + $0x160] sm:$0xff]
      %v2099 = vld [vmem:[%s2053 + $0x168] sm:$0xff]
      %v2100 = vld [vmem:[%s2053 + $0x170] sm:$0xff]
      %v2101 = vld [vmem:[%s2053 + $0x178] sm:$0xff]
      %v2102 = vld [vmem:[%s2053 + $0x180] sm:$0xff]
      %v2103 = vld [vmem:[%s2053 + $0x188] sm:$0xff]
      %v2104 = vld [vmem:[%s2053 + $0x190] sm:$0xff]
      %v2105 = vld [vmem:[%s2053 + $0x198] sm:$0xff]
      %v2106 = vld [vmem:[%s2053 + $0x1a0] sm:$0xff]
      %v2107 = vld [vmem:[%s2053 + $0x1a8] sm:$0xff]
      %v2108 = vld [vmem:[%s2053 + $0x1b0] sm:$0xff]
      %v2109 = vld [vmem:[%s2053 + $0x1b8] sm:$0xff]
      %v2110 = vld [vmem:[%s2053 + $0x1c0] sm:$0xff]
      %v2111 = vld [vmem:[%s2053 + $0x1c8] sm:$0xff]
      %v2112 = vld [vmem:[%s2053 + $0x1d0] sm:$0xff]
      %v2113 = vld [vmem:[%s2053 + $0x1d8] sm:$0xff]
      %v2114 = vld [vmem:[%s2053 + $0x1e0] sm:$0xff]
      %v2115 = vld [vmem:[%s2053 + $0x1e8] sm:$0xff]
      %v2116 = vld [vmem:[%s2053 + $0x1f0] sm:$0xff]
      %v2117 = vld [vmem:[%s2053 + $0x1f8] sm:$0xff]
      %2118 = vmatpush.msra.mxu0 %v2084
      %2119 = vmatpush.msra.mxu0 %v2082
      %2120 = vmatpush.msra.mxu0 %v2080
      %2121 = vmatpush.msra.mxu0 %v2078
      %2122 = vmatpush.msra.mxu0 %v2076
      %2123 = vmatpush.msra.mxu0 %v2074
      %2124 = vmatpush.msra.mxu0 %v2072
      %2125 = vmatpush.msra.mxu0 %v2070
      %2126 = vmatpush.msra.mxu0 %v2068
      %2127 = vmatpush.msra.mxu0 %v2066
      %2128 = vmatpush.msra.mxu0 %v2064
      %2129 = vmatpush.msra.mxu0 %v2062
      %2130 = vmatpush.msra.mxu0 %v2060
      %2131 = vmatpush.msra.mxu0 %v2058
      %2132 = vmatpush.msra.mxu0 %v2056
      %2133 = vmatpush.msra.mxu0 %v2054
      %2134 = vmatmul.f32.gmra.mxu0 %v947
      %v2135 = vpop.f32.mrf.mxu0
      %v2136 = vadd.f32 0.0, %v2135
      %2137 = vmatmul.f32.gmra.mxu0 %v1233
      %v2138 = vpop.f32.mrf.mxu0
      %v2139 = vadd.f32 0.0, %v2138
      %2140 = vmatmul.f32.gmra.mxu0 %v1525
      %v2141 = vpop.f32.mrf.mxu0
      %v2142 = vadd.f32 0.0, %v2141
      %2143 = vdwg.mxu0
      %2144 = vmatpush.msra.mxu0 %v2116
      %2145 = vmatpush.msra.mxu0 %v2114
      %2146 = vmatpush.msra.mxu0 %v2112
      %2147 = vmatpush.msra.mxu0 %v2110
      %2148 = vmatpush.msra.mxu0 %v2108
      %2149 = vmatpush.msra.mxu0 %v2106
      %2150 = vmatpush.msra.mxu0 %v2104
      %2151 = vmatpush.msra.mxu0 %v2102
      %2152 = vmatpush.msra.mxu0 %v2100
      %2153 = vmatpush.msra.mxu0 %v2098
      %2154 = vmatpush.msra.mxu0 %v2096
      %2155 = vmatpush.msra.mxu0 %v2094
      %2156 = vmatpush.msra.mxu0 %v2092
      %2157 = vmatpush.msra.mxu0 %v2090
      %2158 = vmatpush.msra.mxu0 %v2088
      %2159 = vmatpush.msra.mxu0 %v2086
      %2160 = vmatmul.f32.gmra.mxu0 %v967
      %v2161 = vpop.f32.mrf.mxu0
      %v2162 = vadd.f32 %v2136, %v2161
      %2163 = vmatmul.f32.gmra.mxu0 %v1253
      %v2164 = vpop.f32.mrf.mxu0
      %v2165 = vadd.f32 %v2139, %v2164
      %2166 = vmatmul.f32.gmra.mxu0 %v1545
      %v2167 = vpop.f32.mrf.mxu0
      %v2168 = vadd.f32 %v2142, %v2167
      %2169 = vdwg.mxu0
      %2170 = vmatpush.msra.mxu0 %v2085
      %2171 = vmatpush.msra.mxu0 %v2083
      %2172 = vmatpush.msra.mxu0 %v2081
      %2173 = vmatpush.msra.mxu0 %v2079
      %2174 = vmatpush.msra.mxu0 %v2077
      %2175 = vmatpush.msra.mxu0 %v2075
      %2176 = vmatpush.msra.mxu0 %v2073
      %2177 = vmatpush.msra.mxu0 %v2071
      %2178 = vmatpush.msra.mxu0 %v2069
      %2179 = vmatpush.msra.mxu0 %v2067
      %2180 = vmatpush.msra.mxu0 %v2065
      %2181 = vmatpush.msra.mxu0 %v2063
      %2182 = vmatpush.msra.mxu0 %v2061
      %2183 = vmatpush.msra.mxu0 %v2059
      %2184 = vmatpush.msra.mxu0 %v2057
      %2185 = vmatpush.msra.mxu0 %v2055
      %2186 = vmatmul.f32.gmra.mxu0 %v947
      %v2187 = vpop.f32.mrf.mxu0
      %v2188 = vadd.f32 0.0, %v2187
      %2189 = vmatmul.f32.gmra.mxu0 %v1233
      %v2190 = vpop.f32.mrf.mxu0
      %v2191 = vadd.f32 0.0, %v2190
      %2192 = vmatmul.f32.gmra.mxu0 %v1525
      %v2193 = vpop.f32.mrf.mxu0
      %v2194 = vadd.f32 0.0, %v2193
      %2195 = vdwg.mxu0
      %2196 = vmatpush.msra.mxu0 %v2117
      %2197 = vmatpush.msra.mxu0 %v2115
      %2198 = vmatpush.msra.mxu0 %v2113
      %2199 = vmatpush.msra.mxu0 %v2111
      %2200 = vmatpush.msra.mxu0 %v2109
      %2201 = vmatpush.msra.mxu0 %v2107
      %2202 = vmatpush.msra.mxu0 %v2105
      %2203 = vmatpush.msra.mxu0 %v2103
      %2204 = vmatpush.msra.mxu0 %v2101
      %2205 = vmatpush.msra.mxu0 %v2099
      %2206 = vmatpush.msra.mxu0 %v2097
      %2207 = vmatpush.msra.mxu0 %v2095
      %2208 = vmatpush.msra.mxu0 %v2093
      %2209 = vmatpush.msra.mxu0 %v2091
      %2210 = vmatpush.msra.mxu0 %v2089
      %2211 = vmatpush.msra.mxu0 %v2087
      %2212 = vmatmul.f32.gmra.mxu0 %v967
      %v2213 = vpop.f32.mrf.mxu0
      %v2214 = vadd.f32 %v2188, %v2213
      %2215 = vmatmul.f32.gmra.mxu0 %v1253
      %v2216 = vpop.f32.mrf.mxu0
      %v2217 = vadd.f32 %v2191, %v2216
      %2218 = vmatmul.f32.gmra.mxu0 %v1545
      %v2219 = vpop.f32.mrf.mxu0
      %v2220 = vadd.f32 %v2194, %v2219
      %2221 = vdwg.mxu0
      %s2222 = scalar_lea.vmem %s15, 2048
      %v2223 = vld [vmem:[%s2222] sm:$0xff]
      %v2224 = vld [vmem:[%s2222 + $0x8] sm:$0xff]
      %v2225 = vld [vmem:[%s2222 + $0x10] sm:$0xff]
      %v2226 = vld [vmem:[%s2222 + $0x18] sm:$0xff]
      %v2227 = vld [vmem:[%s2222 + $0x20] sm:$0xff]
      %v2228 = vld [vmem:[%s2222 + $0x28] sm:$0xff]
      %v2229 = vld [vmem:[%s2222 + $0x30] sm:$0xff]
      %v2230 = vld [vmem:[%s2222 + $0x38] sm:$0xff]
      %v2231 = vld [vmem:[%s2222 + $0x40] sm:$0xff]
      %v2232 = vld [vmem:[%s2222 + $0x48] sm:$0xff]
      %v2233 = vld [vmem:[%s2222 + $0x50] sm:$0xff]
      %v2234 = vld [vmem:[%s2222 + $0x58] sm:$0xff]
      %v2235 = vld [vmem:[%s2222 + $0x60] sm:$0xff]
      %v2236 = vld [vmem:[%s2222 + $0x68] sm:$0xff]
      %v2237 = vld [vmem:[%s2222 + $0x70] sm:$0xff]
      %v2238 = vld [vmem:[%s2222 + $0x78] sm:$0xff]
      %v2239 = vld [vmem:[%s2222 + $0x80] sm:$0xff]
      %v2240 = vld [vmem:[%s2222 + $0x88] sm:$0xff]
      %v2241 = vld [vmem:[%s2222 + $0x90] sm:$0xff]
      %v2242 = vld [vmem:[%s2222 + $0x98] sm:$0xff]
      %v2243 = vld [vmem:[%s2222 + $0xa0] sm:$0xff]
      %v2244 = vld [vmem:[%s2222 + $0xa8] sm:$0xff]
      %v2245 = vld [vmem:[%s2222 + $0xb0] sm:$0xff]
      %v2246 = vld [vmem:[%s2222 + $0xb8] sm:$0xff]
      %v2247 = vld [vmem:[%s2222 + $0xc0] sm:$0xff]
      %v2248 = vld [vmem:[%s2222 + $0xc8] sm:$0xff]
      %v2249 = vld [vmem:[%s2222 + $0xd0] sm:$0xff]
      %v2250 = vld [vmem:[%s2222 + $0xd8] sm:$0xff]
      %v2251 = vld [vmem:[%s2222 + $0xe0] sm:$0xff]
      %v2252 = vld [vmem:[%s2222 + $0xe8] sm:$0xff]
      %v2253 = vld [vmem:[%s2222 + $0xf0] sm:$0xff]
      %v2254 = vld [vmem:[%s2222 + $0xf8] sm:$0xff]
      %v2255 = vld [vmem:[%s2222 + $0x100] sm:$0xff]
      %v2256 = vld [vmem:[%s2222 + $0x108] sm:$0xff]
      %v2257 = vld [vmem:[%s2222 + $0x110] sm:$0xff]
      %v2258 = vld [vmem:[%s2222 + $0x118] sm:$0xff]
      %v2259 = vld [vmem:[%s2222 + $0x120] sm:$0xff]
      %v2260 = vld [vmem:[%s2222 + $0x128] sm:$0xff]
      %v2261 = vld [vmem:[%s2222 + $0x130] sm:$0xff]
      %v2262 = vld [vmem:[%s2222 + $0x138] sm:$0xff]
      %v2263 = vld [vmem:[%s2222 + $0x140] sm:$0xff]
      %v2264 = vld [vmem:[%s2222 + $0x148] sm:$0xff]
      %v2265 = vld [vmem:[%s2222 + $0x150] sm:$0xff]
      %v2266 = vld [vmem:[%s2222 + $0x158] sm:$0xff]
      %v2267 = vld [vmem:[%s2222 + $0x160] sm:$0xff]
      %v2268 = vld [vmem:[%s2222 + $0x168] sm:$0xff]
      %v2269 = vld [vmem:[%s2222 + $0x170] sm:$0xff]
      %v2270 = vld [vmem:[%s2222 + $0x178] sm:$0xff]
      %v2271 = vld [vmem:[%s2222 + $0x180] sm:$0xff]
      %v2272 = vld [vmem:[%s2222 + $0x188] sm:$0xff]
      %v2273 = vld [vmem:[%s2222 + $0x190] sm:$0xff]
      %v2274 = vld [vmem:[%s2222 + $0x198] sm:$0xff]
      %v2275 = vld [vmem:[%s2222 + $0x1a0] sm:$0xff]
      %v2276 = vld [vmem:[%s2222 + $0x1a8] sm:$0xff]
      %v2277 = vld [vmem:[%s2222 + $0x1b0] sm:$0xff]
      %v2278 = vld [vmem:[%s2222 + $0x1b8] sm:$0xff]
      %v2279 = vld [vmem:[%s2222 + $0x1c0] sm:$0xff]
      %v2280 = vld [vmem:[%s2222 + $0x1c8] sm:$0xff]
      %v2281 = vld [vmem:[%s2222 + $0x1d0] sm:$0xff]
      %v2282 = vld [vmem:[%s2222 + $0x1d8] sm:$0xff]
      %v2283 = vld [vmem:[%s2222 + $0x1e0] sm:$0xff]
      %v2284 = vld [vmem:[%s2222 + $0x1e8] sm:$0xff]
      %v2285 = vld [vmem:[%s2222 + $0x1f0] sm:$0xff]
      %v2286 = vld [vmem:[%s2222 + $0x1f8] sm:$0xff]
      %2287 = vmatpush.msra.mxu0 %v2253
      %2288 = vmatpush.msra.mxu0 %v2251
      %2289 = vmatpush.msra.mxu0 %v2249
      %2290 = vmatpush.msra.mxu0 %v2247
      %2291 = vmatpush.msra.mxu0 %v2245
      %2292 = vmatpush.msra.mxu0 %v2243
      %2293 = vmatpush.msra.mxu0 %v2241
      %2294 = vmatpush.msra.mxu0 %v2239
      %2295 = vmatpush.msra.mxu0 %v2237
      %2296 = vmatpush.msra.mxu0 %v2235
      %2297 = vmatpush.msra.mxu0 %v2233
      %2298 = vmatpush.msra.mxu0 %v2231
      %2299 = vmatpush.msra.mxu0 %v2229
      %2300 = vmatpush.msra.mxu0 %v2227
      %2301 = vmatpush.msra.mxu0 %v2225
      %2302 = vmatpush.msra.mxu0 %v2223
      %2303 = vmatmul.f32.gmra.mxu0 %v947
      %v2304 = vpop.f32.mrf.mxu0
      %v2305 = vadd.f32 0.0, %v2304
      %2306 = vmatmul.f32.gmra.mxu0 %v1233
      %v2307 = vpop.f32.mrf.mxu0
      %v2308 = vadd.f32 0.0, %v2307
      %2309 = vmatmul.f32.gmra.mxu0 %v1525
      %v2310 = vpop.f32.mrf.mxu0
      %v2311 = vadd.f32 0.0, %v2310
      %2312 = vdwg.mxu0
      %2313 = vmatpush.msra.mxu0 %v2285
      %2314 = vmatpush.msra.mxu0 %v2283
      %2315 = vmatpush.msra.mxu0 %v2281
      %2316 = vmatpush.msra.mxu0 %v2279
      %2317 = vmatpush.msra.mxu0 %v2277
      %2318 = vmatpush.msra.mxu0 %v2275
      %2319 = vmatpush.msra.mxu0 %v2273
      %2320 = vmatpush.msra.mxu0 %v2271
      %2321 = vmatpush.msra.mxu0 %v2269
      %2322 = vmatpush.msra.mxu0 %v2267
      %2323 = vmatpush.msra.mxu0 %v2265
      %2324 = vmatpush.msra.mxu0 %v2263
      %2325 = vmatpush.msra.mxu0 %v2261
      %2326 = vmatpush.msra.mxu0 %v2259
      %2327 = vmatpush.msra.mxu0 %v2257
      %2328 = vmatpush.msra.mxu0 %v2255
      %2329 = vmatmul.f32.gmra.mxu0 %v967
      %v2330 = vpop.f32.mrf.mxu0
      %v2331 = vadd.f32 %v2305, %v2330
      %2332 = vmatmul.f32.gmra.mxu0 %v1253
      %v2333 = vpop.f32.mrf.mxu0
      %v2334 = vadd.f32 %v2308, %v2333
      %2335 = vmatmul.f32.gmra.mxu0 %v1545
      %v2336 = vpop.f32.mrf.mxu0
      %v2337 = vadd.f32 %v2311, %v2336
      %2338 = vdwg.mxu0
      %2339 = vmatpush.msra.mxu0 %v2254
      %2340 = vmatpush.msra.mxu0 %v2252
      %2341 = vmatpush.msra.mxu0 %v2250
      %2342 = vmatpush.msra.mxu0 %v2248
      %2343 = vmatpush.msra.mxu0 %v2246
      %2344 = vmatpush.msra.mxu0 %v2244
      %2345 = vmatpush.msra.mxu0 %v2242
      %2346 = vmatpush.msra.mxu0 %v2240
      %2347 = vmatpush.msra.mxu0 %v2238
      %2348 = vmatpush.msra.mxu0 %v2236
      %2349 = vmatpush.msra.mxu0 %v2234
      %2350 = vmatpush.msra.mxu0 %v2232
      %2351 = vmatpush.msra.mxu0 %v2230
      %2352 = vmatpush.msra.mxu0 %v2228
      %2353 = vmatpush.msra.mxu0 %v2226
      %2354 = vmatpush.msra.mxu0 %v2224
      %2355 = vmatmul.f32.gmra.mxu0 %v947
      %v2356 = vpop.f32.mrf.mxu0
      %v2357 = vadd.f32 0.0, %v2356
      %2358 = vmatmul.f32.gmra.mxu0 %v1233
      %v2359 = vpop.f32.mrf.mxu0
      %v2360 = vadd.f32 0.0, %v2359
      %2361 = vmatmul.f32.gmra.mxu0 %v1525
      %v2362 = vpop.f32.mrf.mxu0
      %v2363 = vadd.f32 0.0, %v2362
      %2364 = vdwg.mxu0
      %2365 = vmatpush.msra.mxu0 %v2286
      %2366 = vmatpush.msra.mxu0 %v2284
      %2367 = vmatpush.msra.mxu0 %v2282
      %2368 = vmatpush.msra.mxu0 %v2280
      %2369 = vmatpush.msra.mxu0 %v2278
      %2370 = vmatpush.msra.mxu0 %v2276
      %2371 = vmatpush.msra.mxu0 %v2274
      %2372 = vmatpush.msra.mxu0 %v2272
      %2373 = vmatpush.msra.mxu0 %v2270
      %2374 = vmatpush.msra.mxu0 %v2268
      %2375 = vmatpush.msra.mxu0 %v2266
      %2376 = vmatpush.msra.mxu0 %v2264
      %2377 = vmatpush.msra.mxu0 %v2262
      %2378 = vmatpush.msra.mxu0 %v2260
      %2379 = vmatpush.msra.mxu0 %v2258
      %2380 = vmatpush.msra.mxu0 %v2256
      %2381 = vmatmul.f32.gmra.mxu0 %v967
      %v2382 = vpop.f32.mrf.mxu0
      %v2383 = vadd.f32 %v2357, %v2382
      %2384 = vmatmul.f32.gmra.mxu0 %v1253
      %v2385 = vpop.f32.mrf.mxu0
      %v2386 = vadd.f32 %v2360, %v2385
      %2387 = vmatmul.f32.gmra.mxu0 %v1545
      %v2388 = vpop.f32.mrf.mxu0
      %v2389 = vadd.f32 %v2363, %v2388
      %2390 = vdwg.mxu0
      %s2391 = scalar_lea.vmem %s15, 2560
      %v2392 = vld [vmem:[%s2391] sm:$0xff]
      %v2393 = vld [vmem:[%s2391 + $0x8] sm:$0xff]
      %v2394 = vld [vmem:[%s2391 + $0x10] sm:$0xff]
      %v2395 = vld [vmem:[%s2391 + $0x18] sm:$0xff]
      %v2396 = vld [vmem:[%s2391 + $0x20] sm:$0xff]
      %v2397 = vld [vmem:[%s2391 + $0x28] sm:$0xff]
      %v2398 = vld [vmem:[%s2391 + $0x30] sm:$0xff]
      %v2399 = vld [vmem:[%s2391 + $0x38] sm:$0xff]
      %v2400 = vld [vmem:[%s2391 + $0x40] sm:$0xff]
      %v2401 = vld [vmem:[%s2391 + $0x48] sm:$0xff]
      %v2402 = vld [vmem:[%s2391 + $0x50] sm:$0xff]
      %v2403 = vld [vmem:[%s2391 + $0x58] sm:$0xff]
      %v2404 = vld [vmem:[%s2391 + $0x60] sm:$0xff]
      %v2405 = vld [vmem:[%s2391 + $0x68] sm:$0xff]
      %v2406 = vld [vmem:[%s2391 + $0x70] sm:$0xff]
      %v2407 = vld [vmem:[%s2391 + $0x78] sm:$0xff]
      %v2408 = vld [vmem:[%s2391 + $0x80] sm:$0xff]
      %v2409 = vld [vmem:[%s2391 + $0x88] sm:$0xff]
      %v2410 = vld [vmem:[%s2391 + $0x90] sm:$0xff]
      %v2411 = vld [vmem:[%s2391 + $0x98] sm:$0xff]
      %v2412 = vld [vmem:[%s2391 + $0xa0] sm:$0xff]
      %v2413 = vld [vmem:[%s2391 + $0xa8] sm:$0xff]
      %v2414 = vld [vmem:[%s2391 + $0xb0] sm:$0xff]
      %v2415 = vld [vmem:[%s2391 + $0xb8] sm:$0xff]
      %v2416 = vld [vmem:[%s2391 + $0xc0] sm:$0xff]
      %v2417 = vld [vmem:[%s2391 + $0xc8] sm:$0xff]
      %v2418 = vld [vmem:[%s2391 + $0xd0] sm:$0xff]
      %v2419 = vld [vmem:[%s2391 + $0xd8] sm:$0xff]
      %v2420 = vld [vmem:[%s2391 + $0xe0] sm:$0xff]
      %v2421 = vld [vmem:[%s2391 + $0xe8] sm:$0xff]
      %v2422 = vld [vmem:[%s2391 + $0xf0] sm:$0xff]
      %v2423 = vld [vmem:[%s2391 + $0xf8] sm:$0xff]
      %v2424 = vld [vmem:[%s2391 + $0x100] sm:$0xff]
      %v2425 = vld [vmem:[%s2391 + $0x108] sm:$0xff]
      %v2426 = vld [vmem:[%s2391 + $0x110] sm:$0xff]
      %v2427 = vld [vmem:[%s2391 + $0x118] sm:$0xff]
      %v2428 = vld [vmem:[%s2391 + $0x120] sm:$0xff]
      %v2429 = vld [vmem:[%s2391 + $0x128] sm:$0xff]
      %v2430 = vld [vmem:[%s2391 + $0x130] sm:$0xff]
      %v2431 = vld [vmem:[%s2391 + $0x138] sm:$0xff]
      %v2432 = vld [vmem:[%s2391 + $0x140] sm:$0xff]
      %v2433 = vld [vmem:[%s2391 + $0x148] sm:$0xff]
      %v2434 = vld [vmem:[%s2391 + $0x150] sm:$0xff]
      %v2435 = vld [vmem:[%s2391 + $0x158] sm:$0xff]
      %v2436 = vld [vmem:[%s2391 + $0x160] sm:$0xff]
      %v2437 = vld [vmem:[%s2391 + $0x168] sm:$0xff]
      %v2438 = vld [vmem:[%s2391 + $0x170] sm:$0xff]
      %v2439 = vld [vmem:[%s2391 + $0x178] sm:$0xff]
      %v2440 = vld [vmem:[%s2391 + $0x180] sm:$0xff]
      %v2441 = vld [vmem:[%s2391 + $0x188] sm:$0xff]
      %v2442 = vld [vmem:[%s2391 + $0x190] sm:$0xff]
      %v2443 = vld [vmem:[%s2391 + $0x198] sm:$0xff]
      %v2444 = vld [vmem:[%s2391 + $0x1a0] sm:$0xff]
      %v2445 = vld [vmem:[%s2391 + $0x1a8] sm:$0xff]
      %v2446 = vld [vmem:[%s2391 + $0x1b0] sm:$0xff]
      %v2447 = vld [vmem:[%s2391 + $0x1b8] sm:$0xff]
      %v2448 = vld [vmem:[%s2391 + $0x1c0] sm:$0xff]
      %v2449 = vld [vmem:[%s2391 + $0x1c8] sm:$0xff]
      %v2450 = vld [vmem:[%s2391 + $0x1d0] sm:$0xff]
      %v2451 = vld [vmem:[%s2391 + $0x1d8] sm:$0xff]
      %v2452 = vld [vmem:[%s2391 + $0x1e0] sm:$0xff]
      %v2453 = vld [vmem:[%s2391 + $0x1e8] sm:$0xff]
      %v2454 = vld [vmem:[%s2391 + $0x1f0] sm:$0xff]
      %v2455 = vld [vmem:[%s2391 + $0x1f8] sm:$0xff]
      %2456 = vmatpush.msra.mxu0 %v2422
      %2457 = vmatpush.msra.mxu0 %v2420
      %2458 = vmatpush.msra.mxu0 %v2418
      %2459 = vmatpush.msra.mxu0 %v2416
      %2460 = vmatpush.msra.mxu0 %v2414
      %2461 = vmatpush.msra.mxu0 %v2412
      %2462 = vmatpush.msra.mxu0 %v2410
      %2463 = vmatpush.msra.mxu0 %v2408
      %2464 = vmatpush.msra.mxu0 %v2406
      %2465 = vmatpush.msra.mxu0 %v2404
      %2466 = vmatpush.msra.mxu0 %v2402
      %2467 = vmatpush.msra.mxu0 %v2400
      %2468 = vmatpush.msra.mxu0 %v2398
      %2469 = vmatpush.msra.mxu0 %v2396
      %2470 = vmatpush.msra.mxu0 %v2394
      %2471 = vmatpush.msra.mxu0 %v2392
      %2472 = vmatmul.f32.gmra.mxu0 %v947
      %v2473 = vpop.f32.mrf.mxu0
      %v2474 = vadd.f32 0.0, %v2473
      %2475 = vmatmul.f32.gmra.mxu0 %v1233
      %v2476 = vpop.f32.mrf.mxu0
      %v2477 = vadd.f32 0.0, %v2476
      %2478 = vmatmul.f32.gmra.mxu0 %v1525
      %v2479 = vpop.f32.mrf.mxu0
      %v2480 = vadd.f32 0.0, %v2479
      %2481 = vdwg.mxu0
      %2482 = vmatpush.msra.mxu0 %v2454
      %2483 = vmatpush.msra.mxu0 %v2452
      %2484 = vmatpush.msra.mxu0 %v2450
      %2485 = vmatpush.msra.mxu0 %v2448
      %2486 = vmatpush.msra.mxu0 %v2446
      %2487 = vmatpush.msra.mxu0 %v2444
      %2488 = vmatpush.msra.mxu0 %v2442
      %2489 = vmatpush.msra.mxu0 %v2440
      %2490 = vmatpush.msra.mxu0 %v2438
      %2491 = vmatpush.msra.mxu0 %v2436
      %2492 = vmatpush.msra.mxu0 %v2434
      %2493 = vmatpush.msra.mxu0 %v2432
      %2494 = vmatpush.msra.mxu0 %v2430
      %2495 = vmatpush.msra.mxu0 %v2428
      %2496 = vmatpush.msra.mxu0 %v2426
      %2497 = vmatpush.msra.mxu0 %v2424
      %2498 = vmatmul.f32.gmra.mxu0 %v967
      %v2499 = vpop.f32.mrf.mxu0
      %v2500 = vadd.f32 %v2474, %v2499
      %2501 = vmatmul.f32.gmra.mxu0 %v1253
      %v2502 = vpop.f32.mrf.mxu0
      %v2503 = vadd.f32 %v2477, %v2502
      %2504 = vmatmul.f32.gmra.mxu0 %v1545
      %v2505 = vpop.f32.mrf.mxu0
      %v2506 = vadd.f32 %v2480, %v2505
      %2507 = vdwg.mxu0
      %2508 = vmatpush.msra.mxu0 %v2423
      %2509 = vmatpush.msra.mxu0 %v2421
      %2510 = vmatpush.msra.mxu0 %v2419
      %2511 = vmatpush.msra.mxu0 %v2417
      %2512 = vmatpush.msra.mxu0 %v2415
      %2513 = vmatpush.msra.mxu0 %v2413
      %2514 = vmatpush.msra.mxu0 %v2411
      %2515 = vmatpush.msra.mxu0 %v2409
      %2516 = vmatpush.msra.mxu0 %v2407
      %2517 = vmatpush.msra.mxu0 %v2405
      %2518 = vmatpush.msra.mxu0 %v2403
      %2519 = vmatpush.msra.mxu0 %v2401
      %2520 = vmatpush.msra.mxu0 %v2399
      %2521 = vmatpush.msra.mxu0 %v2397
      %2522 = vmatpush.msra.mxu0 %v2395
      %2523 = vmatpush.msra.mxu0 %v2393
      %2524 = vmatmul.f32.gmra.mxu0 %v947
      %v2525 = vpop.f32.mrf.mxu0
      %v2526 = vadd.f32 0.0, %v2525
      %2527 = vmatmul.f32.gmra.mxu0 %v1233
      %v2528 = vpop.f32.mrf.mxu0
      %v2529 = vadd.f32 0.0, %v2528
      %2530 = vmatmul.f32.gmra.mxu0 %v1525
      %v2531 = vpop.f32.mrf.mxu0
      %v2532 = vadd.f32 0.0, %v2531
      %2533 = vdwg.mxu0
      %2534 = vmatpush.msra.mxu0 %v2455
      %2535 = vmatpush.msra.mxu0 %v2453
      %2536 = vmatpush.msra.mxu0 %v2451
      %2537 = vmatpush.msra.mxu0 %v2449
      %2538 = vmatpush.msra.mxu0 %v2447
      %2539 = vmatpush.msra.mxu0 %v2445
      %2540 = vmatpush.msra.mxu0 %v2443
      %2541 = vmatpush.msra.mxu0 %v2441
      %2542 = vmatpush.msra.mxu0 %v2439
      %2543 = vmatpush.msra.mxu0 %v2437
      %2544 = vmatpush.msra.mxu0 %v2435
      %2545 = vmatpush.msra.mxu0 %v2433
      %2546 = vmatpush.msra.mxu0 %v2431
      %2547 = vmatpush.msra.mxu0 %v2429
      %2548 = vmatpush.msra.mxu0 %v2427
      %2549 = vmatpush.msra.mxu0 %v2425
      %2550 = vmatmul.f32.gmra.mxu0 %v967
      %v2551 = vpop.f32.mrf.mxu0
      %v2552 = vadd.f32 %v2526, %v2551
      %2553 = vmatmul.f32.gmra.mxu0 %v1253
      %v2554 = vpop.f32.mrf.mxu0
      %v2555 = vadd.f32 %v2529, %v2554
      %2556 = vmatmul.f32.gmra.mxu0 %v1545
      %v2557 = vpop.f32.mrf.mxu0
      %v2558 = vadd.f32 %v2532, %v2557
      %2559 = vdwg.mxu0
      %s2560 = scalar_lea.vmem %s15, 3072
      %v2561 = vld [vmem:[%s2560] sm:$0xff]
      %v2562 = vld [vmem:[%s2560 + $0x8] sm:$0xff]
      %v2563 = vld [vmem:[%s2560 + $0x10] sm:$0xff]
      %v2564 = vld [vmem:[%s2560 + $0x18] sm:$0xff]
      %v2565 = vld [vmem:[%s2560 + $0x20] sm:$0xff]
      %v2566 = vld [vmem:[%s2560 + $0x28] sm:$0xff]
      %v2567 = vld [vmem:[%s2560 + $0x30] sm:$0xff]
      %v2568 = vld [vmem:[%s2560 + $0x38] sm:$0xff]
      %v2569 = vld [vmem:[%s2560 + $0x40] sm:$0xff]
      %v2570 = vld [vmem:[%s2560 + $0x48] sm:$0xff]
      %v2571 = vld [vmem:[%s2560 + $0x50] sm:$0xff]
      %v2572 = vld [vmem:[%s2560 + $0x58] sm:$0xff]
      %v2573 = vld [vmem:[%s2560 + $0x60] sm:$0xff]
      %v2574 = vld [vmem:[%s2560 + $0x68] sm:$0xff]
      %v2575 = vld [vmem:[%s2560 + $0x70] sm:$0xff]
      %v2576 = vld [vmem:[%s2560 + $0x78] sm:$0xff]
      %v2577 = vld [vmem:[%s2560 + $0x80] sm:$0xff]
      %v2578 = vld [vmem:[%s2560 + $0x88] sm:$0xff]
      %v2579 = vld [vmem:[%s2560 + $0x90] sm:$0xff]
      %v2580 = vld [vmem:[%s2560 + $0x98] sm:$0xff]
      %v2581 = vld [vmem:[%s2560 + $0xa0] sm:$0xff]
      %v2582 = vld [vmem:[%s2560 + $0xa8] sm:$0xff]
      %v2583 = vld [vmem:[%s2560 + $0xb0] sm:$0xff]
      %v2584 = vld [vmem:[%s2560 + $0xb8] sm:$0xff]
      %v2585 = vld [vmem:[%s2560 + $0xc0] sm:$0xff]
      %v2586 = vld [vmem:[%s2560 + $0xc8] sm:$0xff]
      %v2587 = vld [vmem:[%s2560 + $0xd0] sm:$0xff]
      %v2588 = vld [vmem:[%s2560 + $0xd8] sm:$0xff]
      %v2589 = vld [vmem:[%s2560 + $0xe0] sm:$0xff]
      %v2590 = vld [vmem:[%s2560 + $0xe8] sm:$0xff]
      %v2591 = vld [vmem:[%s2560 + $0xf0] sm:$0xff]
      %v2592 = vld [vmem:[%s2560 + $0xf8] sm:$0xff]
      %v2593 = vld [vmem:[%s2560 + $0x100] sm:$0xff]
      %v2594 = vld [vmem:[%s2560 + $0x108] sm:$0xff]
      %v2595 = vld [vmem:[%s2560 + $0x110] sm:$0xff]
      %v2596 = vld [vmem:[%s2560 + $0x118] sm:$0xff]
      %v2597 = vld [vmem:[%s2560 + $0x120] sm:$0xff]
      %v2598 = vld [vmem:[%s2560 + $0x128] sm:$0xff]
      %v2599 = vld [vmem:[%s2560 + $0x130] sm:$0xff]
      %v2600 = vld [vmem:[%s2560 + $0x138] sm:$0xff]
      %v2601 = vld [vmem:[%s2560 + $0x140] sm:$0xff]
      %v2602 = vld [vmem:[%s2560 + $0x148] sm:$0xff]
      %v2603 = vld [vmem:[%s2560 + $0x150] sm:$0xff]
      %v2604 = vld [vmem:[%s2560 + $0x158] sm:$0xff]
      %v2605 = vld [vmem:[%s2560 + $0x160] sm:$0xff]
      %v2606 = vld [vmem:[%s2560 + $0x168] sm:$0xff]
      %v2607 = vld [vmem:[%s2560 + $0x170] sm:$0xff]
      %v2608 = vld [vmem:[%s2560 + $0x178] sm:$0xff]
      %v2609 = vld [vmem:[%s2560 + $0x180] sm:$0xff]
      %v2610 = vld [vmem:[%s2560 + $0x188] sm:$0xff]
      %v2611 = vld [vmem:[%s2560 + $0x190] sm:$0xff]
      %v2612 = vld [vmem:[%s2560 + $0x198] sm:$0xff]
      %v2613 = vld [vmem:[%s2560 + $0x1a0] sm:$0xff]
      %v2614 = vld [vmem:[%s2560 + $0x1a8] sm:$0xff]
      %v2615 = vld [vmem:[%s2560 + $0x1b0] sm:$0xff]
      %v2616 = vld [vmem:[%s2560 + $0x1b8] sm:$0xff]
      %v2617 = vld [vmem:[%s2560 + $0x1c0] sm:$0xff]
      %v2618 = vld [vmem:[%s2560 + $0x1c8] sm:$0xff]
      %v2619 = vld [vmem:[%s2560 + $0x1d0] sm:$0xff]
      %v2620 = vld [vmem:[%s2560 + $0x1d8] sm:$0xff]
      %v2621 = vld [vmem:[%s2560 + $0x1e0] sm:$0xff]
      %v2622 = vld [vmem:[%s2560 + $0x1e8] sm:$0xff]
      %v2623 = vld [vmem:[%s2560 + $0x1f0] sm:$0xff]
      %v2624 = vld [vmem:[%s2560 + $0x1f8] sm:$0xff]
      %2625 = vmatpush.msra.mxu0 %v2591
      %2626 = vmatpush.msra.mxu0 %v2589
      %2627 = vmatpush.msra.mxu0 %v2587
      %2628 = vmatpush.msra.mxu0 %v2585
      %2629 = vmatpush.msra.mxu0 %v2583
      %2630 = vmatpush.msra.mxu0 %v2581
      %2631 = vmatpush.msra.mxu0 %v2579
      %2632 = vmatpush.msra.mxu0 %v2577
      %2633 = vmatpush.msra.mxu0 %v2575
      %2634 = vmatpush.msra.mxu0 %v2573
      %2635 = vmatpush.msra.mxu0 %v2571
      %2636 = vmatpush.msra.mxu0 %v2569
      %2637 = vmatpush.msra.mxu0 %v2567
      %2638 = vmatpush.msra.mxu0 %v2565
      %2639 = vmatpush.msra.mxu0 %v2563
      %2640 = vmatpush.msra.mxu0 %v2561
      %2641 = vmatmul.f32.gmra.mxu0 %v947
      %v2642 = vpop.f32.mrf.mxu0
      %v2643 = vadd.f32 0.0, %v2642
      %2644 = vmatmul.f32.gmra.mxu0 %v1233
      %v2645 = vpop.f32.mrf.mxu0
      %v2646 = vadd.f32 0.0, %v2645
      %2647 = vmatmul.f32.gmra.mxu0 %v1525
      %v2648 = vpop.f32.mrf.mxu0
      %v2649 = vadd.f32 0.0, %v2648
      %2650 = vdwg.mxu0
      %2651 = vmatpush.msra.mxu0 %v2623
      %2652 = vmatpush.msra.mxu0 %v2621
      %2653 = vmatpush.msra.mxu0 %v2619
      %2654 = vmatpush.msra.mxu0 %v2617
      %2655 = vmatpush.msra.mxu0 %v2615
      %2656 = vmatpush.msra.mxu0 %v2613
      %2657 = vmatpush.msra.mxu0 %v2611
      %2658 = vmatpush.msra.mxu0 %v2609
      %2659 = vmatpush.msra.mxu0 %v2607
      %2660 = vmatpush.msra.mxu0 %v2605
      %2661 = vmatpush.msra.mxu0 %v2603
      %2662 = vmatpush.msra.mxu0 %v2601
      %2663 = vmatpush.msra.mxu0 %v2599
      %2664 = vmatpush.msra.mxu0 %v2597
      %2665 = vmatpush.msra.mxu0 %v2595
      %2666 = vmatpush.msra.mxu0 %v2593
      %2667 = vmatmul.f32.gmra.mxu0 %v967
      %v2668 = vpop.f32.mrf.mxu0
      %v2669 = vadd.f32 %v2643, %v2668
      %2670 = vmatmul.f32.gmra.mxu0 %v1253
      %v2671 = vpop.f32.mrf.mxu0
      %v2672 = vadd.f32 %v2646, %v2671
      %2673 = vmatmul.f32.gmra.mxu0 %v1545
      %v2674 = vpop.f32.mrf.mxu0
      %v2675 = vadd.f32 %v2649, %v2674
      %2676 = vdwg.mxu0
      %2677 = vmatpush.msra.mxu0 %v2592
      %2678 = vmatpush.msra.mxu0 %v2590
      %2679 = vmatpush.msra.mxu0 %v2588
      %2680 = vmatpush.msra.mxu0 %v2586
      %2681 = vmatpush.msra.mxu0 %v2584
      %2682 = vmatpush.msra.mxu0 %v2582
      %2683 = vmatpush.msra.mxu0 %v2580
      %2684 = vmatpush.msra.mxu0 %v2578
      %2685 = vmatpush.msra.mxu0 %v2576
      %2686 = vmatpush.msra.mxu0 %v2574
      %2687 = vmatpush.msra.mxu0 %v2572
      %2688 = vmatpush.msra.mxu0 %v2570
      %2689 = vmatpush.msra.mxu0 %v2568
      %2690 = vmatpush.msra.mxu0 %v2566
      %2691 = vmatpush.msra.mxu0 %v2564
      %2692 = vmatpush.msra.mxu0 %v2562
      %2693 = vmatmul.f32.gmra.mxu0 %v947
      %v2694 = vpop.f32.mrf.mxu0
      %v2695 = vadd.f32 0.0, %v2694
      %2696 = vmatmul.f32.gmra.mxu0 %v1233
      %v2697 = vpop.f32.mrf.mxu0
      %v2698 = vadd.f32 0.0, %v2697
      %2699 = vmatmul.f32.gmra.mxu0 %v1525
      %v2700 = vpop.f32.mrf.mxu0
      %v2701 = vadd.f32 0.0, %v2700
      %2702 = vdwg.mxu0
      %2703 = vmatpush.msra.mxu0 %v2624
      %2704 = vmatpush.msra.mxu0 %v2622
      %2705 = vmatpush.msra.mxu0 %v2620
      %2706 = vmatpush.msra.mxu0 %v2618
      %2707 = vmatpush.msra.mxu0 %v2616
      %2708 = vmatpush.msra.mxu0 %v2614
      %2709 = vmatpush.msra.mxu0 %v2612
      %2710 = vmatpush.msra.mxu0 %v2610
      %2711 = vmatpush.msra.mxu0 %v2608
      %2712 = vmatpush.msra.mxu0 %v2606
      %2713 = vmatpush.msra.mxu0 %v2604
      %2714 = vmatpush.msra.mxu0 %v2602
      %2715 = vmatpush.msra.mxu0 %v2600
      %2716 = vmatpush.msra.mxu0 %v2598
      %2717 = vmatpush.msra.mxu0 %v2596
      %2718 = vmatpush.msra.mxu0 %v2594
      %2719 = vmatmul.f32.gmra.mxu0 %v967
      %v2720 = vpop.f32.mrf.mxu0
      %v2721 = vadd.f32 %v2695, %v2720
      %2722 = vmatmul.f32.gmra.mxu0 %v1253
      %v2723 = vpop.f32.mrf.mxu0
      %v2724 = vadd.f32 %v2698, %v2723
      %2725 = vmatmul.f32.gmra.mxu0 %v1545
      %v2726 = vpop.f32.mrf.mxu0
      %v2727 = vadd.f32 %v2701, %v2726
      %2728 = vdwg.mxu0
      %s2729 = scalar_lea.vmem %s15, 3584
      %v2730 = vld [vmem:[%s2729] sm:$0xff]
      %v2731 = vld [vmem:[%s2729 + $0x8] sm:$0xff]
      %v2732 = vld [vmem:[%s2729 + $0x10] sm:$0xff]
      %v2733 = vld [vmem:[%s2729 + $0x18] sm:$0xff]
      %v2734 = vld [vmem:[%s2729 + $0x20] sm:$0xff]
      %v2735 = vld [vmem:[%s2729 + $0x28] sm:$0xff]
      %v2736 = vld [vmem:[%s2729 + $0x30] sm:$0xff]
      %v2737 = vld [vmem:[%s2729 + $0x38] sm:$0xff]
      %v2738 = vld [vmem:[%s2729 + $0x40] sm:$0xff]
      %v2739 = vld [vmem:[%s2729 + $0x48] sm:$0xff]
      %v2740 = vld [vmem:[%s2729 + $0x50] sm:$0xff]
      %v2741 = vld [vmem:[%s2729 + $0x58] sm:$0xff]
      %v2742 = vld [vmem:[%s2729 + $0x60] sm:$0xff]
      %v2743 = vld [vmem:[%s2729 + $0x68] sm:$0xff]
      %v2744 = vld [vmem:[%s2729 + $0x70] sm:$0xff]
      %v2745 = vld [vmem:[%s2729 + $0x78] sm:$0xff]
      %v2746 = vld [vmem:[%s2729 + $0x80] sm:$0xff]
      %v2747 = vld [vmem:[%s2729 + $0x88] sm:$0xff]
      %v2748 = vld [vmem:[%s2729 + $0x90] sm:$0xff]
      %v2749 = vld [vmem:[%s2729 + $0x98] sm:$0xff]
      %v2750 = vld [vmem:[%s2729 + $0xa0] sm:$0xff]
      %v2751 = vld [vmem:[%s2729 + $0xa8] sm:$0xff]
      %v2752 = vld [vmem:[%s2729 + $0xb0] sm:$0xff]
      %v2753 = vld [vmem:[%s2729 + $0xb8] sm:$0xff]
      %v2754 = vld [vmem:[%s2729 + $0xc0] sm:$0xff]
      %v2755 = vld [vmem:[%s2729 + $0xc8] sm:$0xff]
      %v2756 = vld [vmem:[%s2729 + $0xd0] sm:$0xff]
      %v2757 = vld [vmem:[%s2729 + $0xd8] sm:$0xff]
      %v2758 = vld [vmem:[%s2729 + $0xe0] sm:$0xff]
      %v2759 = vld [vmem:[%s2729 + $0xe8] sm:$0xff]
      %v2760 = vld [vmem:[%s2729 + $0xf0] sm:$0xff]
      %v2761 = vld [vmem:[%s2729 + $0xf8] sm:$0xff]
      %v2762 = vld [vmem:[%s2729 + $0x100] sm:$0xff]
      %v2763 = vld [vmem:[%s2729 + $0x108] sm:$0xff]
      %v2764 = vld [vmem:[%s2729 + $0x110] sm:$0xff]
      %v2765 = vld [vmem:[%s2729 + $0x118] sm:$0xff]
      %v2766 = vld [vmem:[%s2729 + $0x120] sm:$0xff]
      %v2767 = vld [vmem:[%s2729 + $0x128] sm:$0xff]
      %v2768 = vld [vmem:[%s2729 + $0x130] sm:$0xff]
      %v2769 = vld [vmem:[%s2729 + $0x138] sm:$0xff]
      %v2770 = vld [vmem:[%s2729 + $0x140] sm:$0xff]
      %v2771 = vld [vmem:[%s2729 + $0x148] sm:$0xff]
      %v2772 = vld [vmem:[%s2729 + $0x150] sm:$0xff]
      %v2773 = vld [vmem:[%s2729 + $0x158] sm:$0xff]
      %v2774 = vld [vmem:[%s2729 + $0x160] sm:$0xff]
      %v2775 = vld [vmem:[%s2729 + $0x168] sm:$0xff]
      %v2776 = vld [vmem:[%s2729 + $0x170] sm:$0xff]
      %v2777 = vld [vmem:[%s2729 + $0x178] sm:$0xff]
      %v2778 = vld [vmem:[%s2729 + $0x180] sm:$0xff]
      %v2779 = vld [vmem:[%s2729 + $0x188] sm:$0xff]
      %v2780 = vld [vmem:[%s2729 + $0x190] sm:$0xff]
      %v2781 = vld [vmem:[%s2729 + $0x198] sm:$0xff]
      %v2782 = vld [vmem:[%s2729 + $0x1a0] sm:$0xff]
      %v2783 = vld [vmem:[%s2729 + $0x1a8] sm:$0xff]
      %v2784 = vld [vmem:[%s2729 + $0x1b0] sm:$0xff]
      %v2785 = vld [vmem:[%s2729 + $0x1b8] sm:$0xff]
      %v2786 = vld [vmem:[%s2729 + $0x1c0] sm:$0xff]
      %v2787 = vld [vmem:[%s2729 + $0x1c8] sm:$0xff]
      %v2788 = vld [vmem:[%s2729 + $0x1d0] sm:$0xff]
      %v2789 = vld [vmem:[%s2729 + $0x1d8] sm:$0xff]
      %v2790 = vld [vmem:[%s2729 + $0x1e0] sm:$0xff]
      %v2791 = vld [vmem:[%s2729 + $0x1e8] sm:$0xff]
      %v2792 = vld [vmem:[%s2729 + $0x1f0] sm:$0xff]
      %v2793 = vld [vmem:[%s2729 + $0x1f8] sm:$0xff]
      %2794 = vmatpush.msra.mxu0 %v2760
      %2795 = vmatpush.msra.mxu0 %v2758
      %2796 = vmatpush.msra.mxu0 %v2756
      %2797 = vmatpush.msra.mxu0 %v2754
      %2798 = vmatpush.msra.mxu0 %v2752
      %2799 = vmatpush.msra.mxu0 %v2750
      %2800 = vmatpush.msra.mxu0 %v2748
      %2801 = vmatpush.msra.mxu0 %v2746
      %2802 = vmatpush.msra.mxu0 %v2744
      %2803 = vmatpush.msra.mxu0 %v2742
      %2804 = vmatpush.msra.mxu0 %v2740
      %2805 = vmatpush.msra.mxu0 %v2738
      %2806 = vmatpush.msra.mxu0 %v2736
      %2807 = vmatpush.msra.mxu0 %v2734
      %2808 = vmatpush.msra.mxu0 %v2732
      %2809 = vmatpush.msra.mxu0 %v2730
      %2810 = vmatmul.f32.gmra.mxu0 %v947
      %v2811 = vpop.f32.mrf.mxu0
      %v2812 = vadd.f32 0.0, %v2811
      %2813 = vmatmul.f32.gmra.mxu0 %v1233
      %v2814 = vpop.f32.mrf.mxu0
      %v2815 = vadd.f32 0.0, %v2814
      %2816 = vmatmul.f32.gmra.mxu0 %v1525
      %v2817 = vpop.f32.mrf.mxu0
      %v2818 = vadd.f32 0.0, %v2817
      %2819 = vdwg.mxu0
      %2820 = vmatpush.msra.mxu0 %v2792
      %2821 = vmatpush.msra.mxu0 %v2790
      %2822 = vmatpush.msra.mxu0 %v2788
      %2823 = vmatpush.msra.mxu0 %v2786
      %2824 = vmatpush.msra.mxu0 %v2784
      %2825 = vmatpush.msra.mxu0 %v2782
      %2826 = vmatpush.msra.mxu0 %v2780
      %2827 = vmatpush.msra.mxu0 %v2778
      %2828 = vmatpush.msra.mxu0 %v2776
      %2829 = vmatpush.msra.mxu0 %v2774
      %2830 = vmatpush.msra.mxu0 %v2772
      %2831 = vmatpush.msra.mxu0 %v2770
      %2832 = vmatpush.msra.mxu0 %v2768
      %2833 = vmatpush.msra.mxu0 %v2766
      %2834 = vmatpush.msra.mxu0 %v2764
      %2835 = vmatpush.msra.mxu0 %v2762
      %2836 = vmatmul.f32.gmra.mxu0 %v967
      %v2837 = vpop.f32.mrf.mxu0
      %v2838 = vadd.f32 %v2812, %v2837
      %2839 = vmatmul.f32.gmra.mxu0 %v1253
      %v2840 = vpop.f32.mrf.mxu0
      %v2841 = vadd.f32 %v2815, %v2840
      %2842 = vmatmul.f32.gmra.mxu0 %v1545
      %v2843 = vpop.f32.mrf.mxu0
      %v2844 = vadd.f32 %v2818, %v2843
      %2845 = vdwg.mxu0
      %2846 = vmatpush.msra.mxu0 %v2761
      %2847 = vmatpush.msra.mxu0 %v2759
      %2848 = vmatpush.msra.mxu0 %v2757
      %2849 = vmatpush.msra.mxu0 %v2755
      %2850 = vmatpush.msra.mxu0 %v2753
      %2851 = vmatpush.msra.mxu0 %v2751
      %2852 = vmatpush.msra.mxu0 %v2749
      %2853 = vmatpush.msra.mxu0 %v2747
      %2854 = vmatpush.msra.mxu0 %v2745
      %2855 = vmatpush.msra.mxu0 %v2743
      %2856 = vmatpush.msra.mxu0 %v2741
      %2857 = vmatpush.msra.mxu0 %v2739
      %2858 = vmatpush.msra.mxu0 %v2737
      %2859 = vmatpush.msra.mxu0 %v2735
      %2860 = vmatpush.msra.mxu0 %v2733
      %2861 = vmatpush.msra.mxu0 %v2731
      %2862 = vmatmul.f32.gmra.mxu0 %v947
      %v2863 = vpop.f32.mrf.mxu0
      %v2864 = vadd.f32 0.0, %v2863
      %2865 = vmatmul.f32.gmra.mxu0 %v1233
      %v2866 = vpop.f32.mrf.mxu0
      %v2867 = vadd.f32 0.0, %v2866
      %2868 = vmatmul.f32.gmra.mxu0 %v1525
      %v2869 = vpop.f32.mrf.mxu0
      %v2870 = vadd.f32 0.0, %v2869
      %2871 = vdwg.mxu0
      %2872 = vmatpush.msra.mxu0 %v2793
      %2873 = vmatpush.msra.mxu0 %v2791
      %2874 = vmatpush.msra.mxu0 %v2789
      %2875 = vmatpush.msra.mxu0 %v2787
      %2876 = vmatpush.msra.mxu0 %v2785
      %2877 = vmatpush.msra.mxu0 %v2783
      %2878 = vmatpush.msra.mxu0 %v2781
      %2879 = vmatpush.msra.mxu0 %v2779
      %2880 = vmatpush.msra.mxu0 %v2777
      %2881 = vmatpush.msra.mxu0 %v2775
      %2882 = vmatpush.msra.mxu0 %v2773
      %2883 = vmatpush.msra.mxu0 %v2771
      %2884 = vmatpush.msra.mxu0 %v2769
      %2885 = vmatpush.msra.mxu0 %v2767
      %2886 = vmatpush.msra.mxu0 %v2765
      %2887 = vmatpush.msra.mxu0 %v2763
      %2888 = vmatmul.f32.gmra.mxu0 %v967
      %v2889 = vpop.f32.mrf.mxu0
      %v2890 = vadd.f32 %v2864, %v2889
      %2891 = vmatmul.f32.gmra.mxu0 %v1253
      %v2892 = vpop.f32.mrf.mxu0
      %v2893 = vadd.f32 %v2867, %v2892
      %2894 = vmatmul.f32.gmra.mxu0 %v1545
      %v2895 = vpop.f32.mrf.mxu0
      %v2896 = vadd.f32 %v2870, %v2895
      %2897 = vdwg.mxu0
      %s2898 = scalar_lea.vmem %s15, 4096
      %v2899 = vld [vmem:[%s2898] sm:$0xff]
      %v2900 = vld [vmem:[%s2898 + $0x8] sm:$0xff]
      %v2901 = vld [vmem:[%s2898 + $0x10] sm:$0xff]
      %v2902 = vld [vmem:[%s2898 + $0x18] sm:$0xff]
      %v2903 = vld [vmem:[%s2898 + $0x20] sm:$0xff]
      %v2904 = vld [vmem:[%s2898 + $0x28] sm:$0xff]
      %v2905 = vld [vmem:[%s2898 + $0x30] sm:$0xff]
      %v2906 = vld [vmem:[%s2898 + $0x38] sm:$0xff]
      %v2907 = vld [vmem:[%s2898 + $0x40] sm:$0xff]
      %v2908 = vld [vmem:[%s2898 + $0x48] sm:$0xff]
      %v2909 = vld [vmem:[%s2898 + $0x50] sm:$0xff]
      %v2910 = vld [vmem:[%s2898 + $0x58] sm:$0xff]
      %v2911 = vld [vmem:[%s2898 + $0x60] sm:$0xff]
      %v2912 = vld [vmem:[%s2898 + $0x68] sm:$0xff]
      %v2913 = vld [vmem:[%s2898 + $0x70] sm:$0xff]
      %v2914 = vld [vmem:[%s2898 + $0x78] sm:$0xff]
      %v2915 = vld [vmem:[%s2898 + $0x80] sm:$0xff]
      %v2916 = vld [vmem:[%s2898 + $0x88] sm:$0xff]
      %v2917 = vld [vmem:[%s2898 + $0x90] sm:$0xff]
      %v2918 = vld [vmem:[%s2898 + $0x98] sm:$0xff]
      %v2919 = vld [vmem:[%s2898 + $0xa0] sm:$0xff]
      %v2920 = vld [vmem:[%s2898 + $0xa8] sm:$0xff]
      %v2921 = vld [vmem:[%s2898 + $0xb0] sm:$0xff]
      %v2922 = vld [vmem:[%s2898 + $0xb8] sm:$0xff]
      %v2923 = vld [vmem:[%s2898 + $0xc0] sm:$0xff]
      %v2924 = vld [vmem:[%s2898 + $0xc8] sm:$0xff]
      %v2925 = vld [vmem:[%s2898 + $0xd0] sm:$0xff]
      %v2926 = vld [vmem:[%s2898 + $0xd8] sm:$0xff]
      %v2927 = vld [vmem:[%s2898 + $0xe0] sm:$0xff]
      %v2928 = vld [vmem:[%s2898 + $0xe8] sm:$0xff]
      %v2929 = vld [vmem:[%s2898 + $0xf0] sm:$0xff]
      %v2930 = vld [vmem:[%s2898 + $0xf8] sm:$0xff]
      %v2931 = vld [vmem:[%s2898 + $0x100] sm:$0xff]
      %v2932 = vld [vmem:[%s2898 + $0x108] sm:$0xff]
      %v2933 = vld [vmem:[%s2898 + $0x110] sm:$0xff]
      %v2934 = vld [vmem:[%s2898 + $0x118] sm:$0xff]
      %v2935 = vld [vmem:[%s2898 + $0x120] sm:$0xff]
      %v2936 = vld [vmem:[%s2898 + $0x128] sm:$0xff]
      %v2937 = vld [vmem:[%s2898 + $0x130] sm:$0xff]
      %v2938 = vld [vmem:[%s2898 + $0x138] sm:$0xff]
      %v2939 = vld [vmem:[%s2898 + $0x140] sm:$0xff]
      %v2940 = vld [vmem:[%s2898 + $0x148] sm:$0xff]
      %v2941 = vld [vmem:[%s2898 + $0x150] sm:$0xff]
      %v2942 = vld [vmem:[%s2898 + $0x158] sm:$0xff]
      %v2943 = vld [vmem:[%s2898 + $0x160] sm:$0xff]
      %v2944 = vld [vmem:[%s2898 + $0x168] sm:$0xff]
      %v2945 = vld [vmem:[%s2898 + $0x170] sm:$0xff]
      %v2946 = vld [vmem:[%s2898 + $0x178] sm:$0xff]
      %v2947 = vld [vmem:[%s2898 + $0x180] sm:$0xff]
      %v2948 = vld [vmem:[%s2898 + $0x188] sm:$0xff]
      %v2949 = vld [vmem:[%s2898 + $0x190] sm:$0xff]
      %v2950 = vld [vmem:[%s2898 + $0x198] sm:$0xff]
      %v2951 = vld [vmem:[%s2898 + $0x1a0] sm:$0xff]
      %v2952 = vld [vmem:[%s2898 + $0x1a8] sm:$0xff]
      %v2953 = vld [vmem:[%s2898 + $0x1b0] sm:$0xff]
      %v2954 = vld [vmem:[%s2898 + $0x1b8] sm:$0xff]
      %v2955 = vld [vmem:[%s2898 + $0x1c0] sm:$0xff]
      %v2956 = vld [vmem:[%s2898 + $0x1c8] sm:$0xff]
      %v2957 = vld [vmem:[%s2898 + $0x1d0] sm:$0xff]
      %v2958 = vld [vmem:[%s2898 + $0x1d8] sm:$0xff]
      %v2959 = vld [vmem:[%s2898 + $0x1e0] sm:$0xff]
      %v2960 = vld [vmem:[%s2898 + $0x1e8] sm:$0xff]
      %v2961 = vld [vmem:[%s2898 + $0x1f0] sm:$0xff]
      %v2962 = vld [vmem:[%s2898 + $0x1f8] sm:$0xff]
      %2963 = vmatpush.msra.mxu0 %v2929
      %2964 = vmatpush.msra.mxu0 %v2927
      %2965 = vmatpush.msra.mxu0 %v2925
      %2966 = vmatpush.msra.mxu0 %v2923
      %2967 = vmatpush.msra.mxu0 %v2921
      %2968 = vmatpush.msra.mxu0 %v2919
      %2969 = vmatpush.msra.mxu0 %v2917
      %2970 = vmatpush.msra.mxu0 %v2915
      %2971 = vmatpush.msra.mxu0 %v2913
      %2972 = vmatpush.msra.mxu0 %v2911
      %2973 = vmatpush.msra.mxu0 %v2909
      %2974 = vmatpush.msra.mxu0 %v2907
      %2975 = vmatpush.msra.mxu0 %v2905
      %2976 = vmatpush.msra.mxu0 %v2903
      %2977 = vmatpush.msra.mxu0 %v2901
      %2978 = vmatpush.msra.mxu0 %v2899
      %2979 = vmatmul.f32.gmra.mxu0 %v947
      %v2980 = vpop.f32.mrf.mxu0
      %v2981 = vadd.f32 0.0, %v2980
      %2982 = vmatmul.f32.gmra.mxu0 %v1233
      %v2983 = vpop.f32.mrf.mxu0
      %v2984 = vadd.f32 0.0, %v2983
      %2985 = vmatmul.f32.gmra.mxu0 %v1525
      %v2986 = vpop.f32.mrf.mxu0
      %v2987 = vadd.f32 0.0, %v2986
      %2988 = vdwg.mxu0
      %2989 = vmatpush.msra.mxu0 %v2961
      %2990 = vmatpush.msra.mxu0 %v2959
      %2991 = vmatpush.msra.mxu0 %v2957
      %2992 = vmatpush.msra.mxu0 %v2955
      %2993 = vmatpush.msra.mxu0 %v2953
      %2994 = vmatpush.msra.mxu0 %v2951
      %2995 = vmatpush.msra.mxu0 %v2949
      %2996 = vmatpush.msra.mxu0 %v2947
      %2997 = vmatpush.msra.mxu0 %v2945
      %2998 = vmatpush.msra.mxu0 %v2943
      %2999 = vmatpush.msra.mxu0 %v2941
      %3000 = vmatpush.msra.mxu0 %v2939
      %3001 = vmatpush.msra.mxu0 %v2937
      %3002 = vmatpush.msra.mxu0 %v2935
      %3003 = vmatpush.msra.mxu0 %v2933
      %3004 = vmatpush.msra.mxu0 %v2931
      %3005 = vmatmul.f32.gmra.mxu0 %v967
      %v3006 = vpop.f32.mrf.mxu0
      %v3007 = vadd.f32 %v2981, %v3006
      %3008 = vmatmul.f32.gmra.mxu0 %v1253
      %v3009 = vpop.f32.mrf.mxu0
      %v3010 = vadd.f32 %v2984, %v3009
      %3011 = vmatmul.f32.gmra.mxu0 %v1545
      %v3012 = vpop.f32.mrf.mxu0
      %v3013 = vadd.f32 %v2987, %v3012
      %3014 = vdwg.mxu0
      %3015 = vmatpush.msra.mxu0 %v2930
      %3016 = vmatpush.msra.mxu0 %v2928
      %3017 = vmatpush.msra.mxu0 %v2926
      %3018 = vmatpush.msra.mxu0 %v2924
      %3019 = vmatpush.msra.mxu0 %v2922
      %3020 = vmatpush.msra.mxu0 %v2920
      %3021 = vmatpush.msra.mxu0 %v2918
      %3022 = vmatpush.msra.mxu0 %v2916
      %3023 = vmatpush.msra.mxu0 %v2914
      %3024 = vmatpush.msra.mxu0 %v2912
      %3025 = vmatpush.msra.mxu0 %v2910
      %3026 = vmatpush.msra.mxu0 %v2908
      %3027 = vmatpush.msra.mxu0 %v2906
      %3028 = vmatpush.msra.mxu0 %v2904
      %3029 = vmatpush.msra.mxu0 %v2902
      %3030 = vmatpush.msra.mxu0 %v2900
      %3031 = vmatmul.f32.gmra.mxu0 %v947
      %v3032 = vpop.f32.mrf.mxu0
      %v3033 = vadd.f32 0.0, %v3032
      %3034 = vmatmul.f32.gmra.mxu0 %v1233
      %v3035 = vpop.f32.mrf.mxu0
      %v3036 = vadd.f32 0.0, %v3035
      %3037 = vmatmul.f32.gmra.mxu0 %v1525
      %v3038 = vpop.f32.mrf.mxu0
      %v3039 = vadd.f32 0.0, %v3038
      %3040 = vdwg.mxu0
      %3041 = vmatpush.msra.mxu0 %v2962
      %3042 = vmatpush.msra.mxu0 %v2960
      %3043 = vmatpush.msra.mxu0 %v2958
      %3044 = vmatpush.msra.mxu0 %v2956
      %3045 = vmatpush.msra.mxu0 %v2954
      %3046 = vmatpush.msra.mxu0 %v2952
      %3047 = vmatpush.msra.mxu0 %v2950
      %3048 = vmatpush.msra.mxu0 %v2948
      %3049 = vmatpush.msra.mxu0 %v2946
      %3050 = vmatpush.msra.mxu0 %v2944
      %3051 = vmatpush.msra.mxu0 %v2942
      %3052 = vmatpush.msra.mxu0 %v2940
      %3053 = vmatpush.msra.mxu0 %v2938
      %3054 = vmatpush.msra.mxu0 %v2936
      %3055 = vmatpush.msra.mxu0 %v2934
      %3056 = vmatpush.msra.mxu0 %v2932
      %3057 = vmatmul.f32.gmra.mxu0 %v967
      %v3058 = vpop.f32.mrf.mxu0
      %v3059 = vadd.f32 %v3033, %v3058
      %3060 = vmatmul.f32.gmra.mxu0 %v1253
      %v3061 = vpop.f32.mrf.mxu0
      %v3062 = vadd.f32 %v3036, %v3061
      %3063 = vmatmul.f32.gmra.mxu0 %v1545
      %v3064 = vpop.f32.mrf.mxu0
      %v3065 = vadd.f32 %v3039, %v3064
      %3066 = vdwg.mxu0
      %v3067 = vld [vmem:[%s16] sm:$0xff]
      %v3068 = vld [vmem:[%s16 + $0x8] sm:$0xff]
      %v3069 = vld [vmem:[%s17] sm:$0xff]
      %3071 = vset.pattern.permute.xlu0 0
      %3072 = vperm.xlu0 %3071, %v3069
      %v3073 = vpop.permute.xlu0 %3072
      %vm3075 = vcmask 719872
      %v3077 = vsel %vm3075, %v3068, 0
      %3079 = vmatpush.msra.mxu0 %v2500
      %3080 = vmatpush.msra.mxu0 %v2337
      %3081 = vmatpush.msra.mxu0 %v2334
      %3082 = vmatpush.msra.mxu0 %v2331
      %3083 = vmatpush.msra.mxu0 %v2168
      %3084 = vmatpush.msra.mxu0 %v2165
      %3085 = vmatpush.msra.mxu0 %v2162
      %3086 = vmatpush.msra.mxu0 %v1999
      %3087 = vmatpush.msra.mxu0 %v1996
      %3088 = vmatpush.msra.mxu0 %v1993
      %3089 = vmatpush.msra.mxu0 %v1830
      %3090 = vmatpush.msra.mxu0 %v1827
      %3091 = vmatpush.msra.mxu0 %v1824
      %3092 = vmatpush.msra.mxu0 %v1661
      %3093 = vmatpush.msra.mxu0 %v1658
      %3094 = vmatpush.msra.mxu0 %v1655
      %3095 = vmatmul.f32.gmra.mxu0 %v3067
      %v3096 = vpop.f32.mrf.mxu0
      %v3097 = vadd.f32 %v3073, %v3096
      %3098 = vdwg.mxu0
      %3099 = vmatpush.msra.mxu0 0.0
      %3100 = vmatpush.msra.mxu0 0.0
      %3101 = vmatpush.msra.mxu0 0.0
      %3102 = vmatpush.msra.mxu0 0.0
      %3103 = vmatpush.msra.mxu0 0.0
      %3104 = vmatpush.msra.mxu0 %v3013
      %3105 = vmatpush.msra.mxu0 %v3010
      %3106 = vmatpush.msra.mxu0 %v3007
      %3107 = vmatpush.msra.mxu0 %v2844
      %3108 = vmatpush.msra.mxu0 %v2841
      %3109 = vmatpush.msra.mxu0 %v2838
      %3110 = vmatpush.msra.mxu0 %v2675
      %3111 = vmatpush.msra.mxu0 %v2672
      %3112 = vmatpush.msra.mxu0 %v2669
      %3113 = vmatpush.msra.mxu0 %v2506
      %3114 = vmatpush.msra.mxu0 %v2503
      %3115 = vmatmul.f32.gmra.mxu0 %v3077
      %v3116 = vpop.f32.mrf.mxu0
      %v3117 = vadd.f32 %v3097, %v3116
      %3118 = vdwg.mxu0
      %3119 = vmatpush.msra.mxu0 %v2552
      %3120 = vmatpush.msra.mxu0 %v2389
      %3121 = vmatpush.msra.mxu0 %v2386
      %3122 = vmatpush.msra.mxu0 %v2383
      %3123 = vmatpush.msra.mxu0 %v2220
      %3124 = vmatpush.msra.mxu0 %v2217
      %3125 = vmatpush.msra.mxu0 %v2214
      %3126 = vmatpush.msra.mxu0 %v2051
      %3127 = vmatpush.msra.mxu0 %v2048
      %3128 = vmatpush.msra.mxu0 %v2045
      %3129 = vmatpush.msra.mxu0 %v1882
      %3130 = vmatpush.msra.mxu0 %v1879
      %3131 = vmatpush.msra.mxu0 %v1876
      %3132 = vmatpush.msra.mxu0 %v1713
      %3133 = vmatpush.msra.mxu0 %v1710
      %3134 = vmatpush.msra.mxu0 %v1707
      %3135 = vmatmul.f32.gmra.mxu0 %v3067
      %v3136 = vpop.f32.mrf.mxu0
      %v3137 = vadd.f32 %v3073, %v3136
      %3138 = vdwg.mxu0
      %3139 = vmatpush.msra.mxu0 0.0
      %3140 = vmatpush.msra.mxu0 0.0
      %3141 = vmatpush.msra.mxu0 0.0
      %3142 = vmatpush.msra.mxu0 0.0
      %3143 = vmatpush.msra.mxu0 0.0
      %3144 = vmatpush.msra.mxu0 %v3065
      %3145 = vmatpush.msra.mxu0 %v3062
      %3146 = vmatpush.msra.mxu0 %v3059
      %3147 = vmatpush.msra.mxu0 %v2896
      %3148 = vmatpush.msra.mxu0 %v2893
      %3149 = vmatpush.msra.mxu0 %v2890
      %3150 = vmatpush.msra.mxu0 %v2727
      %3151 = vmatpush.msra.mxu0 %v2724
      %3152 = vmatpush.msra.mxu0 %v2721
      %3153 = vmatpush.msra.mxu0 %v2558
      %3154 = vmatpush.msra.mxu0 %v2555
      %3155 = vmatmul.f32.gmra.mxu0 %v3077
      %v3156 = vpop.f32.mrf.mxu0
      %v3157 = vadd.f32 %v3137, %v3156
      %3158 = vdwg.mxu0
      %v3159 = vadd.f32 %v3117, %v3157
      %3160 = vadd.xlane.f32.xlu0 %v3159
      %v3161 = vpop.xlane.xlu0 %3160
      %v3162 = vrot.slane %v3161, 4
      %v3163 = vadd.f32 %v3161, %v3162
      %v3164 = vrot.slane %v3163, 2
      %v3165 = vadd.f32 %v3163, %v3164
      %v3166 = vrot.slane %v3165, 1
      %v3167 = vadd.f32 %v3165, %v3166
      %s3168 = vtos %v3167
      %v3169 = vrcp.pop 2048.0
      %v3170 = vmul.f32 2048.0, %v3169
      %v3171 = vsub.f32 1.0, %v3170
      %v3172 = vmul.f32 %v3169, %v3171
      %v3173 = vadd.f32 %v3169, %v3172
      %vm3174 = vweird.f32 %v3169
      %v3175 = vsel %vm3174, %v3169, %v3173
      %s3176 = vtos %v3175
      %s3177 = smul.f32 %s3168, %s3176
      %v3178 = vstv %s3177
      %v3179 = vsub.f32 %v3117, %v3178
      %v3180 = vsub.f32 %v3157, %v3178
      %v3181 = vmul.f32 %v3179, %v3179
      %v3182 = vmul.f32 %v3180, %v3180
      %v3183 = vadd.f32 %v3181, %v3182
      %3184 = vadd.xlane.f32.xlu0 %v3183
      %v3185 = vpop.xlane.xlu0 %3184
      %v3186 = vrot.slane %v3185, 4
      %v3187 = vadd.f32 %v3185, %v3186
      %v3188 = vrot.slane %v3187, 2
      %v3189 = vadd.f32 %v3187, %v3188
      %v3190 = vrot.slane %v3189, 1
      %v3191 = vadd.f32 %v3189, %v3190
      %s3192 = vtos %v3191
      %v3193 = vrcp.pop 2048.0
      %v3194 = vmul.f32 2048.0, %v3193
      %v3195 = vsub.f32 1.0, %v3194
      %v3196 = vmul.f32 %v3193, %v3195
      %v3197 = vadd.f32 %v3193, %v3196
      %vm3198 = vweird.f32 %v3193
      %v3199 = vsel %vm3198, %v3193, %v3197
      %s3200 = vtos %v3199
      %s3201 = smul.f32 %s3192, %s3200
      %s3202 = sadd.f32 %s3201, 1e-05
      %v3203 = vstv %s3202
      %v3204 = vrsqrt.pop %v3203
      %v3205 = vmul.f32 %v3204, %v3203
      %v3206 = vmul.f32 %v3205, %v3204
      %v3207 = vmul.f32 0.5, %v3206
      %v3208 = vsub.f32 1.5, %v3207
      %v3209 = vmul.f32 %v3204, %v3208
      %vm3210 = vweird.f32 %v3203
      %vm3211 = vweird.f32 %v3204
      %vm3212 = vmor %vm3210, %vm3211
      %v3213 = vsel %vm3212, %v3204, %v3209
      %s3214 = vtos %v3213
      %v3215 = vstv %s3214
      %v3216 = vmul.f32 %v3179, %v3215
      %v3217 = vmul.f32 %v3180, %v3215
      %3218 = vset.pattern.permute.xlu0 1
      %3219 = vperm.xlu0 %3218, %v3069
      %v3220 = vpop.permute.xlu0 %3219
      %v3222 = vmul.f32 %v3216, %v3220
      %v3223 = vmul.f32 %v3217, %v3220
      %3224 = vset.pattern.permute.xlu0 2
      %3225 = vperm.xlu0 %3224, %v3069
      %v3226 = vpop.permute.xlu0 %3225
      %v3228 = vadd.f32 %v3222, %v3226
      %v3229 = vadd.f32 %v3223, %v3226
      %v3230 = vmax.f32 %v3228, 0.0
      %v3231 = vmax.f32 %v3229, 0.0
      %v3232 = vadd.f32 %v3230, %v3231
      %3233 = vadd.xlane.f32.xlu0 %v3232
      %v3234 = vpop.xlane.xlu0 %3233
      %v3235 = vrcp.pop 256.0
      %v3236 = vmul.f32 256.0, %v3235
      %v3237 = vsub.f32 1.0, %v3236
      %v3238 = vmul.f32 %v3235, %v3237
      %v3239 = vadd.f32 %v3235, %v3238
      %vm3240 = vweird.f32 %v3235
      %v3241 = vsel %vm3240, %v3235, %v3239
      %v3242 = vmul.f32 %v3234, %v3241
      %v3243 = vld [vmem:[%s18] sm:$0xff]
      %3244 = vrot.lane.b32.xlu0 %v3069, 125
      %v3245 = vpop.permute.xlu0 %3244
      %v3248 = vsel %vm861, %v3243, 0
      %3250 = vmatpush.msra.mxu0 0.0
      %3251 = vmatpush.msra.mxu0 0.0
      %3252 = vmatpush.msra.mxu0 0.0
      %3253 = vmatpush.msra.mxu0 0.0
      %3254 = vmatpush.msra.mxu0 0.0
      %3255 = vmatpush.msra.mxu0 0.0
      %3256 = vmatpush.msra.mxu0 0.0
      %3257 = vmatpush.msra.mxu0 0.0
      %3258 = vmatpush.msra.mxu0 0.0
      %3259 = vmatpush.msra.mxu0 0.0
      %3260 = vmatpush.msra.mxu0 0.0
      %3261 = vmatpush.msra.mxu0 0.0
      %3262 = vmatpush.msra.mxu0 0.0
      %3263 = vmatpush.msra.mxu0 0.0
      %3264 = vmatpush.msra.mxu0 0.0
      %3265 = vmatpush.msra.mxu0 %v3242
      %3266 = vmatmul.f32.gmra.mxu0 %v3248
      %v3267 = vpop.f32.mrf.mxu0
      %v3268 = vadd.f32 %v3245, %v3267
      %3269 = vdwg.mxu0
      %v3270 = vxor.u32 %v3268, 2147483648
      %v3271 = vmul.f32 %v3270, 1.442695
      %v3272 = vpow.pop %v3271
      %v3273 = vadd.f32 %v3272, 1.0
      %v3274 = vrcp.pop %v3273
      %v3275 = vmul.f32 %v3273, %v3274
      %v3276 = vsub.f32 1.0, %v3275
      %v3277 = vmul.f32 %v3274, %v3276
      %v3278 = vadd.f32 %v3274, %v3277
      %vm3279 = vweird.f32 %v3273
      %vm3280 = vweird.f32 %v3274
      %vm3281 = vmor %vm3279, %vm3280
      %v3282 = vsel %vm3281, %v3274, %v3278
      %v3283 = vand.u32 2147483647, %v3273
      %vm3284 = vcmp.eq.f32.partialorder %v3283, 8.507059e+37
      %v3285 = vand.u32 %v3273, 2147483648
      %v3286 = vor.u32 1.1754944e-38, %v3285
      %v3287 = vsel %vm3284, %v3286, %v3282
      %v3288 = vmul.f32 1.0, %v3287
      %3290 = vset.pattern.permute.xlu0 0
      %3291 = vperm.xlu0 %3290, %v3288
      %v3292 = vpop.permute.xlu0 %3291
      %v3294 = vmul.f32 %v3230, %v3292
      %v3295 = vmul.f32 %v3231, %v3292
      %v3296 = vadd.f32 %v3294, %v3295
      %3297 = vadd.xlane.f32.xlu0 %v3296
      %v3298 = vpop.xlane.xlu0 %3297
      %v3299 = vmul.f32 %v3298, %v3241
      %v3300 = vsub.f32 %v3294, %v3299
      %v3301 = vsub.f32 %v3295, %v3299
      %3302 = vst [vmem:[%s703] sm:$0xff] %v3300
      %3303 = vst [vmem:[%s703 + $0x8] sm:$0xff] %v3301
      %v3304 = vrot.slane %v3300, 4
      %v3305 = vadd.f32 %v3300, %v3304
      %v3306 = vrot.slane %v3305, 2
      %v3307 = vadd.f32 %v3305, %v3306
      %v3308 = vrot.slane %v3307, 1
      %v3309 = vadd.f32 %v3307, %v3308
      %v3310 = vrot.slane %v3301, 4
      %v3311 = vadd.f32 %v3301, %v3310
      %v3312 = vrot.slane %v3311, 2
      %v3313 = vadd.f32 %v3311, %v3312
      %v3314 = vrot.slane %v3313, 1
      %v3315 = vadd.f32 %v3313, %v3314
      %v3316 = vlaneseq
      %v3317 = vand.u32 %v3316, 127
      %v3318 = vadd.s32 %v3317, 128
      %vm3319 = vcmp.eq.s32.totalorder %v3317, 0
      %vm3320 = vcmp.eq.s32.totalorder %v3318, 0
      %vm3321 = vcmp.eq.s32.totalorder %v3317, 240
      %vm3322 = vcmp.eq.s32.totalorder %v3318, 240
      %vm3323 = vmor %vm3319, %vm3321
      %vm3324 = vmor %vm3320, %vm3322
      %vm3325 = vcmp.eq.s32.totalorder %v3317, 255
      %vm3326 = vcmp.eq.s32.totalorder %v3318, 255
      %vm3327 = vmor %vm3323, %vm3325
      %vm3328 = vmor %vm3324, %vm3326
      %vm3329 = vcmp.eq.s32.totalorder %v3317, 15
      %vm3330 = vcmp.eq.s32.totalorder %v3318, 15
      %vm3331 = vmor %vm3327, %vm3329
      %vm3332 = vmor %vm3328, %vm3330
      %vm3333 = vcmp.gt.f32.partialorder %v3309, 0.0
      %vm3334 = vcmp.gt.f32.partialorder %v3315, 0.0
      %vm3335 = vmand %vm3331, %vm3333
      %vm3336 = vmand %vm3332, %vm3334
      %v3337 = vsel %vm3335, 1.0, 0.0
      %v3338 = vsel %vm3336, 1.0, 0.0
      %vm3339 = vcmask 1040384
      %v3340 = vsel %vm3339, %v3337, 0.0
      %v3341 = vsel %vm3339, %v3338, 0.0
      %v3342 = vadd.f32 %v3340, %v3341
      %3343 = vadd.xlane.f32.xlu0 %v3342
      %v3344 = vpop.xlane.xlu0 %3343
      %v3345 = vrot.slane %v3344, 4
      %v3346 = vadd.f32 %v3344, %v3345
      %v3347 = vrot.slane %v3346, 2
      %v3348 = vadd.f32 %v3346, %v3347
      %v3349 = vrot.slane %v3348, 1
      %v3350 = vadd.f32 %v3348, %v3349
      %s3351 = vtos %v3350
      %p3352 = scmp.lt.f32.partialorder %s3351, 2.0
      %s3353 = scalar_select %p3352, 1, 0
      %s3354 = scvt.s32.f32 %s3353
      %s3355 = smul.f32 %s3354, 2.0
      %s3356 = ssub.f32 %s3355, 1.0
      %v3357 = vstv %s3356
      %v3358 = vmul.f32 %v3309, %v3357
      %v3359 = vmul.f32 %v3315, %v3357
      %v3360 = vld [vmem:[%s19] sm:$0xff]
      %v3361 = vld [vmem:[%s19 + $0x8] sm:$0xff]
      %v3362 = vld [vmem:[%s19 + $0x10] sm:$0xff]
      %v3363 = vld [vmem:[%s19 + $0x18] sm:$0xff]
      %v3364 = vld [vmem:[%s19 + $0x20] sm:$0xff]
      %v3365 = vld [vmem:[%s19 + $0x28] sm:$0xff]
      %v3366 = vld [vmem:[%s19 + $0x30] sm:$0xff]
      %v3367 = vld [vmem:[%s19 + $0x38] sm:$0xff]
      %v3368 = vld [vmem:[%s19 + $0x40] sm:$0xff]
      %v3369 = vld [vmem:[%s19 + $0x48] sm:$0xff]
      %v3370 = vld [vmem:[%s19 + $0x50] sm:$0xff]
      %v3371 = vld [vmem:[%s19 + $0x58] sm:$0xff]
      %v3372 = vld [vmem:[%s19 + $0x60] sm:$0xff]
      %v3373 = vld [vmem:[%s19 + $0x68] sm:$0xff]
      %v3374 = vld [vmem:[%s19 + $0x70] sm:$0xff]
      %v3375 = vld [vmem:[%s19 + $0x78] sm:$0xff]
      %v3376 = vld [vmem:[%s19 + $0x80] sm:$0xff]
      %v3377 = vld [vmem:[%s19 + $0x88] sm:$0xff]
      %v3378 = vld [vmem:[%s19 + $0x90] sm:$0xff]
      %v3379 = vld [vmem:[%s19 + $0x98] sm:$0xff]
      %v3380 = vld [vmem:[%s19 + $0xa0] sm:$0xff]
      %v3381 = vld [vmem:[%s19 + $0xa8] sm:$0xff]
      %v3382 = vld [vmem:[%s19 + $0xb0] sm:$0xff]
      %v3383 = vld [vmem:[%s19 + $0xb8] sm:$0xff]
      %v3384 = vld [vmem:[%s19 + $0xc0] sm:$0xff]
      %v3385 = vld [vmem:[%s19 + $0xc8] sm:$0xff]
      %v3386 = vld [vmem:[%s19 + $0xd0] sm:$0xff]
      %v3387 = vld [vmem:[%s19 + $0xd8] sm:$0xff]
      %v3388 = vld [vmem:[%s19 + $0xe0] sm:$0xff]
      %v3389 = vld [vmem:[%s19 + $0xe8] sm:$0xff]
      %v3390 = vld [vmem:[%s19 + $0xf0] sm:$0xff]
      %v3391 = vld [vmem:[%s19 + $0xf8] sm:$0xff]
      %v3392 = vld [vmem:[%s19 + $0x100] sm:$0xff]
      %v3393 = vld [vmem:[%s19 + $0x108] sm:$0xff]
      %v3394 = vld [vmem:[%s19 + $0x110] sm:$0xff]
      %v3395 = vld [vmem:[%s19 + $0x118] sm:$0xff]
      %v3396 = vld [vmem:[%s19 + $0x120] sm:$0xff]
      %v3397 = vld [vmem:[%s19 + $0x128] sm:$0xff]
      %v3398 = vld [vmem:[%s19 + $0x130] sm:$0xff]
      %v3399 = vld [vmem:[%s19 + $0x138] sm:$0xff]
      %v3400 = vld [vmem:[%s19 + $0x140] sm:$0xff]
      %v3401 = vld [vmem:[%s19 + $0x148] sm:$0xff]
      %v3402 = vld [vmem:[%s19 + $0x150] sm:$0xff]
      %v3403 = vld [vmem:[%s19 + $0x158] sm:$0xff]
      %v3404 = vld [vmem:[%s19 + $0x160] sm:$0xff]
      %v3405 = vld [vmem:[%s19 + $0x168] sm:$0xff]
      %v3406 = vld [vmem:[%s19 + $0x170] sm:$0xff]
      %v3407 = vld [vmem:[%s19 + $0x178] sm:$0xff]
      %v3408 = vld [vmem:[%s19 + $0x180] sm:$0xff]
      %v3409 = vld [vmem:[%s19 + $0x188] sm:$0xff]
      %v3410 = vld [vmem:[%s19 + $0x190] sm:$0xff]
      %v3411 = vld [vmem:[%s19 + $0x198] sm:$0xff]
      %v3412 = vld [vmem:[%s19 + $0x1a0] sm:$0xff]
      %v3413 = vld [vmem:[%s19 + $0x1a8] sm:$0xff]
      %v3414 = vld [vmem:[%s19 + $0x1b0] sm:$0xff]
      %v3415 = vld [vmem:[%s19 + $0x1b8] sm:$0xff]
      %v3416 = vld [vmem:[%s19 + $0x1c0] sm:$0xff]
      %v3417 = vld [vmem:[%s19 + $0x1c8] sm:$0xff]
      %v3418 = vld [vmem:[%s19 + $0x1d0] sm:$0xff]
      %v3419 = vld [vmem:[%s19 + $0x1d8] sm:$0xff]
      %v3420 = vld [vmem:[%s19 + $0x1e0] sm:$0xff]
      %v3421 = vld [vmem:[%s19 + $0x1e8] sm:$0xff]
      %v3422 = vld [vmem:[%s19 + $0x1f0] sm:$0xff]
      %v3423 = vld [vmem:[%s19 + $0x1f8] sm:$0xff]
      %v3424 = vld [vmem:[%s19 + $0x200] sm:$0xff]
      %v3425 = vld [vmem:[%s19 + $0x208] sm:$0xff]
      %v3426 = vld [vmem:[%s19 + $0x210] sm:$0xff]
      %v3427 = vld [vmem:[%s19 + $0x218] sm:$0xff]
      %v3428 = vld [vmem:[%s19 + $0x220] sm:$0xff]
      %v3429 = vld [vmem:[%s19 + $0x228] sm:$0xff]
      %v3430 = vld [vmem:[%s19 + $0x230] sm:$0xff]
      %v3431 = vld [vmem:[%s19 + $0x238] sm:$0xff]
      %v3432 = vld [vmem:[%s19 + $0x240] sm:$0xff]
      %v3433 = vld [vmem:[%s19 + $0x248] sm:$0xff]
      %v3434 = vld [vmem:[%s19 + $0x250] sm:$0xff]
      %v3435 = vld [vmem:[%s19 + $0x258] sm:$0xff]
      %v3436 = vld [vmem:[%s19 + $0x260] sm:$0xff]
      %v3437 = vld [vmem:[%s19 + $0x268] sm:$0xff]
      %v3438 = vld [vmem:[%s19 + $0x270] sm:$0xff]
      %v3439 = vld [vmem:[%s19 + $0x278] sm:$0xff]
      %v3440 = vld [vmem:[%s19 + $0x280] sm:$0xff]
      %v3441 = vld [vmem:[%s19 + $0x288] sm:$0xff]
      %v3442 = vld [vmem:[%s19 + $0x290] sm:$0xff]
      %v3443 = vld [vmem:[%s19 + $0x298] sm:$0xff]
      %v3444 = vld [vmem:[%s19 + $0x2a0] sm:$0xff]
      %v3445 = vld [vmem:[%s19 + $0x2a8] sm:$0xff]
      %v3446 = vld [vmem:[%s19 + $0x2b0] sm:$0xff]
      %v3447 = vld [vmem:[%s19 + $0x2b8] sm:$0xff]
      %v3448 = vld [vmem:[%s19 + $0x2c0] sm:$0xff]
      %v3449 = vld [vmem:[%s19 + $0x2c8] sm:$0xff]
      %v3450 = vld [vmem:[%s19 + $0x2d0] sm:$0xff]
      %v3451 = vld [vmem:[%s19 + $0x2d8] sm:$0xff]
      %v3452 = vld [vmem:[%s19 + $0x2e0] sm:$0xff]
      %v3453 = vld [vmem:[%s19 + $0x2e8] sm:$0xff]
      %v3454 = vld [vmem:[%s19 + $0x2f0] sm:$0xff]
      %v3455 = vld [vmem:[%s19 + $0x2f8] sm:$0xff]
      %v3456 = vld [vmem:[%s19 + $0x300] sm:$0xff]
      %v3457 = vld [vmem:[%s19 + $0x308] sm:$0xff]
      %v3458 = vld [vmem:[%s19 + $0x310] sm:$0xff]
      %v3459 = vld [vmem:[%s19 + $0x318] sm:$0xff]
      %v3460 = vld [vmem:[%s19 + $0x320] sm:$0xff]
      %v3461 = vld [vmem:[%s19 + $0x328] sm:$0xff]
      %v3462 = vld [vmem:[%s19 + $0x330] sm:$0xff]
      %v3463 = vld [vmem:[%s19 + $0x338] sm:$0xff]
      %v3464 = vld [vmem:[%s19 + $0x340] sm:$0xff]
      %v3465 = vld [vmem:[%s19 + $0x348] sm:$0xff]
      %v3466 = vld [vmem:[%s19 + $0x350] sm:$0xff]
      %v3467 = vld [vmem:[%s19 + $0x358] sm:$0xff]
      %v3468 = vld [vmem:[%s19 + $0x360] sm:$0xff]
      %v3469 = vld [vmem:[%s19 + $0x368] sm:$0xff]
      %v3470 = vld [vmem:[%s19 + $0x370] sm:$0xff]
      %v3471 = vld [vmem:[%s19 + $0x378] sm:$0xff]
      %v3472 = vld [vmem:[%s19 + $0x380] sm:$0xff]
      %v3473 = vld [vmem:[%s19 + $0x388] sm:$0xff]
      %v3474 = vld [vmem:[%s19 + $0x390] sm:$0xff]
      %v3475 = vld [vmem:[%s19 + $0x398] sm:$0xff]
      %v3476 = vld [vmem:[%s19 + $0x3a0] sm:$0xff]
      %v3477 = vld [vmem:[%s19 + $0x3a8] sm:$0xff]
      %v3478 = vld [vmem:[%s19 + $0x3b0] sm:$0xff]
      %v3479 = vld [vmem:[%s19 + $0x3b8] sm:$0xff]
      %v3480 = vld [vmem:[%s19 + $0x3c0] sm:$0xff]
      %v3481 = vld [vmem:[%s19 + $0x3c8] sm:$0xff]
      %v3482 = vld [vmem:[%s19 + $0x3d0] sm:$0xff]
      %v3483 = vld [vmem:[%s19 + $0x3d8] sm:$0xff]
      %v3484 = vld [vmem:[%s19 + $0x3e0] sm:$0xff]
      %v3485 = vld [vmem:[%s19 + $0x3e8] sm:$0xff]
      %v3486 = vld [vmem:[%s19 + $0x3f0] sm:$0xff]
      %v3487 = vld [vmem:[%s19 + $0x3f8] sm:$0xff]
      %v3488 = vld [vmem:[%s19 + $0x400] sm:$0xff]
      %v3489 = vld [vmem:[%s19 + $0x408] sm:$0xff]
      %v3490 = vld [vmem:[%s19 + $0x410] sm:$0xff]
      %v3491 = vld [vmem:[%s19 + $0x418] sm:$0xff]
      %v3492 = vld [vmem:[%s19 + $0x420] sm:$0xff]
      %v3493 = vld [vmem:[%s19 + $0x428] sm:$0xff]
      %v3494 = vld [vmem:[%s19 + $0x430] sm:$0xff]
      %v3495 = vld [vmem:[%s19 + $0x438] sm:$0xff]
      %v3496 = vld [vmem:[%s19 + $0x440] sm:$0xff]
      %v3497 = vld [vmem:[%s19 + $0x448] sm:$0xff]
      %v3498 = vld [vmem:[%s19 + $0x450] sm:$0xff]
      %v3499 = vld [vmem:[%s19 + $0x458] sm:$0xff]
      %v3500 = vld [vmem:[%s19 + $0x460] sm:$0xff]
      %v3501 = vld [vmem:[%s19 + $0x468] sm:$0xff]
      %v3502 = vld [vmem:[%s19 + $0x470] sm:$0xff]
      %v3503 = vld [vmem:[%s19 + $0x478] sm:$0xff]
      %v3504 = vld [vmem:[%s19 + $0x480] sm:$0xff]
      %v3505 = vld [vmem:[%s19 + $0x488] sm:$0xff]
      %v3506 = vld [vmem:[%s19 + $0x490] sm:$0xff]
      %v3507 = vld [vmem:[%s19 + $0x498] sm:$0xff]
      %v3508 = vld [vmem:[%s19 + $0x4a0] sm:$0xff]
      %v3509 = vld [vmem:[%s19 + $0x4a8] sm:$0xff]
      %v3510 = vld [vmem:[%s19 + $0x4b0] sm:$0xff]
      %v3511 = vld [vmem:[%s19 + $0x4b8] sm:$0xff]
      %v3512 = vld [vmem:[%s19 + $0x4c0] sm:$0xff]
      %v3513 = vld [vmem:[%s19 + $0x4c8] sm:$0xff]
      %v3514 = vld [vmem:[%s19 + $0x4d0] sm:$0xff]
      %v3515 = vld [vmem:[%s19 + $0x4d8] sm:$0xff]
      %v3516 = vld [vmem:[%s19 + $0x4e0] sm:$0xff]
      %v3517 = vld [vmem:[%s19 + $0x4e8] sm:$0xff]
      %v3518 = vld [vmem:[%s19 + $0x4f0] sm:$0xff]
      %v3519 = vld [vmem:[%s19 + $0x4f8] sm:$0xff]
      %v3520 = vld [vmem:[%s19 + $0x500] sm:$0xff]
      %v3521 = vld [vmem:[%s19 + $0x508] sm:$0xff]
      %v3522 = vld [vmem:[%s19 + $0x510] sm:$0xff]
      %v3523 = vld [vmem:[%s19 + $0x518] sm:$0xff]
      %v3524 = vld [vmem:[%s19 + $0x520] sm:$0xff]
      %v3525 = vld [vmem:[%s19 + $0x528] sm:$0xff]
      %v3526 = vld [vmem:[%s19 + $0x530] sm:$0xff]
      %v3527 = vld [vmem:[%s19 + $0x538] sm:$0xff]
      %v3528 = vld [vmem:[%s19 + $0x540] sm:$0xff]
      %v3529 = vld [vmem:[%s19 + $0x548] sm:$0xff]
      %v3530 = vld [vmem:[%s19 + $0x550] sm:$0xff]
      %v3531 = vld [vmem:[%s19 + $0x558] sm:$0xff]
      %v3532 = vld [vmem:[%s19 + $0x560] sm:$0xff]
      %v3533 = vld [vmem:[%s19 + $0x568] sm:$0xff]
      %v3534 = vld [vmem:[%s19 + $0x570] sm:$0xff]
      %v3535 = vld [vmem:[%s19 + $0x578] sm:$0xff]
      %v3536 = vld [vmem:[%s19 + $0x580] sm:$0xff]
      %v3537 = vld [vmem:[%s19 + $0x588] sm:$0xff]
      %v3538 = vld [vmem:[%s19 + $0x590] sm:$0xff]
      %v3539 = vld [vmem:[%s19 + $0x598] sm:$0xff]
      %v3540 = vld [vmem:[%s19 + $0x5a0] sm:$0xff]
      %v3541 = vld [vmem:[%s19 + $0x5a8] sm:$0xff]
      %v3542 = vld [vmem:[%s19 + $0x5b0] sm:$0xff]
      %v3543 = vld [vmem:[%s19 + $0x5b8] sm:$0xff]
      %v3544 = vld [vmem:[%s19 + $0x5c0] sm:$0xff]
      %v3545 = vld [vmem:[%s19 + $0x5c8] sm:$0xff]
      %v3546 = vld [vmem:[%s19 + $0x5d0] sm:$0xff]
      %v3547 = vld [vmem:[%s19 + $0x5d8] sm:$0xff]
      %v3548 = vld [vmem:[%s19 + $0x5e0] sm:$0xff]
      %v3549 = vld [vmem:[%s19 + $0x5e8] sm:$0xff]
      %v3550 = vld [vmem:[%s19 + $0x5f0] sm:$0xff]
      %v3551 = vld [vmem:[%s19 + $0x5f8] sm:$0xff]
      %v3552 = vld [vmem:[%s19 + $0x600] sm:$0xff]
      %v3553 = vld [vmem:[%s19 + $0x608] sm:$0xff]
      %v3554 = vld [vmem:[%s19 + $0x610] sm:$0xff]
      %v3555 = vld [vmem:[%s19 + $0x618] sm:$0xff]
      %v3556 = vld [vmem:[%s19 + $0x620] sm:$0xff]
      %v3557 = vld [vmem:[%s19 + $0x628] sm:$0xff]
      %v3558 = vld [vmem:[%s19 + $0x630] sm:$0xff]
      %v3559 = vld [vmem:[%s19 + $0x638] sm:$0xff]
      %v3560 = vld [vmem:[%s19 + $0x640] sm:$0xff]
      %v3561 = vld [vmem:[%s19 + $0x648] sm:$0xff]
      %v3562 = vld [vmem:[%s19 + $0x650] sm:$0xff]
      %v3563 = vld [vmem:[%s19 + $0x658] sm:$0xff]
      %v3564 = vld [vmem:[%s19 + $0x660] sm:$0xff]
      %v3565 = vld [vmem:[%s19 + $0x668] sm:$0xff]
      %v3566 = vld [vmem:[%s19 + $0x670] sm:$0xff]
      %v3567 = vld [vmem:[%s19 + $0x678] sm:$0xff]
      %v3568 = vld [vmem:[%s19 + $0x680] sm:$0xff]
      %v3569 = vld [vmem:[%s19 + $0x688] sm:$0xff]
      %v3570 = vld [vmem:[%s19 + $0x690] sm:$0xff]
      %v3571 = vld [vmem:[%s19 + $0x698] sm:$0xff]
      %v3572 = vld [vmem:[%s19 + $0x6a0] sm:$0xff]
      %v3573 = vld [vmem:[%s19 + $0x6a8] sm:$0xff]
      %v3574 = vld [vmem:[%s19 + $0x6b0] sm:$0xff]
      %v3575 = vld [vmem:[%s19 + $0x6b8] sm:$0xff]
      %v3576 = vld [vmem:[%s19 + $0x6c0] sm:$0xff]
      %v3577 = vld [vmem:[%s19 + $0x6c8] sm:$0xff]
      %v3578 = vld [vmem:[%s19 + $0x6d0] sm:$0xff]
      %v3579 = vld [vmem:[%s19 + $0x6d8] sm:$0xff]
      %v3580 = vld [vmem:[%s19 + $0x6e0] sm:$0xff]
      %v3581 = vld [vmem:[%s19 + $0x6e8] sm:$0xff]
      %v3582 = vld [vmem:[%s19 + $0x6f0] sm:$0xff]
      %v3583 = vld [vmem:[%s19 + $0x6f8] sm:$0xff]
      %v3584 = vld [vmem:[%s19 + $0x700] sm:$0xff]
      %v3585 = vld [vmem:[%s19 + $0x708] sm:$0xff]
      %v3586 = vld [vmem:[%s19 + $0x710] sm:$0xff]
      %v3587 = vld [vmem:[%s19 + $0x718] sm:$0xff]
      %v3588 = vld [vmem:[%s19 + $0x720] sm:$0xff]
      %v3589 = vld [vmem:[%s19 + $0x728] sm:$0xff]
      %v3590 = vld [vmem:[%s19 + $0x730] sm:$0xff]
      %v3591 = vld [vmem:[%s19 + $0x738] sm:$0xff]
      %v3592 = vld [vmem:[%s19 + $0x740] sm:$0xff]
      %v3593 = vld [vmem:[%s19 + $0x748] sm:$0xff]
      %v3594 = vld [vmem:[%s19 + $0x750] sm:$0xff]
      %v3595 = vld [vmem:[%s19 + $0x758] sm:$0xff]
      %v3596 = vld [vmem:[%s19 + $0x760] sm:$0xff]
      %v3597 = vld [vmem:[%s19 + $0x768] sm:$0xff]
      %v3598 = vld [vmem:[%s19 + $0x770] sm:$0xff]
      %v3599 = vld [vmem:[%s19 + $0x778] sm:$0xff]
      %v3600 = vld [vmem:[%s19 + $0x780] sm:$0xff]
      %v3601 = vld [vmem:[%s19 + $0x788] sm:$0xff]
      %v3602 = vld [vmem:[%s19 + $0x790] sm:$0xff]
      %v3603 = vld [vmem:[%s19 + $0x798] sm:$0xff]
      %v3604 = vld [vmem:[%s19 + $0x7a0] sm:$0xff]
      %v3605 = vld [vmem:[%s19 + $0x7a8] sm:$0xff]
      %v3606 = vld [vmem:[%s19 + $0x7b0] sm:$0xff]
      %v3607 = vld [vmem:[%s19 + $0x7b8] sm:$0xff]
      %v3608 = vld [vmem:[%s19 + $0x7c0] sm:$0xff]
      %v3609 = vld [vmem:[%s19 + $0x7c8] sm:$0xff]
      %v3610 = vld [vmem:[%s19 + $0x7d0] sm:$0xff]
      %v3611 = vld [vmem:[%s19 + $0x7d8] sm:$0xff]
      %v3612 = vld [vmem:[%s19 + $0x7e0] sm:$0xff]
      %v3613 = vld [vmem:[%s19 + $0x7e8] sm:$0xff]
      %v3614 = vld [vmem:[%s19 + $0x7f0] sm:$0xff]
      %v3615 = vld [vmem:[%s19 + $0x7f8] sm:$0xff]
      %3616 = vmatpush.msra.mxu0 %v3480
      %3617 = vmatpush.msra.mxu0 %v3472
      %3618 = vmatpush.msra.mxu0 %v3464
      %3619 = vmatpush.msra.mxu0 %v3456
      %3620 = vmatpush.msra.mxu0 %v3448
      %3621 = vmatpush.msra.mxu0 %v3440
      %3622 = vmatpush.msra.mxu0 %v3432
      %3623 = vmatpush.msra.mxu0 %v3424
      %3624 = vmatpush.msra.mxu0 %v3416
      %3625 = vmatpush.msra.mxu0 %v3408
      %3626 = vmatpush.msra.mxu0 %v3400
      %3627 = vmatpush.msra.mxu0 %v3392
      %3628 = vmatpush.msra.mxu0 %v3384
      %3629 = vmatpush.msra.mxu0 %v3376
      %3630 = vmatpush.msra.mxu0 %v3368
      %3631 = vmatpush.msra.mxu0 %v3360
      %3632 = vmatmul.f32.gmra.mxu0 %v3358
      %v3633 = vpop.f32.mrf.mxu0
      %v3634 = vadd.f32 0.0, %v3633
      %3635 = vdwg.mxu0
      %3636 = vmatpush.msra.mxu0 %v3608
      %3637 = vmatpush.msra.mxu0 %v3600
      %3638 = vmatpush.msra.mxu0 %v3592
      %3639 = vmatpush.msra.mxu0 %v3584
      %3640 = vmatpush.msra.mxu0 %v3576
      %3641 = vmatpush.msra.mxu0 %v3568
      %3642 = vmatpush.msra.mxu0 %v3560
      %3643 = vmatpush.msra.mxu0 %v3552
      %3644 = vmatpush.msra.mxu0 %v3544
      %3645 = vmatpush.msra.mxu0 %v3536
      %3646 = vmatpush.msra.mxu0 %v3528
      %3647 = vmatpush.msra.mxu0 %v3520
      %3648 = vmatpush.msra.mxu0 %v3512
      %3649 = vmatpush.msra.mxu0 %v3504
      %3650 = vmatpush.msra.mxu0 %v3496
      %3651 = vmatpush.msra.mxu0 %v3488
      %3652 = vmatmul.f32.gmra.mxu0 %v3359
      %v3653 = vpop.f32.mrf.mxu0
      %v3654 = vadd.f32 %v3634, %v3653
      %3655 = vdwg.mxu0
      %3656 = vmatpush.msra.mxu0 %v3481
      %3657 = vmatpush.msra.mxu0 %v3473
      %3658 = vmatpush.msra.mxu0 %v3465
      %3659 = vmatpush.msra.mxu0 %v3457
      %3660 = vmatpush.msra.mxu0 %v3449
      %3661 = vmatpush.msra.mxu0 %v3441
      %3662 = vmatpush.msra.mxu0 %v3433
      %3663 = vmatpush.msra.mxu0 %v3425
      %3664 = vmatpush.msra.mxu0 %v3417
      %3665 = vmatpush.msra.mxu0 %v3409
      %3666 = vmatpush.msra.mxu0 %v3401
      %3667 = vmatpush.msra.mxu0 %v3393
      %3668 = vmatpush.msra.mxu0 %v3385
      %3669 = vmatpush.msra.mxu0 %v3377
      %3670 = vmatpush.msra.mxu0 %v3369
      %3671 = vmatpush.msra.mxu0 %v3361
      %3672 = vmatmul.f32.gmra.mxu0 %v3358
      %v3673 = vpop.f32.mrf.mxu0
      %v3674 = vadd.f32 0.0, %v3673
      %3675 = vdwg.mxu0
      %3676 = vmatpush.msra.mxu0 %v3609
      %3677 = vmatpush.msra.mxu0 %v3601
      %3678 = vmatpush.msra.mxu0 %v3593
      %3679 = vmatpush.msra.mxu0 %v3585
      %3680 = vmatpush.msra.mxu0 %v3577
      %3681 = vmatpush.msra.mxu0 %v3569
      %3682 = vmatpush.msra.mxu0 %v3561
      %3683 = vmatpush.msra.mxu0 %v3553
      %3684 = vmatpush.msra.mxu0 %v3545
      %3685 = vmatpush.msra.mxu0 %v3537
      %3686 = vmatpush.msra.mxu0 %v3529
      %3687 = vmatpush.msra.mxu0 %v3521
      %3688 = vmatpush.msra.mxu0 %v3513
      %3689 = vmatpush.msra.mxu0 %v3505
      %3690 = vmatpush.msra.mxu0 %v3497
      %3691 = vmatpush.msra.mxu0 %v3489
      %3692 = vmatmul.f32.gmra.mxu0 %v3359
      %v3693 = vpop.f32.mrf.mxu0
      %v3694 = vadd.f32 %v3674, %v3693
      %3695 = vdwg.mxu0
      %3696 = vmatpush.msra.mxu0 %v3482
      %3697 = vmatpush.msra.mxu0 %v3474
      %3698 = vmatpush.msra.mxu0 %v3466
      %3699 = vmatpush.msra.mxu0 %v3458
      %3700 = vmatpush.msra.mxu0 %v3450
      %3701 = vmatpush.msra.mxu0 %v3442
      %3702 = vmatpush.msra.mxu0 %v3434
      %3703 = vmatpush.msra.mxu0 %v3426
      %3704 = vmatpush.msra.mxu0 %v3418
      %3705 = vmatpush.msra.mxu0 %v3410
      %3706 = vmatpush.msra.mxu0 %v3402
      %3707 = vmatpush.msra.mxu0 %v3394
      %3708 = vmatpush.msra.mxu0 %v3386
      %3709 = vmatpush.msra.mxu0 %v3378
      %3710 = vmatpush.msra.mxu0 %v3370
      %3711 = vmatpush.msra.mxu0 %v3362
      %3712 = vmatmul.f32.gmra.mxu0 %v3358
      %v3713 = vpop.f32.mrf.mxu0
      %v3714 = vadd.f32 0.0, %v3713
      %3715 = vdwg.mxu0
      %3716 = vmatpush.msra.mxu0 %v3610
      %3717 = vmatpush.msra.mxu0 %v3602
      %3718 = vmatpush.msra.mxu0 %v3594
      %3719 = vmatpush.msra.mxu0 %v3586
      %3720 = vmatpush.msra.mxu0 %v3578
      %3721 = vmatpush.msra.mxu0 %v3570
      %3722 = vmatpush.msra.mxu0 %v3562
      %3723 = vmatpush.msra.mxu0 %v3554
      %3724 = vmatpush.msra.mxu0 %v3546
      %3725 = vmatpush.msra.mxu0 %v3538
      %3726 = vmatpush.msra.mxu0 %v3530
      %3727 = vmatpush.msra.mxu0 %v3522
      %3728 = vmatpush.msra.mxu0 %v3514
      %3729 = vmatpush.msra.mxu0 %v3506
      %3730 = vmatpush.msra.mxu0 %v3498
      %3731 = vmatpush.msra.mxu0 %v3490
      %3732 = vmatmul.f32.gmra.mxu0 %v3359
      %v3733 = vpop.f32.mrf.mxu0
      %v3734 = vadd.f32 %v3714, %v3733
      %3735 = vdwg.mxu0
      %3736 = vmatpush.msra.mxu0 %v3483
      %3737 = vmatpush.msra.mxu0 %v3475
      %3738 = vmatpush.msra.mxu0 %v3467
      %3739 = vmatpush.msra.mxu0 %v3459
      %3740 = vmatpush.msra.mxu0 %v3451
      %3741 = vmatpush.msra.mxu0 %v3443
      %3742 = vmatpush.msra.mxu0 %v3435
      %3743 = vmatpush.msra.mxu0 %v3427
      %3744 = vmatpush.msra.mxu0 %v3419
      %3745 = vmatpush.msra.mxu0 %v3411
      %3746 = vmatpush.msra.mxu0 %v3403
      %3747 = vmatpush.msra.mxu0 %v3395
      %3748 = vmatpush.msra.mxu0 %v3387
      %3749 = vmatpush.msra.mxu0 %v3379
      %3750 = vmatpush.msra.mxu0 %v3371
      %3751 = vmatpush.msra.mxu0 %v3363
      %3752 = vmatmul.f32.gmra.mxu0 %v3358
      %v3753 = vpop.f32.mrf.mxu0
      %v3754 = vadd.f32 0.0, %v3753
      %3755 = vdwg.mxu0
      %3756 = vmatpush.msra.mxu0 %v3611
      %3757 = vmatpush.msra.mxu0 %v3603
      %3758 = vmatpush.msra.mxu0 %v3595
      %3759 = vmatpush.msra.mxu0 %v3587
      %3760 = vmatpush.msra.mxu0 %v3579
      %3761 = vmatpush.msra.mxu0 %v3571
      %3762 = vmatpush.msra.mxu0 %v3563
      %3763 = vmatpush.msra.mxu0 %v3555
      %3764 = vmatpush.msra.mxu0 %v3547
      %3765 = vmatpush.msra.mxu0 %v3539
      %3766 = vmatpush.msra.mxu0 %v3531
      %3767 = vmatpush.msra.mxu0 %v3523
      %3768 = vmatpush.msra.mxu0 %v3515
      %3769 = vmatpush.msra.mxu0 %v3507
      %3770 = vmatpush.msra.mxu0 %v3499
      %3771 = vmatpush.msra.mxu0 %v3491
      %3772 = vmatmul.f32.gmra.mxu0 %v3359
      %v3773 = vpop.f32.mrf.mxu0
      %v3774 = vadd.f32 %v3754, %v3773
      %3775 = vdwg.mxu0
      %3776 = vmatpush.msra.mxu0 %v3484
      %3777 = vmatpush.msra.mxu0 %v3476
      %3778 = vmatpush.msra.mxu0 %v3468
      %3779 = vmatpush.msra.mxu0 %v3460
      %3780 = vmatpush.msra.mxu0 %v3452
      %3781 = vmatpush.msra.mxu0 %v3444
      %3782 = vmatpush.msra.mxu0 %v3436
      %3783 = vmatpush.msra.mxu0 %v3428
      %3784 = vmatpush.msra.mxu0 %v3420
      %3785 = vmatpush.msra.mxu0 %v3412
      %3786 = vmatpush.msra.mxu0 %v3404
      %3787 = vmatpush.msra.mxu0 %v3396
      %3788 = vmatpush.msra.mxu0 %v3388
      %3789 = vmatpush.msra.mxu0 %v3380
      %3790 = vmatpush.msra.mxu0 %v3372
      %3791 = vmatpush.msra.mxu0 %v3364
      %3792 = vmatmul.f32.gmra.mxu0 %v3358
      %v3793 = vpop.f32.mrf.mxu0
      %v3794 = vadd.f32 0.0, %v3793
      %3795 = vdwg.mxu0
      %3796 = vmatpush.msra.mxu0 %v3612
      %3797 = vmatpush.msra.mxu0 %v3604
      %3798 = vmatpush.msra.mxu0 %v3596
      %3799 = vmatpush.msra.mxu0 %v3588
      %3800 = vmatpush.msra.mxu0 %v3580
      %3801 = vmatpush.msra.mxu0 %v3572
      %3802 = vmatpush.msra.mxu0 %v3564
      %3803 = vmatpush.msra.mxu0 %v3556
      %3804 = vmatpush.msra.mxu0 %v3548
      %3805 = vmatpush.msra.mxu0 %v3540
      %3806 = vmatpush.msra.mxu0 %v3532
      %3807 = vmatpush.msra.mxu0 %v3524
      %3808 = vmatpush.msra.mxu0 %v3516
      %3809 = vmatpush.msra.mxu0 %v3508
      %3810 = vmatpush.msra.mxu0 %v3500
      %3811 = vmatpush.msra.mxu0 %v3492
      %3812 = vmatmul.f32.gmra.mxu0 %v3359
      %v3813 = vpop.f32.mrf.mxu0
      %v3814 = vadd.f32 %v3794, %v3813
      %3815 = vdwg.mxu0
      %3816 = vmatpush.msra.mxu0 %v3485
      %3817 = vmatpush.msra.mxu0 %v3477
      %3818 = vmatpush.msra.mxu0 %v3469
      %3819 = vmatpush.msra.mxu0 %v3461
      %3820 = vmatpush.msra.mxu0 %v3453
      %3821 = vmatpush.msra.mxu0 %v3445
      %3822 = vmatpush.msra.mxu0 %v3437
      %3823 = vmatpush.msra.mxu0 %v3429
      %3824 = vmatpush.msra.mxu0 %v3421
      %3825 = vmatpush.msra.mxu0 %v3413
      %3826 = vmatpush.msra.mxu0 %v3405
      %3827 = vmatpush.msra.mxu0 %v3397
      %3828 = vmatpush.msra.mxu0 %v3389
      %3829 = vmatpush.msra.mxu0 %v3381
      %3830 = vmatpush.msra.mxu0 %v3373
      %3831 = vmatpush.msra.mxu0 %v3365
      %3832 = vmatmul.f32.gmra.mxu0 %v3358
      %v3833 = vpop.f32.mrf.mxu0
      %v3834 = vadd.f32 0.0, %v3833
      %3835 = vdwg.mxu0
      %3836 = vmatpush.msra.mxu0 %v3613
      %3837 = vmatpush.msra.mxu0 %v3605
      %3838 = vmatpush.msra.mxu0 %v3597
      %3839 = vmatpush.msra.mxu0 %v3589
      %3840 = vmatpush.msra.mxu0 %v3581
      %3841 = vmatpush.msra.mxu0 %v3573
      %3842 = vmatpush.msra.mxu0 %v3565
      %3843 = vmatpush.msra.mxu0 %v3557
      %3844 = vmatpush.msra.mxu0 %v3549
      %3845 = vmatpush.msra.mxu0 %v3541
      %3846 = vmatpush.msra.mxu0 %v3533
      %3847 = vmatpush.msra.mxu0 %v3525
      %3848 = vmatpush.msra.mxu0 %v3517
      %3849 = vmatpush.msra.mxu0 %v3509
      %3850 = vmatpush.msra.mxu0 %v3501
      %3851 = vmatpush.msra.mxu0 %v3493
      %3852 = vmatmul.f32.gmra.mxu0 %v3359
      %v3853 = vpop.f32.mrf.mxu0
      %v3854 = vadd.f32 %v3834, %v3853
      %3855 = vdwg.mxu0
      %3856 = vmatpush.msra.mxu0 %v3486
      %3857 = vmatpush.msra.mxu0 %v3478
      %3858 = vmatpush.msra.mxu0 %v3470
      %3859 = vmatpush.msra.mxu0 %v3462
      %3860 = vmatpush.msra.mxu0 %v3454
      %3861 = vmatpush.msra.mxu0 %v3446
      %3862 = vmatpush.msra.mxu0 %v3438
      %3863 = vmatpush.msra.mxu0 %v3430
      %3864 = vmatpush.msra.mxu0 %v3422
      %3865 = vmatpush.msra.mxu0 %v3414
      %3866 = vmatpush.msra.mxu0 %v3406
      %3867 = vmatpush.msra.mxu0 %v3398
      %3868 = vmatpush.msra.mxu0 %v3390
      %3869 = vmatpush.msra.mxu0 %v3382
      %3870 = vmatpush.msra.mxu0 %v3374
      %3871 = vmatpush.msra.mxu0 %v3366
      %3872 = vmatmul.f32.gmra.mxu0 %v3358
      %v3873 = vpop.f32.mrf.mxu0
      %v3874 = vadd.f32 0.0, %v3873
      %3875 = vdwg.mxu0
      %3876 = vmatpush.msra.mxu0 %v3614
      %3877 = vmatpush.msra.mxu0 %v3606
      %3878 = vmatpush.msra.mxu0 %v3598
      %3879 = vmatpush.msra.mxu0 %v3590
      %3880 = vmatpush.msra.mxu0 %v3582
      %3881 = vmatpush.msra.mxu0 %v3574
      %3882 = vmatpush.msra.mxu0 %v3566
      %3883 = vmatpush.msra.mxu0 %v3558
      %3884 = vmatpush.msra.mxu0 %v3550
      %3885 = vmatpush.msra.mxu0 %v3542
      %3886 = vmatpush.msra.mxu0 %v3534
      %3887 = vmatpush.msra.mxu0 %v3526
      %3888 = vmatpush.msra.mxu0 %v3518
      %3889 = vmatpush.msra.mxu0 %v3510
      %3890 = vmatpush.msra.mxu0 %v3502
      %3891 = vmatpush.msra.mxu0 %v3494
      %3892 = vmatmul.f32.gmra.mxu0 %v3359
      %v3893 = vpop.f32.mrf.mxu0
      %v3894 = vadd.f32 %v3874, %v3893
      %3895 = vdwg.mxu0
      %3896 = vmatpush.msra.mxu0 %v3487
      %3897 = vmatpush.msra.mxu0 %v3479
      %3898 = vmatpush.msra.mxu0 %v3471
      %3899 = vmatpush.msra.mxu0 %v3463
      %3900 = vmatpush.msra.mxu0 %v3455
      %3901 = vmatpush.msra.mxu0 %v3447
      %3902 = vmatpush.msra.mxu0 %v3439
      %3903 = vmatpush.msra.mxu0 %v3431
      %3904 = vmatpush.msra.mxu0 %v3423
      %3905 = vmatpush.msra.mxu0 %v3415
      %3906 = vmatpush.msra.mxu0 %v3407
      %3907 = vmatpush.msra.mxu0 %v3399
      %3908 = vmatpush.msra.mxu0 %v3391
      %3909 = vmatpush.msra.mxu0 %v3383
      %3910 = vmatpush.msra.mxu0 %v3375
      %3911 = vmatpush.msra.mxu0 %v3367
      %3912 = vmatmul.f32.gmra.mxu0 %v3358
      %v3913 = vpop.f32.mrf.mxu0
      %v3914 = vadd.f32 0.0, %v3913
      %3915 = vdwg.mxu0
      %3916 = vmatpush.msra.mxu0 %v3615
      %3917 = vmatpush.msra.mxu0 %v3607
      %3918 = vmatpush.msra.mxu0 %v3599
      %3919 = vmatpush.msra.mxu0 %v3591
      %3920 = vmatpush.msra.mxu0 %v3583
      %3921 = vmatpush.msra.mxu0 %v3575
      %3922 = vmatpush.msra.mxu0 %v3567
      %3923 = vmatpush.msra.mxu0 %v3559
      %3924 = vmatpush.msra.mxu0 %v3551
      %3925 = vmatpush.msra.mxu0 %v3543
      %3926 = vmatpush.msra.mxu0 %v3535
      %3927 = vmatpush.msra.mxu0 %v3527
      %3928 = vmatpush.msra.mxu0 %v3519
      %3929 = vmatpush.msra.mxu0 %v3511
      %3930 = vmatpush.msra.mxu0 %v3503
      %3931 = vmatpush.msra.mxu0 %v3495
      %3932 = vmatmul.f32.gmra.mxu0 %v3359
      %v3933 = vpop.f32.mrf.mxu0
      %v3934 = vadd.f32 %v3914, %v3933
      %3935 = vdwg.mxu0
      %v3944 = vrot.slane %v3694, 7
      %v3945 = vrot.slane %v3734, 6
      %v3946 = vrot.slane %v3774, 5
      %v3947 = vrot.slane %v3814, 4
      %v3948 = vrot.slane %v3854, 3
      %v3949 = vrot.slane %v3894, 2
      %v3950 = vrot.slane %v3934, 1
      %v3951 = vsel %vm3339, %v3654, %v3944
      %vm3952 = vcmask 1042434
      %v3953 = vsel %vm3952, %v3945, %v3946
      %vm3954 = vcmask 1041408
      %v3955 = vsel %vm3954, %v3951, %v3953
      %vm3956 = vcmask 1044484
      %v3957 = vsel %vm3956, %v3947, %v3948
      %vm3958 = vcmask 1046534
      %v3959 = vsel %vm3958, %v3949, %v3950
      %vm3960 = vcmask 1045508
      %v3961 = vsel %vm3960, %v3957, %v3959
      %v3962 = vsel %vm1502, %v3955, %v3961
      %3964 = vst [vmem:[%s707] sm:$0xff] %v3962
      %p3965 = scmp.lt.s32.totalorder %s33, 1
      %s3966 = scalar_select %p3965, %s33, 1
      %s3967 = smul.addr %s3966, 2
      %s3968 = smul.addr %s3967, 8
      %s3969 = scalar_lea.vmem %s20, %s3968
      %p3970 = scmp.lt.s32.totalorder %s33, 1
      %s3971 = scalar_select %p3970, %s33, 1
      %s3972 = smul.addr %s3971, 8
      %s3973 = scalar_lea.vmem %s21, %s3972
      // Predicated region
      $region101: #{network_forward.1} parent=99 // pred_check
        %p3974 = pneg %p486
      $region102: #{network_forward.1} parent=99 // pred_check_branch
        %3976 = sbr.rel (%p3974) target = $region104
      $region103: #{network_forward.1} parent=99 // pred_region
        _
      $region104: #{network_forward.1} parent=99 // pred_fallthru
        _
      // Predicated region
      $region105: #{network_forward.1} parent=99 // pred_check
        %p3977 = pneg %p512
      $region106: #{network_forward.1} parent=99 // pred_check_branch
        %3979 = sbr.rel (%p3977) target = $region108
      $region107: #{network_forward.1} parent=99 // pred_region
        _
      $region108: #{network_forward.1} parent=99 // pred_fallthru
        _
    $region100: #{network_forward.1} parent=5 // pred_fallthru
      _
    %p3980 = scmp.le.s32.totalorder 2, %s28
    // Predicated region
    $region109: #{network_forward.1} parent=5 // pred_check
      %p3981 = pneg %p3980
    $region110: #{network_forward.1} parent=5 // pred_check_branch
      %3983 = sbr.rel (%p3981) target = $region112
    $region111: #{network_forward.1} parent=5 // pred_region
      %s3984 = ssub.s32 %s28, 2
      // Predicated region
      $region113: #{network_forward.1} parent=111 // pred_check
        %p3985 = pneg %p492
      $region114: #{network_forward.1} parent=111 // pred_check_branch
        %3987 = sbr.rel (%p3985) target = $region116
      $region115: #{network_forward.1} parent=111 // pred_region
        %p3988 = scmp.lt.s32.totalorder %s34, 1
        %s3989 = scalar_select %p3988, %s34, 1
        %s3990 = smul.addr %s3989, 2
        %s3991 = smul.addr %s3990, 8
        %s3992 = scalar_lea.vmem %s20, %s3991
      $region116: #{network_forward.1} parent=111 // pred_fallthru
        _
      // Predicated region
      $region117: #{network_forward.1} parent=111 // pred_check
        %p3993 = pneg %p518
      $region118: #{network_forward.1} parent=111 // pred_check_branch
        %3995 = sbr.rel (%p3993) target = $region120
      $region119: #{network_forward.1} parent=111 // pred_region
        %p3996 = scmp.lt.s32.totalorder %s34, 1
        %s3997 = scalar_select %p3996, %s34, 1
        %s3998 = smul.addr %s3997, 8
        %s3999 = scalar_lea.vmem %s21, %s3998
      $region120: #{network_forward.1} parent=111 // pred_fallthru
        _
    $region112: #{network_forward.1} parent=5 // pred_fallthru
      _
  $region6: #{network_forward.1} parent=0 // loop_footer
    %s32 = sadd.s32 1, %s28
  $region7: #{network_forward.1} parent=0 // loop_footer_branch
    %27 = sbr.rel target = $region3
  $region8: #{network_forward.1} parent=0 // loop_exit
    _

</llo_original>
